<compile_context>
chip_gen: v7x
topology: tpu7x:2x2x1
jax: 0.10.0
libtpu: 0.0.40
codegen_flags: <defaults>
</compile_context>

<pallas_src>
import functools

import jax
import jax.numpy as jnp
from jax.experimental import pallas as pl
from jax.experimental.pallas import tpu as pltpu

KW = 4          # conv kernel size
PADW = 1        # conv padding
NEG_SLOPE = 0.2
BN_EPS = 1e-5

LANE = 128
SUBLANE = 8
TM_MAX = 512    # M-tile (rows of im2col patches)
TK_MAX = 512    # K-tile (reduction)
TN_MAX = 256    # N-tile (output channels); falls back to 128 when not divisible
VMEM_LIMIT = 32 * 1024 * 1024   # safe on v5e/v6e (128 MiB) and v7x (64 MiB)


def _round_up(x, m):
    return ((x + m - 1) // m) * m


def _pad2d(a, rows, cols):
    r, c = a.shape
    if r == rows and c == cols:
        return a
    return jnp.pad(a, ((0, rows - r), (0, cols - c)))


# ---------------------------------------------------------------------------
# Pallas kernels
# ---------------------------------------------------------------------------
def _conv_mm_kernel(*refs, has_bias, apply_lrelu, compute_stats):
    """Tiled im2col matmul with K-axis accumulation in a f32 VMEM scratch.

    Optional fused epilogues: bias add, LeakyReLU(0.2), and per-channel
    partial BatchNorm statistics (sum / sum-of-squares of this M tile)."""
    it = iter(refs)
    a_ref = next(it)
    w_ref = next(it)
    b_ref = next(it) if has_bias else None
    o_ref = next(it)
    stats_ref = next(it) if compute_stats else None
    acc_ref = next(it)

    k = pl.program_id(2)

    @pl.when(k == 0)
    def _init():
        acc_ref[...] = jnp.zeros_like(acc_ref)

    acc_ref[...] += jnp.dot(a_ref[...], w_ref[...],
                            preferred_element_type=jnp.float32)

    @pl.when(k == pl.num_programs(2) - 1)
    def _finalize():
        y = acc_ref[...]
        if compute_stats:
            # Partial BN stats straight from the f32 accumulator:
            # row 0 = per-channel sum, row 1 = per-channel sum of squares,
            # rows 2..7 = zero (layout padding). Reduced in the wrapper.
            colsum = jnp.sum(y, axis=0, keepdims=True)
            colssq = jnp.sum(y * y, axis=0, keepdims=True)
            rows = jax.lax.broadcasted_iota(jnp.int32, stats_ref.shape, 0)
            stats_ref[...] = jnp.where(rows == 0, colsum,
                                       jnp.where(rows == 1, colssq, 0.0))
        if has_bias:
            y = y + b_ref[...]
        if apply_lrelu:
            y = jnp.where(y >= 0.0, y, NEG_SLOPE * y)
        o_ref[...] = y.astype(o_ref.dtype)


def _bn_apply_lrelu_kernel(x_ref, scale_ref, shift_ref, o_ref):
    """y = x * scale + shift, then LeakyReLU(0.2). Fully elementwise tiles."""
    y = x_ref[...].astype(jnp.float32) * scale_ref[...] + shift_ref[...]
    o_ref[...] = jnp.where(y >= 0.0, y, NEG_SLOPE * y).astype(o_ref.dtype)


# ---------------------------------------------------------------------------
# Pallas wrappers
# ---------------------------------------------------------------------------
def conv_mm(patches, w2d, bias, *, apply_lrelu, compute_stats, out_dtype):
    """patches (M, K), w2d (K, Cout), bias (Cout,) or None.

    Returns (out_padded (Mp, Np), stats (Mp/tm*8, Np) or None, Mp, Np).
    Padded rows/cols of the output are exact zeros when bias is None (relied
    upon by the fused BN statistics)."""
    M, K = patches.shape
    _, Cout = w2d.shape
    has_bias = bias is not None

    tm = min(TM_MAX, _round_up(M, SUBLANE))
    Mp = _round_up(M, tm)
    if K <= TK_MAX:
        tk = _round_up(K, SUBLANE)
        Kp = tk
    else:
        tk = TK_MAX
        Kp = _round_up(K, tk)
    Np = _round_up(Cout, LANE)
    tn = TN_MAX if Np % TN_MAX == 0 else LANE

    a = _pad2d(patches.astype(jnp.bfloat16), Mp, Kp)
    w = _pad2d(w2d.astype(jnp.bfloat16), Kp, Np)

    in_specs = [
        pl.BlockSpec((tm, tk), lambda i, j, k: (i, k)),
        pl.BlockSpec((tk, tn), lambda i, j, k: (k, j)),
    ]
    args = [a, w]
    if has_bias:
        b2d = _pad2d(bias.astype(jnp.float32).reshape(1, -1), 1, Np)
        in_specs.append(pl.BlockSpec((1, tn), lambda i, j, k: (0, j)))
        args.append(b2d)

    out_shapes = [jax.ShapeDtypeStruct((Mp, Np), out_dtype)]
    out_specs = [pl.BlockSpec((tm, tn), lambda i, j, k: (i, j))]
    if compute_stats:
        out_shapes.append(
            jax.ShapeDtypeStruct((Mp // tm * SUBLANE, Np), jnp.float32))
        out_specs.append(pl.BlockSpec((SUBLANE, tn), lambda i, j, k: (i, j)))

    kern = functools.partial(_conv_mm_kernel, has_bias=has_bias,
                             apply_lrelu=apply_lrelu,
                             compute_stats=compute_stats)

    out_bytes = Mp * Np * jnp.dtype(out_dtype).itemsize
    res = pl.pallas_call(
        kern,
        out_shape=tuple(out_shapes) if compute_stats else out_shapes[0],
        grid=(Mp // tm, Np // tn, Kp // tk),
        in_specs=in_specs,
        out_specs=tuple(out_specs) if compute_stats else out_specs[0],
        scratch_shapes=[pltpu.VMEM((tm, tn), jnp.float32)],
        compiler_params=pltpu.CompilerParams(
            dimension_semantics=("parallel", "parallel", "arbitrary"),
            vmem_limit_bytes=VMEM_LIMIT),
        cost_estimate=pl.CostEstimate(
            flops=2 * Mp * Kp * Np + (3 * Mp * Np if compute_stats else 0),
            transcendentals=0,
            bytes_accessed=(Mp * Kp + Kp * Np) * 2 + out_bytes),
    )(*args)

    if compute_stats:
        y_pad, stats = res
    else:
        y_pad, stats = res, None
    return y_pad, stats, Mp, Np


def batchnorm_lrelu(y_pad, stats, m_true, gamma, beta):
    """Train-mode BatchNorm2d (batch statistics over the m_true valid rows,
    biased variance, matching PyTorch normalization) + LeakyReLU(0.2).

    `stats` holds per-M-tile partial sums/sumsqs produced by the conv epilogue;
    the tiny (C,)-sized reduction & affine algebra is wrapper glue."""
    Mp, Np = y_pad.shape
    tm = min(TM_MAX, Mp)                       # Mp is a multiple of tm (<= 512)
    tc = TN_MAX if Np % TN_MAX == 0 else LANE

    mtiles = stats.shape[0] // SUBLANE
    st = stats.reshape(mtiles, SUBLANE, Np)
    s = jnp.sum(st[:, 0, :], axis=0)           # per-channel sum
    ss = jnp.sum(st[:, 1, :], axis=0)          # per-channel sum of squares

    inv_m = 1.0 / float(m_true)
    mean = s * inv_m
    var = jnp.maximum(ss * inv_m - mean * mean, 0.0)   # biased (train-mode) var
    g = _pad2d(gamma.astype(jnp.float32).reshape(1, -1), 1, Np)
    b = _pad2d(beta.astype(jnp.float32).reshape(1, -1), 1, Np)
    scale = g * jax.lax.rsqrt(var + BN_EPS)
    shift = b - mean * scale

    itemsize = jnp.dtype(y_pad.dtype).itemsize
    return pl.pallas_call(
        _bn_apply_lrelu_kernel,
        out_shape=jax.ShapeDtypeStruct((Mp, Np), y_pad.dtype),
        grid=(Mp // tm, Np // tc),
        in_specs=[pl.BlockSpec((tm, tc), lambda mi, ci: (mi, ci)),
                  pl.BlockSpec((1, tc), lambda mi, ci: (0, ci)),
                  pl.BlockSpec((1, tc), lambda mi, ci: (0, ci))],
        out_specs=pl.BlockSpec((tm, tc), lambda mi, ci: (mi, ci)),
        compiler_params=pltpu.CompilerParams(
            dimension_semantics=("parallel", "parallel"),
            vmem_limit_bytes=VMEM_LIMIT),
        cost_estimate=pl.CostEstimate(
            flops=4 * Mp * Np, transcendentals=0,
            bytes_accessed=2 * Mp * Np * itemsize + 2 * Np * 4),
    )(y_pad, scale, shift)


# ---------------------------------------------------------------------------
# Plain-JAX glue: im2col patch extraction (data movement only, kept in bf16)
# ---------------------------------------------------------------------------
def im2col(x_nhwc, kh, kw, stride, pad):
    x = jnp.pad(x_nhwc, ((0, 0), (pad, pad), (pad, pad), (0, 0)))
    N, H, W, C = x.shape
    OH = (H - kh) // stride + 1
    OW = (W - kw) // stride + 1
    cols = []
    for i in range(kh):
        for j in range(kw):
            cols.append(x[:, i:i + stride * OH:stride, j:j + stride * OW:stride, :])
    # (N, OH, OW, kh*kw, C): K index order is (kh, kw, Cin) -> matches weight reorder.
    patches = jnp.stack(cols, axis=3)
    return patches.reshape(N * OH * OW, kh * kw * C), N, OH, OW


# ---------------------------------------------------------------------------
# Model definition (mirrors NLayerDiscriminator.__init__ with BatchNorm2d)
# ---------------------------------------------------------------------------
def build_layer_specs(input_nc, ndf=64, n_layers=3):
    # norm_layer == BatchNorm2d  =>  use_bias = False on normed convs.
    specs = [dict(cin=input_nc, cout=ndf, stride=2, use_bias=True,
                  norm=False, lrelu=True)]
    nf_mult = 1
    for n in range(1, n_layers):
        nf_mult_prev, nf_mult = nf_mult, min(2 ** n, 8)
        specs.append(dict(cin=ndf * nf_mult_prev, cout=ndf * nf_mult, stride=2,
                          use_bias=False, norm=True, lrelu=True))
    nf_mult_prev, nf_mult = nf_mult, min(2 ** n_layers, 8)
    specs.append(dict(cin=ndf * nf_mult_prev, cout=ndf * nf_mult, stride=1,
                      use_bias=False, norm=True, lrelu=True))
    specs.append(dict(cin=ndf * nf_mult, cout=1, stride=1, use_bias=True,
                      norm=False, lrelu=False))
    return specs


def init_params(key, specs):
    params = []
    for spec in specs:
        key, kw_, kb, kg, kbt = jax.random.split(key, 5)
        w = 0.02 * jax.random.normal(
            kw_, (spec["cout"], spec["cin"], KW, KW), jnp.float32)  # PyTorch OIHW
        if spec["use_bias"]:
            b = 0.02 * jax.random.normal(kb, (spec["cout"],), jnp.float32)
        else:
            b = jnp.zeros((spec["cout"],), jnp.float32)
        p = dict(w=w, b=b)
        if spec["norm"]:
            p["gamma"] = 1.0 + 0.1 * jax.random.normal(
                kg, (spec["cout"],), jnp.float32)
            p["beta"] = 0.1 * jax.random.normal(kbt, (spec["cout"],), jnp.float32)
        params.append(p)
    return params


def nlayer_discriminator_forward(x_nchw, specs, params):
    # NCHW -> NHWC; intermediates live in bf16 (they feed bf16 MXU matmuls anyway).
    x = jnp.transpose(x_nchw, (0, 2, 3, 1)).astype(jnp.bfloat16)
    for li, (spec, p) in enumerate(zip(specs, params)):
        is_last = li == len(specs) - 1
        patches, N, OH, OW = im2col(x, KW, KW, spec["stride"], PADW)
        # OIHW -> (KH, KW, Cin, Cout) -> (KH*KW*Cin, Cout)  (matches im2col order)
        w2d = jnp.transpose(p["w"], (2, 3, 1, 0)).reshape(
            KW * KW * spec["cin"], spec["cout"])
        bias = p["b"] if spec["use_bias"] else None
        fuse_lrelu = spec["lrelu"] and not spec["norm"]
        out_dtype = jnp.float32 if is_last else jnp.bfloat16

        y_pad, stats, Mp, Np = conv_mm(
            patches, w2d, bias, apply_lrelu=fuse_lrelu,
            compute_stats=spec["norm"], out_dtype=out_dtype)
        if spec["norm"]:
            y_pad = batchnorm_lrelu(y_pad, stats, N * OH * OW,
                                    p["gamma"], p["beta"])

        M = N * OH * OW
        x = y_pad[:M, :spec["cout"]].reshape(N, OH, OW, spec["cout"])
    return jnp.transpose(x, (0, 3, 1, 2))  # NHWC -> NCHW (f32, last layer)


# ---------------------------------------------------------------------------
if __name__ == "__main__":
    # Small but valid config: input_nc=4, ndf=8, n_layers=3, 32x32 input
    # (3 stride-2 convs + 2 stride-1 k4p1 convs require spatial >= 24).
    input_nc, ndf, n_layers = 4, 8, 3
    batch, spatial = 2, 32

    key = jax.random.PRNGKey(0)
    kx, kp = jax.random.split(key)
    x = jax.random.normal(kx, (batch, input_nc, spatial, spatial), jnp.float32)

    specs = build_layer_specs(input_nc, ndf=ndf, n_layers=n_layers)
    params = init_params(kp, specs)

    fwd = jax.jit(lambda inp: nlayer_discriminator_forward(inp, specs, params))
    out = fwd(x)
    jax.block_until_ready(out)

    # Expected PatchGAN output: (batch, 1, 2, 2) for 32x32 input with this config.
    assert out.shape == (batch, 1, 2, 2), out.shape
    assert jnp.all(jnp.isfinite(out))
    print("KERNEL_OK")
</pallas_src>

<mosaic_0001>
module attributes {stable_mosaic.version = 11 : i64} {
  func.func @_conv_mm_kernel(%arg0: i32, %arg1: i32, %arg2: i32, %arg3: memref<512x64xbf16, #tpu.memory_space<vmem>>, %arg4: memref<64x128xbf16, #tpu.memory_space<vmem>>, %arg5: memref<1x128xf32, #tpu.memory_space<vmem>>, %arg6: memref<512x128xbf16, #tpu.memory_space<vmem>>, %arg7: memref<512x128xf32, #tpu.memory_space<vmem>>) attributes {dimension_semantics = [#tpu.dimension_semantics<parallel>, #tpu.dimension_semantics<parallel>, #tpu.dimension_semantics<arbitrary>], iteration_bounds = array<i64: 1, 1, 1>, scalar_prefetch = 0 : i64, scratch_operands = 1 : i64, tpu.core_type = #tpu.core_type<tc>, window_params = [{transform_indices = @transform_0, window_bounds = array<i64: 512, 64>}, {transform_indices = @transform_1, window_bounds = array<i64: 64, 128>}, {transform_indices = @transform_2, window_bounds = array<i64: 1, 128>}, {transform_indices = @transform_3, window_bounds = array<i64: 512, 128>}]} {
    %c0_i32 = arith.constant 0 : i32
    %0 = arith.cmpi eq, %arg2, %c0_i32 : i32
    %1 = arith.extui %0 : i1 to i32
    %c0_i32_0 = arith.constant 0 : i32
    %2 = arith.cmpi ne, %1, %c0_i32_0 : i32
    scf.if %2 {
      %cst_10 = arith.constant 0.000000e+00 : f32
      %12 = vector.broadcast %cst_10 : f32 to vector<512x128xf32>
      %c0_11 = arith.constant 0 : index
      %c0_12 = arith.constant 0 : index
      %13 = vector.load %arg7[%c0_11, %c0_12] : memref<512x128xf32, #tpu.memory_space<vmem>>, vector<512x128xf32>
      tpu.vector_store %arg7[%c0_11, %c0_12], %12 {strides = array<i32>} : memref<512x128xf32, #tpu.memory_space<vmem>>, vector<512x128xf32>,
    } else {
    }
    %c0 = arith.constant 0 : index
    %c0_1 = arith.constant 0 : index
    %3 = vector.load %arg7[%c0, %c0_1] : memref<512x128xf32, #tpu.memory_space<vmem>>, vector<512x128xf32>
    %c0_2 = arith.constant 0 : index
    %c0_3 = arith.constant 0 : index
    %4 = vector.load %arg3[%c0_2, %c0_3] : memref<512x64xbf16, #tpu.memory_space<vmem>>, vector<512x64xbf16>
    %c0_4 = arith.constant 0 : index
    %c0_5 = arith.constant 0 : index
    %5 = vector.load %arg4[%c0_4, %c0_5] : memref<64x128xbf16, #tpu.memory_space<vmem>>, vector<64x128xbf16>
    %cst = arith.constant dense<0.000000e+00> : vector<512x128xf32>
    %6 = tpu.matmul %4, %5, %cst {dimension_numbers = #tpu.dot_dimension_numbers<[1], [0], [0], [1], [0, 0, 1, 1], [], []>} : vector<512x64xbf16>, vector<64x128xbf16>, vector<512x128xf32> -> vector<512x128xf32>
    %7 = arith.addf %3, %6 : vector<512x128xf32>
    %c0_6 = arith.constant 0 : index
    %c0_7 = arith.constant 0 : index
    %8 = vector.load %arg7[%c0_6, %c0_7] : memref<512x128xf32, #tpu.memory_space<vmem>>, vector<512x128xf32>
    tpu.vector_store %arg7[%c0_6, %c0_7], %7 {strides = array<i32>} : memref<512x128xf32, #tpu.memory_space<vmem>>, vector<512x128xf32>,
    %c0_i32_8 = arith.constant 0 : i32
    %9 = arith.cmpi eq, %arg2, %c0_i32_8 : i32
    %10 = arith.extui %9 : i1 to i32
    %c0_i32_9 = arith.constant 0 : i32
    %11 = arith.cmpi ne, %10, %c0_i32_9 : i32
    scf.if %11 {
      %c0_10 = arith.constant 0 : index
      %c0_11 = arith.constant 0 : index
      %12 = vector.load %arg7[%c0_10, %c0_11] : memref<512x128xf32, #tpu.memory_space<vmem>>, vector<512x128xf32>
      %c0_12 = arith.constant 0 : index
      %c0_13 = arith.constant 0 : index
      %13 = vector.load %arg5[%c0_12, %c0_13] : memref<1x128xf32, #tpu.memory_space<vmem>>, vector<1x128xf32>
      %14 = vector.broadcast %13 : vector<1x128xf32> to vector<512x128xf32>
      %15 = arith.addf %12, %14 : vector<512x128xf32>
      %cst_14 = arith.constant 0.000000e+00 : f32
      %16 = vector.broadcast %cst_14 : f32 to vector<512x128xf32>
      %17 = arith.cmpf oge, %15, %16 : vector<512x128xf32>
      %cst_15 = arith.constant 2.000000e-01 : f32
      %18 = vector.broadcast %cst_15 : f32 to vector<512x128xf32>
      %19 = arith.mulf %18, %15 : vector<512x128xf32>
      %20 = arith.select %17, %15, %19 : vector<512x128xi1>, vector<512x128xf32>
      %21 = arith.truncf %20 : vector<512x128xf32> to vector<512x128xbf16>
      %c0_16 = arith.constant 0 : index
      %c0_17 = arith.constant 0 : index
      %22 = vector.load %arg6[%c0_16, %c0_17] : memref<512x128xbf16, #tpu.memory_space<vmem>>, vector<512x128xbf16>
      tpu.vector_store %arg6[%c0_16, %c0_17], %21 {strides = array<i32>} : memref<512x128xbf16, #tpu.memory_space<vmem>>, vector<512x128xbf16>,
    } else {
    }
    return
  }
  func.func @transform_0(%arg0: i32, %arg1: i32, %arg2: i32) -> (i32, i32) {
    %c0_i32 = arith.constant 0 : i32
    return %arg0, %arg2 : i32, i32
  }
  func.func @transform_1(%arg0: i32, %arg1: i32, %arg2: i32) -> (i32, i32) {
    %c0_i32 = arith.constant 0 : i32
    return %arg2, %arg1 : i32, i32
  }
  func.func @transform_2(%arg0: i32, %arg1: i32, %arg2: i32) -> (i32, i32) {
    %c0_i32 = arith.constant 0 : i32
    %c0_i32_0 = arith.constant 0 : i32
    return %c0_i32, %arg1 : i32, i32
  }
  func.func @transform_3(%arg0: i32, %arg1: i32, %arg2: i32) -> (i32, i32) {
    %c0_i32 = arith.constant 0 : i32
    return %arg0, %arg1 : i32, i32
  }
}

module attributes {stable_mosaic.version = 11 : i64} {
  func.func @_conv_mm_kernel(%arg0: i32, %arg1: i32, %arg2: i32, %arg3: memref<128x128xbf16, #tpu.memory_space<vmem>>, %arg4: memref<128x128xbf16, #tpu.memory_space<vmem>>, %arg5: memref<128x128xbf16, #tpu.memory_space<vmem>>, %arg6: memref<8x128xf32, #tpu.memory_space<vmem>>, %arg7: memref<128x128xf32, #tpu.memory_space<vmem>>) attributes {dimension_semantics = [#tpu.dimension_semantics<parallel>, #tpu.dimension_semantics<parallel>, #tpu.dimension_semantics<arbitrary>], iteration_bounds = array<i64: 1, 1, 1>, scalar_prefetch = 0 : i64, scratch_operands = 1 : i64, tpu.core_type = #tpu.core_type<tc>, window_params = [{transform_indices = @transform_0, window_bounds = array<i64: 128, 128>}, {transform_indices = @transform_1, window_bounds = array<i64: 128, 128>}, {transform_indices = @transform_2, window_bounds = array<i64: 128, 128>}, {transform_indices = @transform_3, window_bounds = array<i64: 8, 128>}]} {
    %c0_i32 = arith.constant 0 : i32
    %0 = arith.cmpi eq, %arg2, %c0_i32 : i32
    %1 = arith.extui %0 : i1 to i32
    %c0_i32_0 = arith.constant 0 : i32
    %2 = arith.cmpi ne, %1, %c0_i32_0 : i32
    scf.if %2 {
      %cst_10 = arith.constant 0.000000e+00 : f32
      %12 = vector.broadcast %cst_10 : f32 to vector<128x128xf32>
      %c0_11 = arith.constant 0 : index
      %c0_12 = arith.constant 0 : index
      %13 = vector.load %arg7[%c0_11, %c0_12] : memref<128x128xf32, #tpu.memory_space<vmem>>, vector<128x128xf32>
      tpu.vector_store %arg7[%c0_11, %c0_12], %12 {strides = array<i32>} : memref<128x128xf32, #tpu.memory_space<vmem>>, vector<128x128xf32>,
    } else {
    }
    %c0 = arith.constant 0 : index
    %c0_1 = arith.constant 0 : index
    %3 = vector.load %arg7[%c0, %c0_1] : memref<128x128xf32, #tpu.memory_space<vmem>>, vector<128x128xf32>
    %c0_2 = arith.constant 0 : index
    %c0_3 = arith.constant 0 : index
    %4 = vector.load %arg3[%c0_2, %c0_3] : memref<128x128xbf16, #tpu.memory_space<vmem>>, vector<128x128xbf16>
    %c0_4 = arith.constant 0 : index
    %c0_5 = arith.constant 0 : index
    %5 = vector.load %arg4[%c0_4, %c0_5] : memref<128x128xbf16, #tpu.memory_space<vmem>>, vector<128x128xbf16>
    %cst = arith.constant dense<0.000000e+00> : vector<128x128xf32>
    %6 = tpu.matmul %4, %5, %cst {dimension_numbers = #tpu.dot_dimension_numbers<[1], [0], [0], [1], [0, 0, 1, 1], [], []>} : vector<128x128xbf16>, vector<128x128xbf16>, vector<128x128xf32> -> vector<128x128xf32>
    %7 = arith.addf %3, %6 : vector<128x128xf32>
    %c0_6 = arith.constant 0 : index
    %c0_7 = arith.constant 0 : index
    %8 = vector.load %arg7[%c0_6, %c0_7] : memref<128x128xf32, #tpu.memory_space<vmem>>, vector<128x128xf32>
    tpu.vector_store %arg7[%c0_6, %c0_7], %7 {strides = array<i32>} : memref<128x128xf32, #tpu.memory_space<vmem>>, vector<128x128xf32>,
    %c0_i32_8 = arith.constant 0 : i32
    %9 = arith.cmpi eq, %arg2, %c0_i32_8 : i32
    %10 = arith.extui %9 : i1 to i32
    %c0_i32_9 = arith.constant 0 : i32
    %11 = arith.cmpi ne, %10, %c0_i32_9 : i32
    scf.if %11 {
      %c0_10 = arith.constant 0 : index
      %c0_11 = arith.constant 0 : index
      %12 = vector.load %arg7[%c0_10, %c0_11] : memref<128x128xf32, #tpu.memory_space<vmem>>, vector<128x128xf32>
      %cst_12 = arith.constant dense<0.000000e+00> : vector<128xf32>
      %13 = vector.multi_reduction <add>, %12, %cst_12 [0] : vector<128x128xf32> to vector<128xf32>
      %14 = vector.shape_cast %13 : vector<128xf32> to vector<1x128xf32>
      %15 = arith.mulf %12, %12 : vector<128x128xf32>
      %cst_13 = arith.constant dense<0.000000e+00> : vector<128xf32>
      %16 = vector.multi_reduction <add>, %15, %cst_13 [0] : vector<128x128xf32> to vector<128xf32>
      %17 = vector.shape_cast %16 : vector<128xf32> to vector<1x128xf32>
      %18 = tpu.iota {dimensions = array<i32: 0>} : vector<8x128xi32>
      %c0_i32_14 = arith.constant 0 : i32
      %19 = vector.broadcast %c0_i32_14 : i32 to vector<8x128xi32>
      %20 = arith.cmpi eq, %18, %19 : vector<8x128xi32>
      %c1_i32 = arith.constant 1 : i32
      %21 = vector.broadcast %c1_i32 : i32 to vector<8x128xi32>
      %22 = arith.cmpi eq, %18, %21 : vector<8x128xi32>
      %cst_15 = arith.constant 0.000000e+00 : f32
      %23 = vector.shape_cast %17 : vector<1x128xf32> to vector<1x128xf32>
      %24 = vector.broadcast %23 : vector<1x128xf32> to vector<8x128xf32>
      %25 = vector.broadcast %cst_15 : f32 to vector<8x128xf32>
      %26 = arith.select %22, %24, %25 : vector<8x128xi1>, vector<8x128xf32>
      %27 = vector.shape_cast %14 : vector<1x128xf32> to vector<1x128xf32>
      %28 = vector.broadcast %27 : vector<1x128xf32> to vector<8x128xf32>
      %29 = arith.select %20, %28, %26 : vector<8x128xi1>, vector<8x128xf32>
      %c0_16 = arith.constant 0 : index
      %c0_17 = arith.constant 0 : index
      %30 = vector.load %arg6[%c0_16, %c0_17] : memref<8x128xf32, #tpu.memory_space<vmem>>, vector<8x128xf32>
      tpu.vector_store %arg6[%c0_16, %c0_17], %29 {strides = array<i32>} : memref<8x128xf32, #tpu.memory_space<vmem>>, vector<8x128xf32>,
      %31 = arith.truncf %12 : vector<128x128xf32> to vector<128x128xbf16>
      %c0_18 = arith.constant 0 : index
      %c0_19 = arith.constant 0 : index
      %32 = vector.load %arg5[%c0_18, %c0_19] : memref<128x128xbf16, #tpu.memory_space<vmem>>, vector<128x128xbf16>
      tpu.vector_store %arg5[%c0_18, %c0_19], %31 {strides = array<i32>} : memref<128x128xbf16, #tpu.memory_space<vmem>>, vector<128x128xbf16>,
    } else {
    }
    return
  }
  func.func @transform_0(%arg0: i32, %arg1: i32, %arg2: i32) -> (i32, i32) {
    %c0_i32 = arith.constant 0 : i32
    return %arg0, %arg2 : i32, i32
  }
  func.func @transform_1(%arg0: i32, %arg1: i32, %arg2: i32) -> (i32, i32) {
    %c0_i32 = arith.constant 0 : i32
    return %arg2, %arg1 : i32, i32
  }
  func.func @transform_2(%arg0: i32, %arg1: i32, %arg2: i32) -> (i32, i32) {
    %c0_i32 = arith.constant 0 : i32
    return %arg0, %arg1 : i32, i32
  }
  func.func @transform_3(%arg0: i32, %arg1: i32, %arg2: i32) -> (i32, i32) {
    %c0_i32 = arith.constant 0 : i32
    return %arg0, %arg1 : i32, i32
  }
}

module attributes {stable_mosaic.version = 11 : i64} {
  func.func @_bn_apply_lrelu_kernel(%arg0: i32, %arg1: i32, %arg2: memref<128x128xbf16, #tpu.memory_space<vmem>>, %arg3: memref<1x128xf32, #tpu.memory_space<vmem>>, %arg4: memref<1x128xf32, #tpu.memory_space<vmem>>, %arg5: memref<128x128xbf16, #tpu.memory_space<vmem>>) attributes {dimension_semantics = [#tpu.dimension_semantics<parallel>, #tpu.dimension_semantics<parallel>], iteration_bounds = array<i64: 1, 1>, scalar_prefetch = 0 : i64, scratch_operands = 0 : i64, tpu.core_type = #tpu.core_type<tc>, window_params = [{transform_indices = @transform_0, window_bounds = array<i64: 128, 128>}, {transform_indices = @transform_1, window_bounds = array<i64: 1, 128>}, {transform_indices = @transform_2, window_bounds = array<i64: 1, 128>}, {transform_indices = @transform_3, window_bounds = array<i64: 128, 128>}]} {
    %c0 = arith.constant 0 : index
    %c0_0 = arith.constant 0 : index
    %0 = vector.load %arg2[%c0, %c0_0] : memref<128x128xbf16, #tpu.memory_space<vmem>>, vector<128x128xbf16>
    %1 = arith.extf %0 : vector<128x128xbf16> to vector<128x128xf32>
    %c0_1 = arith.constant 0 : index
    %c0_2 = arith.constant 0 : index
    %2 = vector.load %arg3[%c0_1, %c0_2] : memref<1x128xf32, #tpu.memory_space<vmem>>, vector<1x128xf32>
    %3 = vector.broadcast %2 : vector<1x128xf32> to vector<128x128xf32>
    %4 = arith.mulf %1, %3 : vector<128x128xf32>
    %c0_3 = arith.constant 0 : index
    %c0_4 = arith.constant 0 : index
    %5 = vector.load %arg4[%c0_3, %c0_4] : memref<1x128xf32, #tpu.memory_space<vmem>>, vector<1x128xf32>
    %6 = vector.broadcast %5 : vector<1x128xf32> to vector<128x128xf32>
    %7 = arith.addf %4, %6 : vector<128x128xf32>
    %cst = arith.constant 0.000000e+00 : f32
    %8 = vector.broadcast %cst : f32 to vector<128x128xf32>
    %9 = arith.cmpf oge, %7, %8 : vector<128x128xf32>
    %cst_5 = arith.constant 2.000000e-01 : f32
    %10 = vector.broadcast %cst_5 : f32 to vector<128x128xf32>
    %11 = arith.mulf %10, %7 : vector<128x128xf32>
    %12 = arith.select %9, %7, %11 : vector<128x128xi1>, vector<128x128xf32>
    %13 = arith.truncf %12 : vector<128x128xf32> to vector<128x128xbf16>
    %c0_6 = arith.constant 0 : index
    %c0_7 = arith.constant 0 : index
    %14 = vector.load %arg5[%c0_6, %c0_7] : memref<128x128xbf16, #tpu.memory_space<vmem>>, vector<128x128xbf16>
    tpu.vector_store %arg5[%c0_6, %c0_7], %13 {strides = array<i32>} : memref<128x128xbf16, #tpu.memory_space<vmem>>, vector<128x128xbf16>,
    return
  }
  func.func @transform_0(%arg0: i32, %arg1: i32) -> (i32, i32) {
    %c0_i32 = arith.constant 0 : i32
    return %arg0, %arg1 : i32, i32
  }
  func.func @transform_1(%arg0: i32, %arg1: i32) -> (i32, i32) {
    %c0_i32 = arith.constant 0 : i32
    %c0_i32_0 = arith.constant 0 : i32
    return %c0_i32, %arg1 : i32, i32
  }
  func.func @transform_2(%arg0: i32, %arg1: i32) -> (i32, i32) {
    %c0_i32 = arith.constant 0 : i32
    %c0_i32_0 = arith.constant 0 : i32
    return %c0_i32, %arg1 : i32, i32
  }
  func.func @transform_3(%arg0: i32, %arg1: i32) -> (i32, i32) {
    %c0_i32 = arith.constant 0 : i32
    return %arg0, %arg1 : i32, i32
  }
}

module attributes {stable_mosaic.version = 11 : i64} {
  func.func @_conv_mm_kernel(%arg0: i32, %arg1: i32, %arg2: i32, %arg3: memref<32x256xbf16, #tpu.memory_space<vmem>>, %arg4: memref<256x128xbf16, #tpu.memory_space<vmem>>, %arg5: memref<32x128xbf16, #tpu.memory_space<vmem>>, %arg6: memref<8x128xf32, #tpu.memory_space<vmem>>, %arg7: memref<32x128xf32, #tpu.memory_space<vmem>>) attributes {dimension_semantics = [#tpu.dimension_semantics<parallel>, #tpu.dimension_semantics<parallel>, #tpu.dimension_semantics<arbitrary>], iteration_bounds = array<i64: 1, 1, 1>, scalar_prefetch = 0 : i64, scratch_operands = 1 : i64, tpu.core_type = #tpu.core_type<tc>, window_params = [{transform_indices = @transform_0, window_bounds = array<i64: 32, 256>}, {transform_indices = @transform_1, window_bounds = array<i64: 256, 128>}, {transform_indices = @transform_2, window_bounds = array<i64: 32, 128>}, {transform_indices = @transform_3, window_bounds = array<i64: 8, 128>}]} {
    %c0_i32 = arith.constant 0 : i32
    %0 = arith.cmpi eq, %arg2, %c0_i32 : i32
    %1 = arith.extui %0 : i1 to i32
    %c0_i32_0 = arith.constant 0 : i32
    %2 = arith.cmpi ne, %1, %c0_i32_0 : i32
    scf.if %2 {
      %cst_10 = arith.constant 0.000000e+00 : f32
      %12 = vector.broadcast %cst_10 : f32 to vector<32x128xf32>
      %c0_11 = arith.constant 0 : index
      %c0_12 = arith.constant 0 : index
      %13 = vector.load %arg7[%c0_11, %c0_12] : memref<32x128xf32, #tpu.memory_space<vmem>>, vector<32x128xf32>
      tpu.vector_store %arg7[%c0_11, %c0_12], %12 {strides = array<i32>} : memref<32x128xf32, #tpu.memory_space<vmem>>, vector<32x128xf32>,
    } else {
    }
    %c0 = arith.constant 0 : index
    %c0_1 = arith.constant 0 : index
    %3 = vector.load %arg7[%c0, %c0_1] : memref<32x128xf32, #tpu.memory_space<vmem>>, vector<32x128xf32>
    %c0_2 = arith.constant 0 : index
    %c0_3 = arith.constant 0 : index
    %4 = vector.load %arg3[%c0_2, %c0_3] : memref<32x256xbf16, #tpu.memory_space<vmem>>, vector<32x256xbf16>
    %c0_4 = arith.constant 0 : index
    %c0_5 = arith.constant 0 : index
    %5 = vector.load %arg4[%c0_4, %c0_5] : memref<256x128xbf16, #tpu.memory_space<vmem>>, vector<256x128xbf16>
    %cst = arith.constant dense<0.000000e+00> : vector<32x128xf32>
    %6 = tpu.matmul %4, %5, %cst {dimension_numbers = #tpu.dot_dimension_numbers<[1], [0], [0], [1], [0, 0, 1, 1], [], []>} : vector<32x256xbf16>, vector<256x128xbf16>, vector<32x128xf32> -> vector<32x128xf32>
    %7 = arith.addf %3, %6 : vector<32x128xf32>
    %c0_6 = arith.constant 0 : index
    %c0_7 = arith.constant 0 : index
    %8 = vector.load %arg7[%c0_6, %c0_7] : memref<32x128xf32, #tpu.memory_space<vmem>>, vector<32x128xf32>
    tpu.vector_store %arg7[%c0_6, %c0_7], %7 {strides = array<i32>} : memref<32x128xf32, #tpu.memory_space<vmem>>, vector<32x128xf32>,
    %c0_i32_8 = arith.constant 0 : i32
    %9 = arith.cmpi eq, %arg2, %c0_i32_8 : i32
    %10 = arith.extui %9 : i1 to i32
    %c0_i32_9 = arith.constant 0 : i32
    %11 = arith.cmpi ne, %10, %c0_i32_9 : i32
    scf.if %11 {
      %c0_10 = arith.constant 0 : index
      %c0_11 = arith.constant 0 : index
      %12 = vector.load %arg7[%c0_10, %c0_11] : memref<32x128xf32, #tpu.memory_space<vmem>>, vector<32x128xf32>
      %cst_12 = arith.constant dense<0.000000e+00> : vector<128xf32>
      %13 = vector.multi_reduction <add>, %12, %cst_12 [0] : vector<32x128xf32> to vector<128xf32>
      %14 = vector.shape_cast %13 : vector<128xf32> to vector<1x128xf32>
      %15 = arith.mulf %12, %12 : vector<32x128xf32>
      %cst_13 = arith.constant dense<0.000000e+00> : vector<128xf32>
      %16 = vector.multi_reduction <add>, %15, %cst_13 [0] : vector<32x128xf32> to vector<128xf32>
      %17 = vector.shape_cast %16 : vector<128xf32> to vector<1x128xf32>
      %18 = tpu.iota {dimensions = array<i32: 0>} : vector<8x128xi32>
      %c0_i32_14 = arith.constant 0 : i32
      %19 = vector.broadcast %c0_i32_14 : i32 to vector<8x128xi32>
      %20 = arith.cmpi eq, %18, %19 : vector<8x128xi32>
      %c1_i32 = arith.constant 1 : i32
      %21 = vector.broadcast %c1_i32 : i32 to vector<8x128xi32>
      %22 = arith.cmpi eq, %18, %21 : vector<8x128xi32>
      %cst_15 = arith.constant 0.000000e+00 : f32
      %23 = vector.shape_cast %17 : vector<1x128xf32> to vector<1x128xf32>
      %24 = vector.broadcast %23 : vector<1x128xf32> to vector<8x128xf32>
      %25 = vector.broadcast %cst_15 : f32 to vector<8x128xf32>
      %26 = arith.select %22, %24, %25 : vector<8x128xi1>, vector<8x128xf32>
      %27 = vector.shape_cast %14 : vector<1x128xf32> to vector<1x128xf32>
      %28 = vector.broadcast %27 : vector<1x128xf32> to vector<8x128xf32>
      %29 = arith.select %20, %28, %26 : vector<8x128xi1>, vector<8x128xf32>
      %c0_16 = arith.constant 0 : index
      %c0_17 = arith.constant 0 : index
      %30 = vector.load %arg6[%c0_16, %c0_17] : memref<8x128xf32, #tpu.memory_space<vmem>>, vector<8x128xf32>
      tpu.vector_store %arg6[%c0_16, %c0_17], %29 {strides = array<i32>} : memref<8x128xf32, #tpu.memory_space<vmem>>, vector<8x128xf32>,
      %31 = arith.truncf %12 : vector<32x128xf32> to vector<32x128xbf16>
      %c0_18 = arith.constant 0 : index
      %c0_19 = arith.constant 0 : index
      %32 = vector.load %arg5[%c0_18, %c0_19] : memref<32x128xbf16, #tpu.memory_space<vmem>>, vector<32x128xbf16>
      tpu.vector_store %arg5[%c0_18, %c0_19], %31 {strides = array<i32>} : memref<32x128xbf16, #tpu.memory_space<vmem>>, vector<32x128xbf16>,
    } else {
    }
    return
  }
  func.func @transform_0(%arg0: i32, %arg1: i32, %arg2: i32) -> (i32, i32) {
    %c0_i32 = arith.constant 0 : i32
    return %arg0, %arg2 : i32, i32
  }
  func.func @transform_1(%arg0: i32, %arg1: i32, %arg2: i32) -> (i32, i32) {
    %c0_i32 = arith.constant 0 : i32
    return %arg2, %arg1 : i32, i32
  }
  func.func @transform_2(%arg0: i32, %arg1: i32, %arg2: i32) -> (i32, i32) {
    %c0_i32 = arith.constant 0 : i32
    return %arg0, %arg1 : i32, i32
  }
  func.func @transform_3(%arg0: i32, %arg1: i32, %arg2: i32) -> (i32, i32) {
    %c0_i32 = arith.constant 0 : i32
    return %arg0, %arg1 : i32, i32
  }
}

module attributes {stable_mosaic.version = 11 : i64} {
  func.func @_bn_apply_lrelu_kernel(%arg0: i32, %arg1: i32, %arg2: memref<32x128xbf16, #tpu.memory_space<vmem>>, %arg3: memref<1x128xf32, #tpu.memory_space<vmem>>, %arg4: memref<1x128xf32, #tpu.memory_space<vmem>>, %arg5: memref<32x128xbf16, #tpu.memory_space<vmem>>) attributes {dimension_semantics = [#tpu.dimension_semantics<parallel>, #tpu.dimension_semantics<parallel>], iteration_bounds = array<i64: 1, 1>, scalar_prefetch = 0 : i64, scratch_operands = 0 : i64, tpu.core_type = #tpu.core_type<tc>, window_params = [{transform_indices = @transform_0, window_bounds = array<i64: 32, 128>}, {transform_indices = @transform_1, window_bounds = array<i64: 1, 128>}, {transform_indices = @transform_2, window_bounds = array<i64: 1, 128>}, {transform_indices = @transform_3, window_bounds = array<i64: 32, 128>}]} {
    %c0 = arith.constant 0 : index
    %c0_0 = arith.constant 0 : index
    %0 = vector.load %arg2[%c0, %c0_0] : memref<32x128xbf16, #tpu.memory_space<vmem>>, vector<32x128xbf16>
    %1 = arith.extf %0 : vector<32x128xbf16> to vector<32x128xf32>
    %c0_1 = arith.constant 0 : index
    %c0_2 = arith.constant 0 : index
    %2 = vector.load %arg3[%c0_1, %c0_2] : memref<1x128xf32, #tpu.memory_space<vmem>>, vector<1x128xf32>
    %3 = vector.broadcast %2 : vector<1x128xf32> to vector<32x128xf32>
    %4 = arith.mulf %1, %3 : vector<32x128xf32>
    %c0_3 = arith.constant 0 : index
    %c0_4 = arith.constant 0 : index
    %5 = vector.load %arg4[%c0_3, %c0_4] : memref<1x128xf32, #tpu.memory_space<vmem>>, vector<1x128xf32>
    %6 = vector.broadcast %5 : vector<1x128xf32> to vector<32x128xf32>
    %7 = arith.addf %4, %6 : vector<32x128xf32>
    %cst = arith.constant 0.000000e+00 : f32
    %8 = vector.broadcast %cst : f32 to vector<32x128xf32>
    %9 = arith.cmpf oge, %7, %8 : vector<32x128xf32>
    %cst_5 = arith.constant 2.000000e-01 : f32
    %10 = vector.broadcast %cst_5 : f32 to vector<32x128xf32>
    %11 = arith.mulf %10, %7 : vector<32x128xf32>
    %12 = arith.select %9, %7, %11 : vector<32x128xi1>, vector<32x128xf32>
    %13 = arith.truncf %12 : vector<32x128xf32> to vector<32x128xbf16>
    %c0_6 = arith.constant 0 : index
    %c0_7 = arith.constant 0 : index
    %14 = vector.load %arg5[%c0_6, %c0_7] : memref<32x128xbf16, #tpu.memory_space<vmem>>, vector<32x128xbf16>
    tpu.vector_store %arg5[%c0_6, %c0_7], %13 {strides = array<i32>} : memref<32x128xbf16, #tpu.memory_space<vmem>>, vector<32x128xbf16>,
    return
  }
  func.func @transform_0(%arg0: i32, %arg1: i32) -> (i32, i32) {
    %c0_i32 = arith.constant 0 : i32
    return %arg0, %arg1 : i32, i32
  }
  func.func @transform_1(%arg0: i32, %arg1: i32) -> (i32, i32) {
    %c0_i32 = arith.constant 0 : i32
    %c0_i32_0 = arith.constant 0 : i32
    return %c0_i32, %arg1 : i32, i32
  }
  func.func @transform_2(%arg0: i32, %arg1: i32) -> (i32, i32) {
    %c0_i32 = arith.constant 0 : i32
    %c0_i32_0 = arith.constant 0 : i32
    return %c0_i32, %arg1 : i32, i32
  }
  func.func @transform_3(%arg0: i32, %arg1: i32) -> (i32, i32) {
    %c0_i32 = arith.constant 0 : i32
    return %arg0, %arg1 : i32, i32
  }
}

module attributes {stable_mosaic.version = 11 : i64} {
  func.func @_conv_mm_kernel(%arg0: i32, %arg1: i32, %arg2: i32, %arg3: memref<24x512xbf16, #tpu.memory_space<vmem>>, %arg4: memref<512x128xbf16, #tpu.memory_space<vmem>>, %arg5: memref<24x128xbf16, #tpu.memory_space<vmem>>, %arg6: memref<8x128xf32, #tpu.memory_space<vmem>>, %arg7: memref<24x128xf32, #tpu.memory_space<vmem>>) attributes {dimension_semantics = [#tpu.dimension_semantics<parallel>, #tpu.dimension_semantics<parallel>, #tpu.dimension_semantics<arbitrary>], iteration_bounds = array<i64: 1, 1, 1>, scalar_prefetch = 0 : i64, scratch_operands = 1 : i64, tpu.core_type = #tpu.core_type<tc>, window_params = [{transform_indices = @transform_0, window_bounds = array<i64: 24, 512>}, {transform_indices = @transform_1, window_bounds = array<i64: 512, 128>}, {transform_indices = @transform_2, window_bounds = array<i64: 24, 128>}, {transform_indices = @transform_3, window_bounds = array<i64: 8, 128>}]} {
    %c0_i32 = arith.constant 0 : i32
    %0 = arith.cmpi eq, %arg2, %c0_i32 : i32
    %1 = arith.extui %0 : i1 to i32
    %c0_i32_0 = arith.constant 0 : i32
    %2 = arith.cmpi ne, %1, %c0_i32_0 : i32
    scf.if %2 {
      %cst_10 = arith.constant 0.000000e+00 : f32
      %12 = vector.broadcast %cst_10 : f32 to vector<24x128xf32>
      %c0_11 = arith.constant 0 : index
      %c0_12 = arith.constant 0 : index
      %13 = vector.load %arg7[%c0_11, %c0_12] : memref<24x128xf32, #tpu.memory_space<vmem>>, vector<24x128xf32>
      tpu.vector_store %arg7[%c0_11, %c0_12], %12 {strides = array<i32>} : memref<24x128xf32, #tpu.memory_space<vmem>>, vector<24x128xf32>,
    } else {
    }
    %c0 = arith.constant 0 : index
    %c0_1 = arith.constant 0 : index
    %3 = vector.load %arg7[%c0, %c0_1] : memref<24x128xf32, #tpu.memory_space<vmem>>, vector<24x128xf32>
    %c0_2 = arith.constant 0 : index
    %c0_3 = arith.constant 0 : index
    %4 = vector.load %arg3[%c0_2, %c0_3] : memref<24x512xbf16, #tpu.memory_space<vmem>>, vector<24x512xbf16>
    %c0_4 = arith.constant 0 : index
    %c0_5 = arith.constant 0 : index
    %5 = vector.load %arg4[%c0_4, %c0_5] : memref<512x128xbf16, #tpu.memory_space<vmem>>, vector<512x128xbf16>
    %cst = arith.constant dense<0.000000e+00> : vector<24x128xf32>
    %6 = tpu.matmul %4, %5, %cst {dimension_numbers = #tpu.dot_dimension_numbers<[1], [0], [0], [1], [0, 0, 1, 1], [], []>} : vector<24x512xbf16>, vector<512x128xbf16>, vector<24x128xf32> -> vector<24x128xf32>
    %7 = arith.addf %3, %6 : vector<24x128xf32>
    %c0_6 = arith.constant 0 : index
    %c0_7 = arith.constant 0 : index
    %8 = vector.load %arg7[%c0_6, %c0_7] : memref<24x128xf32, #tpu.memory_space<vmem>>, vector<24x128xf32>
    tpu.vector_store %arg7[%c0_6, %c0_7], %7 {strides = array<i32>} : memref<24x128xf32, #tpu.memory_space<vmem>>, vector<24x128xf32>,
    %c0_i32_8 = arith.constant 0 : i32
    %9 = arith.cmpi eq, %arg2, %c0_i32_8 : i32
    %10 = arith.extui %9 : i1 to i32
    %c0_i32_9 = arith.constant 0 : i32
    %11 = arith.cmpi ne, %10, %c0_i32_9 : i32
    scf.if %11 {
      %c0_10 = arith.constant 0 : index
      %c0_11 = arith.constant 0 : index
      %12 = vector.load %arg7[%c0_10, %c0_11] : memref<24x128xf32, #tpu.memory_space<vmem>>, vector<24x128xf32>
      %cst_12 = arith.constant dense<0.000000e+00> : vector<128xf32>
      %13 = vector.multi_reduction <add>, %12, %cst_12 [0] : vector<24x128xf32> to vector<128xf32>
      %14 = vector.shape_cast %13 : vector<128xf32> to vector<1x128xf32>
      %15 = arith.mulf %12, %12 : vector<24x128xf32>
      %cst_13 = arith.constant dense<0.000000e+00> : vector<128xf32>
      %16 = vector.multi_reduction <add>, %15, %cst_13 [0] : vector<24x128xf32> to vector<128xf32>
      %17 = vector.shape_cast %16 : vector<128xf32> to vector<1x128xf32>
      %18 = tpu.iota {dimensions = array<i32: 0>} : vector<8x128xi32>
      %c0_i32_14 = arith.constant 0 : i32
      %19 = vector.broadcast %c0_i32_14 : i32 to vector<8x128xi32>
      %20 = arith.cmpi eq, %18, %19 : vector<8x128xi32>
      %c1_i32 = arith.constant 1 : i32
      %21 = vector.broadcast %c1_i32 : i32 to vector<8x128xi32>
      %22 = arith.cmpi eq, %18, %21 : vector<8x128xi32>
      %cst_15 = arith.constant 0.000000e+00 : f32
      %23 = vector.shape_cast %17 : vector<1x128xf32> to vector<1x128xf32>
      %24 = vector.broadcast %23 : vector<1x128xf32> to vector<8x128xf32>
      %25 = vector.broadcast %cst_15 : f32 to vector<8x128xf32>
      %26 = arith.select %22, %24, %25 : vector<8x128xi1>, vector<8x128xf32>
      %27 = vector.shape_cast %14 : vector<1x128xf32> to vector<1x128xf32>
      %28 = vector.broadcast %27 : vector<1x128xf32> to vector<8x128xf32>
      %29 = arith.select %20, %28, %26 : vector<8x128xi1>, vector<8x128xf32>
      %c0_16 = arith.constant 0 : index
      %c0_17 = arith.constant 0 : index
      %30 = vector.load %arg6[%c0_16, %c0_17] : memref<8x128xf32, #tpu.memory_space<vmem>>, vector<8x128xf32>
      tpu.vector_store %arg6[%c0_16, %c0_17], %29 {strides = array<i32>} : memref<8x128xf32, #tpu.memory_space<vmem>>, vector<8x128xf32>,
      %31 = arith.truncf %12 : vector<24x128xf32> to vector<24x128xbf16>
      %c0_18 = arith.constant 0 : index
      %c0_19 = arith.constant 0 : index
      %32 = vector.load %arg5[%c0_18, %c0_19] : memref<24x128xbf16, #tpu.memory_space<vmem>>, vector<24x128xbf16>
      tpu.vector_store %arg5[%c0_18, %c0_19], %31 {strides = array<i32>} : memref<24x128xbf16, #tpu.memory_space<vmem>>, vector<24x128xbf16>,
    } else {
    }
    return
  }
  func.func @transform_0(%arg0: i32, %arg1: i32, %arg2: i32) -> (i32, i32) {
    %c0_i32 = arith.constant 0 : i32
    return %arg0, %arg2 : i32, i32
  }
  func.func @transform_1(%arg0: i32, %arg1: i32, %arg2: i32) -> (i32, i32) {
    %c0_i32 = arith.constant 0 : i32
    return %arg2, %arg1 : i32, i32
  }
  func.func @transform_2(%arg0: i32, %arg1: i32, %arg2: i32) -> (i32, i32) {
    %c0_i32 = arith.constant 0 : i32
    return %arg0, %arg1 : i32, i32
  }
  func.func @transform_3(%arg0: i32, %arg1: i32, %arg2: i32) -> (i32, i32) {
    %c0_i32 = arith.constant 0 : i32
    return %arg0, %arg1 : i32, i32
  }
}

module attributes {stable_mosaic.version = 11 : i64} {
  func.func @_bn_apply_lrelu_kernel(%arg0: i32, %arg1: i32, %arg2: memref<24x128xbf16, #tpu.memory_space<vmem>>, %arg3: memref<1x128xf32, #tpu.memory_space<vmem>>, %arg4: memref<1x128xf32, #tpu.memory_space<vmem>>, %arg5: memref<24x128xbf16, #tpu.memory_space<vmem>>) attributes {dimension_semantics = [#tpu.dimension_semantics<parallel>, #tpu.dimension_semantics<parallel>], iteration_bounds = array<i64: 1, 1>, scalar_prefetch = 0 : i64, scratch_operands = 0 : i64, tpu.core_type = #tpu.core_type<tc>, window_params = [{transform_indices = @transform_0, window_bounds = array<i64: 24, 128>}, {transform_indices = @transform_1, window_bounds = array<i64: 1, 128>}, {transform_indices = @transform_2, window_bounds = array<i64: 1, 128>}, {transform_indices = @transform_3, window_bounds = array<i64: 24, 128>}]} {
    %c0 = arith.constant 0 : index
    %c0_0 = arith.constant 0 : index
    %0 = vector.load %arg2[%c0, %c0_0] : memref<24x128xbf16, #tpu.memory_space<vmem>>, vector<24x128xbf16>
    %1 = arith.extf %0 : vector<24x128xbf16> to vector<24x128xf32>
    %c0_1 = arith.constant 0 : index
    %c0_2 = arith.constant 0 : index
    %2 = vector.load %arg3[%c0_1, %c0_2] : memref<1x128xf32, #tpu.memory_space<vmem>>, vector<1x128xf32>
    %3 = vector.broadcast %2 : vector<1x128xf32> to vector<24x128xf32>
    %4 = arith.mulf %1, %3 : vector<24x128xf32>
    %c0_3 = arith.constant 0 : index
    %c0_4 = arith.constant 0 : index
    %5 = vector.load %arg4[%c0_3, %c0_4] : memref<1x128xf32, #tpu.memory_space<vmem>>, vector<1x128xf32>
    %6 = vector.broadcast %5 : vector<1x128xf32> to vector<24x128xf32>
    %7 = arith.addf %4, %6 : vector<24x128xf32>
    %cst = arith.constant 0.000000e+00 : f32
    %8 = vector.broadcast %cst : f32 to vector<24x128xf32>
    %9 = arith.cmpf oge, %7, %8 : vector<24x128xf32>
    %cst_5 = arith.constant 2.000000e-01 : f32
    %10 = vector.broadcast %cst_5 : f32 to vector<24x128xf32>
    %11 = arith.mulf %10, %7 : vector<24x128xf32>
    %12 = arith.select %9, %7, %11 : vector<24x128xi1>, vector<24x128xf32>
    %13 = arith.truncf %12 : vector<24x128xf32> to vector<24x128xbf16>
    %c0_6 = arith.constant 0 : index
    %c0_7 = arith.constant 0 : index
    %14 = vector.load %arg5[%c0_6, %c0_7] : memref<24x128xbf16, #tpu.memory_space<vmem>>, vector<24x128xbf16>
    tpu.vector_store %arg5[%c0_6, %c0_7], %13 {strides = array<i32>} : memref<24x128xbf16, #tpu.memory_space<vmem>>, vector<24x128xbf16>,
    return
  }
  func.func @transform_0(%arg0: i32, %arg1: i32) -> (i32, i32) {
    %c0_i32 = arith.constant 0 : i32
    return %arg0, %arg1 : i32, i32
  }
  func.func @transform_1(%arg0: i32, %arg1: i32) -> (i32, i32) {
    %c0_i32 = arith.constant 0 : i32
    %c0_i32_0 = arith.constant 0 : i32
    return %c0_i32, %arg1 : i32, i32
  }
  func.func @transform_2(%arg0: i32, %arg1: i32) -> (i32, i32) {
    %c0_i32 = arith.constant 0 : i32
    %c0_i32_0 = arith.constant 0 : i32
    return %c0_i32, %arg1 : i32, i32
  }
  func.func @transform_3(%arg0: i32, %arg1: i32) -> (i32, i32) {
    %c0_i32 = arith.constant 0 : i32
    return %arg0, %arg1 : i32, i32
  }
}

module attributes {stable_mosaic.version = 11 : i64} {
  func.func @_conv_mm_kernel(%arg0: i32, %arg1: i32, %arg2: i32, %arg3: memref<8x512xbf16, #tpu.memory_space<vmem>>, %arg4: memref<512x128xbf16, #tpu.memory_space<vmem>>, %arg5: memref<1x128xf32, #tpu.memory_space<vmem>>, %arg6: memref<8x128xf32, #tpu.memory_space<vmem>>, %arg7: memref<8x128xf32, #tpu.memory_space<vmem>>) attributes {dimension_semantics = [#tpu.dimension_semantics<parallel>, #tpu.dimension_semantics<parallel>, #tpu.dimension_semantics<arbitrary>], iteration_bounds = array<i64: 1, 1, 2>, scalar_prefetch = 0 : i64, scratch_operands = 1 : i64, tpu.core_type = #tpu.core_type<tc>, window_params = [{transform_indices = @transform_0, window_bounds = array<i64: 8, 512>}, {transform_indices = @transform_1, window_bounds = array<i64: 512, 128>}, {transform_indices = @transform_2, window_bounds = array<i64: 1, 128>}, {transform_indices = @transform_3, window_bounds = array<i64: 8, 128>}]} {
    %c0_i32 = arith.constant 0 : i32
    %0 = arith.cmpi eq, %arg2, %c0_i32 : i32
    %1 = arith.extui %0 : i1 to i32
    %c0_i32_0 = arith.constant 0 : i32
    %2 = arith.cmpi ne, %1, %c0_i32_0 : i32
    scf.if %2 {
      %cst_9 = arith.constant 0.000000e+00 : f32
      %12 = vector.broadcast %cst_9 : f32 to vector<8x128xf32>
      %c0_10 = arith.constant 0 : index
      %c0_11 = arith.constant 0 : index
      %13 = vector.load %arg7[%c0_10, %c0_11] : memref<8x128xf32, #tpu.memory_space<vmem>>, vector<8x128xf32>
      tpu.vector_store %arg7[%c0_10, %c0_11], %12 {strides = array<i32>} : memref<8x128xf32, #tpu.memory_space<vmem>>, vector<8x128xf32>,
    } else {
    }
    %c0 = arith.constant 0 : index
    %c0_1 = arith.constant 0 : index
    %3 = vector.load %arg7[%c0, %c0_1] : memref<8x128xf32, #tpu.memory_space<vmem>>, vector<8x128xf32>
    %c0_2 = arith.constant 0 : index
    %c0_3 = arith.constant 0 : index
    %4 = vector.load %arg3[%c0_2, %c0_3] : memref<8x512xbf16, #tpu.memory_space<vmem>>, vector<8x512xbf16>
    %c0_4 = arith.constant 0 : index
    %c0_5 = arith.constant 0 : index
    %5 = vector.load %arg4[%c0_4, %c0_5] : memref<512x128xbf16, #tpu.memory_space<vmem>>, vector<512x128xbf16>
    %cst = arith.constant dense<0.000000e+00> : vector<8x128xf32>
    %6 = tpu.matmul %4, %5, %cst {dimension_numbers = #tpu.dot_dimension_numbers<[1], [0], [0], [1], [0, 0, 1, 1], [], []>} : vector<8x512xbf16>, vector<512x128xbf16>, vector<8x128xf32> -> vector<8x128xf32>
    %7 = arith.addf %3, %6 : vector<8x128xf32>
    %c0_6 = arith.constant 0 : index
    %c0_7 = arith.constant 0 : index
    %8 = vector.load %arg7[%c0_6, %c0_7] : memref<8x128xf32, #tpu.memory_space<vmem>>, vector<8x128xf32>
    tpu.vector_store %arg7[%c0_6, %c0_7], %7 {strides = array<i32>} : memref<8x128xf32, #tpu.memory_space<vmem>>, vector<8x128xf32>,
    %c1_i32 = arith.constant 1 : i32
    %9 = arith.cmpi eq, %arg2, %c1_i32 : i32
    %10 = arith.extui %9 : i1 to i32
    %c0_i32_8 = arith.constant 0 : i32
    %11 = arith.cmpi ne, %10, %c0_i32_8 : i32
    scf.if %11 {
      %c0_9 = arith.constant 0 : index
      %c0_10 = arith.constant 0 : index
      %12 = vector.load %arg7[%c0_9, %c0_10] : memref<8x128xf32, #tpu.memory_space<vmem>>, vector<8x128xf32>
      %c0_11 = arith.constant 0 : index
      %c0_12 = arith.constant 0 : index
      %13 = vector.load %arg5[%c0_11, %c0_12] : memref<1x128xf32, #tpu.memory_space<vmem>>, vector<1x128xf32>
      %14 = vector.broadcast %13 : vector<1x128xf32> to vector<8x128xf32>
      %15 = arith.addf %12, %14 : vector<8x128xf32>
      %c0_13 = arith.constant 0 : index
      %c0_14 = arith.constant 0 : index
      %16 = vector.load %arg6[%c0_13, %c0_14] : memref<8x128xf32, #tpu.memory_space<vmem>>, vector<8x128xf32>
      tpu.vector_store %arg6[%c0_13, %c0_14], %15 {strides = array<i32>} : memref<8x128xf32, #tpu.memory_space<vmem>>, vector<8x128xf32>,
    } else {
    }
    return
  }
  func.func @transform_0(%arg0: i32, %arg1: i32, %arg2: i32) -> (i32, i32) {
    %c0_i32 = arith.constant 0 : i32
    return %arg0, %arg2 : i32, i32
  }
  func.func @transform_1(%arg0: i32, %arg1: i32, %arg2: i32) -> (i32, i32) {
    %c0_i32 = arith.constant 0 : i32
    return %arg2, %arg1 : i32, i32
  }
  func.func @transform_2(%arg0: i32, %arg1: i32, %arg2: i32) -> (i32, i32) {
    %c0_i32 = arith.constant 0 : i32
    %c0_i32_0 = arith.constant 0 : i32
    return %c0_i32, %arg1 : i32, i32
  }
  func.func @transform_3(%arg0: i32, %arg1: i32, %arg2: i32) -> (i32, i32) {
    %c0_i32 = arith.constant 0 : i32
    return %arg0, %arg1 : i32, i32
  }
}

</mosaic_0001>

<llo_original>
// kernel: _lambda_.8
$region0: #{_lambda_.8}
  #allocation0 [shape = 'u32[]', space=smem, size = 0x4, offset = 0x4, fixed_abs, tag = 'smem constant byte address 0x4 - core index']
  #allocation1 [shape = 'u32[144,128]{1,0:T(1,128)}', space=vmem, size = 0x12000, scoped, tag = 'internal scratch']
  #allocation2 [shape = 'f32[512,128]{1,0:T(8,128)}', space=vmem, size = 0x40000, scoped, tag = 'scratch operand']
  %s0 = inlined_call_operand.vmem [shape: bf16[512,64], index: 0, kind: input, shape index: {}]
  %s1 = inlined_call_operand.vmem [shape: bf16[64,128], index: 1, kind: input, shape index: {}]
  %s2 = inlined_call_operand.vmem [shape: f32[1,128], index: 2, kind: input, shape index: {}]
  %s3 = inlined_call_operand.vmem [shape: bf16[512,128], index: 3, kind: output, shape index: {}]
  %s4 = sld [smem:[#allocation0]]
  $region30: #{_lambda_.8} parent=0
    _
  %s6 = ssub.s32 1, %s4
  %s7 = scalar_select 0, %s6, %s4
  // Predicated region
  $region2: #{_lambda_.8} parent=0 // pred_check
    _
  $region3: #{_lambda_.8} parent=0 // pred_check_branch
    %9 = sbr.rel (0) target = $region5
  $region4: #{_lambda_.8} parent=0 // pred_region
    _
  $region5: #{_lambda_.8} parent=0 // pred_fallthru
    _
  // Predicated region
  $region6: #{_lambda_.8} parent=0 // pred_check
    _
  $region7: #{_lambda_.8} parent=0 // pred_check_branch
    %11 = sbr.rel (0) target = $region9
  $region8: #{_lambda_.8} parent=0 // pred_region
    _
  $region9: #{_lambda_.8} parent=0 // pred_fallthru
    _
  // Predicated region
  $region10: #{_lambda_.8} parent=0 // pred_check
    _
  $region11: #{_lambda_.8} parent=0 // pred_check_branch
    %13 = sbr.rel (0) target = $region13
  $region12: #{_lambda_.8} parent=0 // pred_region
    _
  $region13: #{_lambda_.8} parent=0 // pred_fallthru
    _
  %p15 = scmp.eq.s32.totalorder 0, 0
  // Predicated region
  $region14: #{_lambda_.8} parent=0 // pred_check
    %p16 = pneg %p15
  $region15: #{_lambda_.8} parent=0 // pred_check_branch
    %18 = sbr.rel (%p16) target = $region17
  $region16: #{_lambda_.8} parent=0 // pred_region
    %19 = vst [vmem:[#allocation2] sm:$0xff] 0.0
    %20 = vst [vmem:[#allocation2 + $0x8] sm:$0xff] 0.0
    %21 = vst [vmem:[#allocation2 + $0x10] sm:$0xff] 0.0
    %22 = vst [vmem:[#allocation2 + $0x18] sm:$0xff] 0.0
    %23 = vst [vmem:[#allocation2 + $0x20] sm:$0xff] 0.0
    %24 = vst [vmem:[#allocation2 + $0x28] sm:$0xff] 0.0
    %25 = vst [vmem:[#allocation2 + $0x30] sm:$0xff] 0.0
    %26 = vst [vmem:[#allocation2 + $0x38] sm:$0xff] 0.0
    %27 = vst [vmem:[#allocation2 + $0x40] sm:$0xff] 0.0
    %28 = vst [vmem:[#allocation2 + $0x48] sm:$0xff] 0.0
    %29 = vst [vmem:[#allocation2 + $0x50] sm:$0xff] 0.0
    %30 = vst [vmem:[#allocation2 + $0x58] sm:$0xff] 0.0
    %31 = vst [vmem:[#allocation2 + $0x60] sm:$0xff] 0.0
    %32 = vst [vmem:[#allocation2 + $0x68] sm:$0xff] 0.0
    %33 = vst [vmem:[#allocation2 + $0x70] sm:$0xff] 0.0
    %34 = vst [vmem:[#allocation2 + $0x78] sm:$0xff] 0.0
    %35 = vst [vmem:[#allocation2 + $0x80] sm:$0xff] 0.0
    %36 = vst [vmem:[#allocation2 + $0x88] sm:$0xff] 0.0
    %37 = vst [vmem:[#allocation2 + $0x90] sm:$0xff] 0.0
    %38 = vst [vmem:[#allocation2 + $0x98] sm:$0xff] 0.0
    %39 = vst [vmem:[#allocation2 + $0xa0] sm:$0xff] 0.0
    %40 = vst [vmem:[#allocation2 + $0xa8] sm:$0xff] 0.0
    %41 = vst [vmem:[#allocation2 + $0xb0] sm:$0xff] 0.0
    %42 = vst [vmem:[#allocation2 + $0xb8] sm:$0xff] 0.0
    %43 = vst [vmem:[#allocation2 + $0xc0] sm:$0xff] 0.0
    %44 = vst [vmem:[#allocation2 + $0xc8] sm:$0xff] 0.0
    %45 = vst [vmem:[#allocation2 + $0xd0] sm:$0xff] 0.0
    %46 = vst [vmem:[#allocation2 + $0xd8] sm:$0xff] 0.0
    %47 = vst [vmem:[#allocation2 + $0xe0] sm:$0xff] 0.0
    %48 = vst [vmem:[#allocation2 + $0xe8] sm:$0xff] 0.0
    %49 = vst [vmem:[#allocation2 + $0xf0] sm:$0xff] 0.0
    %50 = vst [vmem:[#allocation2 + $0xf8] sm:$0xff] 0.0
    %51 = vst [vmem:[#allocation2 + $0x100] sm:$0xff] 0.0
    %52 = vst [vmem:[#allocation2 + $0x108] sm:$0xff] 0.0
    %53 = vst [vmem:[#allocation2 + $0x110] sm:$0xff] 0.0
    %54 = vst [vmem:[#allocation2 + $0x118] sm:$0xff] 0.0
    %55 = vst [vmem:[#allocation2 + $0x120] sm:$0xff] 0.0
    %56 = vst [vmem:[#allocation2 + $0x128] sm:$0xff] 0.0
    %57 = vst [vmem:[#allocation2 + $0x130] sm:$0xff] 0.0
    %58 = vst [vmem:[#allocation2 + $0x138] sm:$0xff] 0.0
    %59 = vst [vmem:[#allocation2 + $0x140] sm:$0xff] 0.0
    %60 = vst [vmem:[#allocation2 + $0x148] sm:$0xff] 0.0
    %61 = vst [vmem:[#allocation2 + $0x150] sm:$0xff] 0.0
    %62 = vst [vmem:[#allocation2 + $0x158] sm:$0xff] 0.0
    %63 = vst [vmem:[#allocation2 + $0x160] sm:$0xff] 0.0
    %64 = vst [vmem:[#allocation2 + $0x168] sm:$0xff] 0.0
    %65 = vst [vmem:[#allocation2 + $0x170] sm:$0xff] 0.0
    %66 = vst [vmem:[#allocation2 + $0x178] sm:$0xff] 0.0
    %67 = vst [vmem:[#allocation2 + $0x180] sm:$0xff] 0.0
    %68 = vst [vmem:[#allocation2 + $0x188] sm:$0xff] 0.0
    %69 = vst [vmem:[#allocation2 + $0x190] sm:$0xff] 0.0
    %70 = vst [vmem:[#allocation2 + $0x198] sm:$0xff] 0.0
    %71 = vst [vmem:[#allocation2 + $0x1a0] sm:$0xff] 0.0
    %72 = vst [vmem:[#allocation2 + $0x1a8] sm:$0xff] 0.0
    %73 = vst [vmem:[#allocation2 + $0x1b0] sm:$0xff] 0.0
    %74 = vst [vmem:[#allocation2 + $0x1b8] sm:$0xff] 0.0
    %75 = vst [vmem:[#allocation2 + $0x1c0] sm:$0xff] 0.0
    %76 = vst [vmem:[#allocation2 + $0x1c8] sm:$0xff] 0.0
    %77 = vst [vmem:[#allocation2 + $0x1d0] sm:$0xff] 0.0
    %78 = vst [vmem:[#allocation2 + $0x1d8] sm:$0xff] 0.0
    %79 = vst [vmem:[#allocation2 + $0x1e0] sm:$0xff] 0.0
    %80 = vst [vmem:[#allocation2 + $0x1e8] sm:$0xff] 0.0
    %81 = vst [vmem:[#allocation2 + $0x1f0] sm:$0xff] 0.0
    %82 = vst [vmem:[#allocation2 + $0x1f8] sm:$0xff] 0.0
  $region17: #{_lambda_.8} parent=0 // pred_fallthru
    _
  %v83 = vld [vmem:[#allocation2] sm:$0xff]
  %v84 = vld [vmem:[#allocation2 + $0x8] sm:$0xff]
  %v85 = vld [vmem:[#allocation2 + $0x10] sm:$0xff]
  %v86 = vld [vmem:[#allocation2 + $0x18] sm:$0xff]
  %v87 = vld [vmem:[#allocation2 + $0x20] sm:$0xff]
  %v88 = vld [vmem:[#allocation2 + $0x28] sm:$0xff]
  %v89 = vld [vmem:[#allocation2 + $0x30] sm:$0xff]
  %v90 = vld [vmem:[#allocation2 + $0x38] sm:$0xff]
  %v91 = vld [vmem:[#allocation2 + $0x40] sm:$0xff]
  %v92 = vld [vmem:[#allocation2 + $0x48] sm:$0xff]
  %v93 = vld [vmem:[#allocation2 + $0x50] sm:$0xff]
  %v94 = vld [vmem:[#allocation2 + $0x58] sm:$0xff]
  %v95 = vld [vmem:[#allocation2 + $0x60] sm:$0xff]
  %v96 = vld [vmem:[#allocation2 + $0x68] sm:$0xff]
  %v97 = vld [vmem:[#allocation2 + $0x70] sm:$0xff]
  %v98 = vld [vmem:[#allocation2 + $0x78] sm:$0xff]
  %v99 = vld [vmem:[#allocation2 + $0x80] sm:$0xff]
  %v100 = vld [vmem:[#allocation2 + $0x88] sm:$0xff]
  %v101 = vld [vmem:[#allocation2 + $0x90] sm:$0xff]
  %v102 = vld [vmem:[#allocation2 + $0x98] sm:$0xff]
  %v103 = vld [vmem:[#allocation2 + $0xa0] sm:$0xff]
  %v104 = vld [vmem:[#allocation2 + $0xa8] sm:$0xff]
  %v105 = vld [vmem:[#allocation2 + $0xb0] sm:$0xff]
  %v106 = vld [vmem:[#allocation2 + $0xb8] sm:$0xff]
  %v107 = vld [vmem:[#allocation2 + $0xc0] sm:$0xff]
  %v108 = vld [vmem:[#allocation2 + $0xc8] sm:$0xff]
  %v109 = vld [vmem:[#allocation2 + $0xd0] sm:$0xff]
  %v110 = vld [vmem:[#allocation2 + $0xd8] sm:$0xff]
  %v111 = vld [vmem:[#allocation2 + $0xe0] sm:$0xff]
  %v112 = vld [vmem:[#allocation2 + $0xe8] sm:$0xff]
  %v113 = vld [vmem:[#allocation2 + $0xf0] sm:$0xff]
  %v114 = vld [vmem:[#allocation2 + $0xf8] sm:$0xff]
  %v115 = vld [vmem:[#allocation2 + $0x100] sm:$0xff]
  %v116 = vld [vmem:[#allocation2 + $0x108] sm:$0xff]
  %v117 = vld [vmem:[#allocation2 + $0x110] sm:$0xff]
  %v118 = vld [vmem:[#allocation2 + $0x118] sm:$0xff]
  %v119 = vld [vmem:[#allocation2 + $0x120] sm:$0xff]
  %v120 = vld [vmem:[#allocation2 + $0x128] sm:$0xff]
  %v121 = vld [vmem:[#allocation2 + $0x130] sm:$0xff]
  %v122 = vld [vmem:[#allocation2 + $0x138] sm:$0xff]
  %v123 = vld [vmem:[#allocation2 + $0x140] sm:$0xff]
  %v124 = vld [vmem:[#allocation2 + $0x148] sm:$0xff]
  %v125 = vld [vmem:[#allocation2 + $0x150] sm:$0xff]
  %v126 = vld [vmem:[#allocation2 + $0x158] sm:$0xff]
  %v127 = vld [vmem:[#allocation2 + $0x160] sm:$0xff]
  %v128 = vld [vmem:[#allocation2 + $0x168] sm:$0xff]
  %v129 = vld [vmem:[#allocation2 + $0x170] sm:$0xff]
  %v130 = vld [vmem:[#allocation2 + $0x178] sm:$0xff]
  %v131 = vld [vmem:[#allocation2 + $0x180] sm:$0xff]
  %v132 = vld [vmem:[#allocation2 + $0x188] sm:$0xff]
  %v133 = vld [vmem:[#allocation2 + $0x190] sm:$0xff]
  %v134 = vld [vmem:[#allocation2 + $0x198] sm:$0xff]
  %v135 = vld [vmem:[#allocation2 + $0x1a0] sm:$0xff]
  %v136 = vld [vmem:[#allocation2 + $0x1a8] sm:$0xff]
  %v137 = vld [vmem:[#allocation2 + $0x1b0] sm:$0xff]
  %v138 = vld [vmem:[#allocation2 + $0x1b8] sm:$0xff]
  %v139 = vld [vmem:[#allocation2 + $0x1c0] sm:$0xff]
  %v140 = vld [vmem:[#allocation2 + $0x1c8] sm:$0xff]
  %v141 = vld [vmem:[#allocation2 + $0x1d0] sm:$0xff]
  %v142 = vld [vmem:[#allocation2 + $0x1d8] sm:$0xff]
  %v143 = vld [vmem:[#allocation2 + $0x1e0] sm:$0xff]
  %v144 = vld [vmem:[#allocation2 + $0x1e8] sm:$0xff]
  %v145 = vld [vmem:[#allocation2 + $0x1f0] sm:$0xff]
  %v146 = vld [vmem:[#allocation2 + $0x1f8] sm:$0xff]
  %v147 = vld [vmem:[%s0] sm:$0xf]
  %v148 = vld [vmem:[%s0 + $0x4] sm:$0xf]
  %v149 = vld [vmem:[%s0 + $0x8] sm:$0xf]
  %v150 = vld [vmem:[%s0 + $0xc] sm:$0xf]
  %v151 = vld [vmem:[%s0 + $0x10] sm:$0xf]
  %v152 = vld [vmem:[%s0 + $0x14] sm:$0xf]
  %v153 = vld [vmem:[%s0 + $0x18] sm:$0xf]
  %v154 = vld [vmem:[%s0 + $0x1c] sm:$0xf]
  %v155 = vld [vmem:[%s0 + $0x20] sm:$0xf]
  %v156 = vld [vmem:[%s0 + $0x24] sm:$0xf]
  %v157 = vld [vmem:[%s0 + $0x28] sm:$0xf]
  %v158 = vld [vmem:[%s0 + $0x2c] sm:$0xf]
  %v159 = vld [vmem:[%s0 + $0x30] sm:$0xf]
  %v160 = vld [vmem:[%s0 + $0x34] sm:$0xf]
  %v161 = vld [vmem:[%s0 + $0x38] sm:$0xf]
  %v162 = vld [vmem:[%s0 + $0x3c] sm:$0xf]
  %v163 = vld [vmem:[%s0 + $0x40] sm:$0xf]
  %v164 = vld [vmem:[%s0 + $0x44] sm:$0xf]
  %v165 = vld [vmem:[%s0 + $0x48] sm:$0xf]
  %v166 = vld [vmem:[%s0 + $0x4c] sm:$0xf]
  %v167 = vld [vmem:[%s0 + $0x50] sm:$0xf]
  %v168 = vld [vmem:[%s0 + $0x54] sm:$0xf]
  %v169 = vld [vmem:[%s0 + $0x58] sm:$0xf]
  %v170 = vld [vmem:[%s0 + $0x5c] sm:$0xf]
  %v171 = vld [vmem:[%s0 + $0x60] sm:$0xf]
  %v172 = vld [vmem:[%s0 + $0x64] sm:$0xf]
  %v173 = vld [vmem:[%s0 + $0x68] sm:$0xf]
  %v174 = vld [vmem:[%s0 + $0x6c] sm:$0xf]
  %v175 = vld [vmem:[%s0 + $0x70] sm:$0xf]
  %v176 = vld [vmem:[%s0 + $0x74] sm:$0xf]
  %v177 = vld [vmem:[%s0 + $0x78] sm:$0xf]
  %v178 = vld [vmem:[%s0 + $0x7c] sm:$0xf]
  %v179 = vld [vmem:[%s0 + $0x80] sm:$0xf]
  %v180 = vld [vmem:[%s0 + $0x84] sm:$0xf]
  %v181 = vld [vmem:[%s0 + $0x88] sm:$0xf]
  %v182 = vld [vmem:[%s0 + $0x8c] sm:$0xf]
  %v183 = vld [vmem:[%s0 + $0x90] sm:$0xf]
  %v184 = vld [vmem:[%s0 + $0x94] sm:$0xf]
  %v185 = vld [vmem:[%s0 + $0x98] sm:$0xf]
  %v186 = vld [vmem:[%s0 + $0x9c] sm:$0xf]
  %v187 = vld [vmem:[%s0 + $0xa0] sm:$0xf]
  %v188 = vld [vmem:[%s0 + $0xa4] sm:$0xf]
  %v189 = vld [vmem:[%s0 + $0xa8] sm:$0xf]
  %v190 = vld [vmem:[%s0 + $0xac] sm:$0xf]
  %v191 = vld [vmem:[%s0 + $0xb0] sm:$0xf]
  %v192 = vld [vmem:[%s0 + $0xb4] sm:$0xf]
  %v193 = vld [vmem:[%s0 + $0xb8] sm:$0xf]
  %v194 = vld [vmem:[%s0 + $0xbc] sm:$0xf]
  %v195 = vld [vmem:[%s0 + $0xc0] sm:$0xf]
  %v196 = vld [vmem:[%s0 + $0xc4] sm:$0xf]
  %v197 = vld [vmem:[%s0 + $0xc8] sm:$0xf]
  %v198 = vld [vmem:[%s0 + $0xcc] sm:$0xf]
  %v199 = vld [vmem:[%s0 + $0xd0] sm:$0xf]
  %v200 = vld [vmem:[%s0 + $0xd4] sm:$0xf]
  %v201 = vld [vmem:[%s0 + $0xd8] sm:$0xf]
  %v202 = vld [vmem:[%s0 + $0xdc] sm:$0xf]
  %v203 = vld [vmem:[%s0 + $0xe0] sm:$0xf]
  %v204 = vld [vmem:[%s0 + $0xe4] sm:$0xf]
  %v205 = vld [vmem:[%s0 + $0xe8] sm:$0xf]
  %v206 = vld [vmem:[%s0 + $0xec] sm:$0xf]
  %v207 = vld [vmem:[%s0 + $0xf0] sm:$0xf]
  %v208 = vld [vmem:[%s0 + $0xf4] sm:$0xf]
  %v209 = vld [vmem:[%s0 + $0xf8] sm:$0xf]
  %v210 = vld [vmem:[%s0 + $0xfc] sm:$0xf]
  %v211 = vld [vmem:[%s1] sm:$0xf]
  %v212 = vld [vmem:[%s1 + $0x4] sm:$0xf]
  %v213 = vld [vmem:[%s1 + $0x8] sm:$0xf]
  %v214 = vld [vmem:[%s1 + $0xc] sm:$0xf]
  %v215 = vld [vmem:[%s1 + $0x10] sm:$0xf]
  %v216 = vld [vmem:[%s1 + $0x14] sm:$0xf]
  %v217 = vld [vmem:[%s1 + $0x18] sm:$0xf]
  %v218 = vld [vmem:[%s1 + $0x1c] sm:$0xf]
  %v283 = vunpack.c.l.b16 %v147
  %v284 = vunpack.c.l.b16 %v148
  %v285 = vunpack.c.l.b16 %v149
  %v286 = vunpack.c.l.b16 %v150
  %v287 = vunpack.c.l.b16 %v151
  %v288 = vunpack.c.l.b16 %v152
  %v289 = vunpack.c.l.b16 %v153
  %v290 = vunpack.c.l.b16 %v154
  %v291 = vunpack.c.l.b16 %v155
  %v292 = vunpack.c.l.b16 %v156
  %v293 = vunpack.c.l.b16 %v157
  %v294 = vunpack.c.l.b16 %v158
  %v295 = vunpack.c.l.b16 %v159
  %v296 = vunpack.c.l.b16 %v160
  %v297 = vunpack.c.l.b16 %v161
  %v298 = vunpack.c.l.b16 %v162
  %v299 = vunpack.c.l.b16 %v163
  %v300 = vunpack.c.l.b16 %v164
  %v301 = vunpack.c.l.b16 %v165
  %v302 = vunpack.c.l.b16 %v166
  %v303 = vunpack.c.l.b16 %v167
  %v304 = vunpack.c.l.b16 %v168
  %v305 = vunpack.c.l.b16 %v169
  %v306 = vunpack.c.l.b16 %v170
  %v307 = vunpack.c.l.b16 %v171
  %v308 = vunpack.c.l.b16 %v172
  %v309 = vunpack.c.l.b16 %v173
  %v310 = vunpack.c.l.b16 %v174
  %v311 = vunpack.c.l.b16 %v175
  %v312 = vunpack.c.l.b16 %v176
  %v313 = vunpack.c.l.b16 %v177
  %v314 = vunpack.c.l.b16 %v178
  %v315 = vunpack.c.l.b16 %v179
  %v316 = vunpack.c.l.b16 %v180
  %v317 = vunpack.c.l.b16 %v181
  %v318 = vunpack.c.l.b16 %v182
  %v319 = vunpack.c.l.b16 %v183
  %v320 = vunpack.c.l.b16 %v184
  %v321 = vunpack.c.l.b16 %v185
  %v322 = vunpack.c.l.b16 %v186
  %v323 = vunpack.c.l.b16 %v187
  %v324 = vunpack.c.l.b16 %v188
  %v325 = vunpack.c.l.b16 %v189
  %v326 = vunpack.c.l.b16 %v190
  %v327 = vunpack.c.l.b16 %v191
  %v328 = vunpack.c.l.b16 %v192
  %v329 = vunpack.c.l.b16 %v193
  %v330 = vunpack.c.l.b16 %v194
  %v331 = vunpack.c.l.b16 %v195
  %v332 = vunpack.c.l.b16 %v196
  %v333 = vunpack.c.l.b16 %v197
  %v334 = vunpack.c.l.b16 %v198
  %v335 = vunpack.c.l.b16 %v199
  %v336 = vunpack.c.l.b16 %v200
  %v337 = vunpack.c.l.b16 %v201
  %v338 = vunpack.c.l.b16 %v202
  %v339 = vunpack.c.l.b16 %v203
  %v340 = vunpack.c.l.b16 %v204
  %v341 = vunpack.c.l.b16 %v205
  %v342 = vunpack.c.l.b16 %v206
  %v343 = vunpack.c.l.b16 %v207
  %v344 = vunpack.c.l.b16 %v208
  %v345 = vunpack.c.l.b16 %v209
  %v346 = vunpack.c.l.b16 %v210
  %v347 = vpack.c.b16 %v284, %v283
  %v348 = vpack.c.b16 %v286, %v285
  %v349 = vpack.c.b16 %v288, %v287
  %v350 = vpack.c.b16 %v290, %v289
  %v351 = vpack.c.b16 %v292, %v291
  %v352 = vpack.c.b16 %v294, %v293
  %v353 = vpack.c.b16 %v296, %v295
  %v354 = vpack.c.b16 %v298, %v297
  %v355 = vpack.c.b16 %v300, %v299
  %v356 = vpack.c.b16 %v302, %v301
  %v357 = vpack.c.b16 %v304, %v303
  %v358 = vpack.c.b16 %v306, %v305
  %v359 = vpack.c.b16 %v308, %v307
  %v360 = vpack.c.b16 %v310, %v309
  %v361 = vpack.c.b16 %v312, %v311
  %v362 = vpack.c.b16 %v314, %v313
  %v363 = vpack.c.b16 %v316, %v315
  %v364 = vpack.c.b16 %v318, %v317
  %v365 = vpack.c.b16 %v320, %v319
  %v366 = vpack.c.b16 %v322, %v321
  %v367 = vpack.c.b16 %v324, %v323
  %v368 = vpack.c.b16 %v326, %v325
  %v369 = vpack.c.b16 %v328, %v327
  %v370 = vpack.c.b16 %v330, %v329
  %v371 = vpack.c.b16 %v332, %v331
  %v372 = vpack.c.b16 %v334, %v333
  %v373 = vpack.c.b16 %v336, %v335
  %v374 = vpack.c.b16 %v338, %v337
  %v375 = vpack.c.b16 %v340, %v339
  %v376 = vpack.c.b16 %v342, %v341
  %v377 = vpack.c.b16 %v344, %v343
  %v378 = vpack.c.b16 %v346, %v345
  %v387 = vunpack.c.l.b16 %v211
  %v388 = vunpack.c.l.b16 %v212
  %v389 = vunpack.c.l.b16 %v213
  %v390 = vunpack.c.l.b16 %v214
  %v391 = vunpack.c.l.b16 %v215
  %v392 = vunpack.c.l.b16 %v216
  %v393 = vunpack.c.l.b16 %v217
  %v394 = vunpack.c.l.b16 %v218
  %v395 = vpack.c.b16 %v388, %v387
  %v396 = vpack.c.b16 %v390, %v389
  %v397 = vpack.c.b16 %v392, %v391
  %v398 = vpack.c.b16 %v394, %v393
  %vm403 = vcmask 523264
  %v405 = vsel %vm403, %v347, 0
  %v408 = vsel %vm403, %v348, 0
  %v411 = vsel %vm403, %v349, 0
  %v414 = vsel %vm403, %v350, 0
  %v417 = vsel %vm403, %v351, 0
  %v420 = vsel %vm403, %v352, 0
  %v423 = vsel %vm403, %v353, 0
  %v426 = vsel %vm403, %v354, 0
  %v429 = vsel %vm403, %v355, 0
  %v432 = vsel %vm403, %v356, 0
  %v435 = vsel %vm403, %v357, 0
  %v438 = vsel %vm403, %v358, 0
  %v441 = vsel %vm403, %v359, 0
  %v444 = vsel %vm403, %v360, 0
  %v447 = vsel %vm403, %v361, 0
  %v450 = vsel %vm403, %v362, 0
  %v453 = vsel %vm403, %v363, 0
  %v456 = vsel %vm403, %v364, 0
  %v459 = vsel %vm403, %v365, 0
  %v462 = vsel %vm403, %v366, 0
  %v465 = vsel %vm403, %v367, 0
  %v468 = vsel %vm403, %v368, 0
  %v471 = vsel %vm403, %v369, 0
  %v474 = vsel %vm403, %v370, 0
  %v477 = vsel %vm403, %v371, 0
  %v480 = vsel %vm403, %v372, 0
  %v483 = vsel %vm403, %v373, 0
  %v486 = vsel %vm403, %v374, 0
  %v489 = vsel %vm403, %v375, 0
  %v492 = vsel %vm403, %v376, 0
  %v495 = vsel %vm403, %v377, 0
  %v498 = vsel %vm403, %v378, 0
  %500 = vmatprep.subr.bf16.mxu0 0
  %501 = vmatpush1.bf16.msra.mxu0 %v395
  %502 = vmatprep.subr.bf16.mxu0 0
  %503 = vmatpush1.bf16.msra.mxu0 %v396
  %504 = vmatprep.subr.bf16.mxu0 0
  %505 = vmatpush1.bf16.msra.mxu0 %v397
  %506 = vmatprep.subr.bf16.mxu0 0
  %507 = vmatpush1.bf16.msra.mxu0 %v398
  %508 = vmatprep.subr.bf16.mxu0 0
  %509 = vmatpush1.bf16.msra.mxu0 0
  %510 = vmatprep.subr.bf16.mxu0 0
  %511 = vmatpush1.bf16.msra.mxu0 0
  %512 = vmatprep.subr.bf16.mxu0 0
  %513 = vmatpush1.bf16.msra.mxu0 0
  %514 = vmatprep.subr.bf16.mxu0 0
  %515 = vmatpush1.bf16.msra.mxu0 0
  %516 = vmatprep.subr.bf16.mxu0 0
  %517 = vmatpush1.bf16.msra.mxu0 0
  %518 = vmatprep.subr.bf16.mxu0 0
  %519 = vmatpush1.bf16.msra.mxu0 0
  %520 = vmatprep.subr.bf16.mxu0 0
  %521 = vmatpush1.bf16.msra.mxu0 0
  %522 = vmatprep.subr.bf16.mxu0 0
  %523 = vmatpush1.bf16.msra.mxu0 0
  %524 = vmatprep.subr.bf16.mxu0 0
  %525 = vmatpush1.bf16.msra.mxu0 0
  %526 = vmatprep.subr.bf16.mxu0 0
  %527 = vmatpush1.bf16.msra.mxu0 0
  %528 = vmatprep.subr.bf16.mxu0 0
  %529 = vmatpush1.bf16.msra.mxu0 0
  %530 = vmatprep.subr.bf16.mxu0 0
  %531 = vmatpush1.bf16.msra.mxu0 0
  %532 = vmatprep.mubr.bf16.mxu0 0
  %533 = vmatmul.mubr.bf16.gmra.mrb[0].mxu0 %v405
  %v534 = vpop.f32.mrb[0].mxu0
  %v535 = vadd.f32 0.0, %v534
  %v536 = vpop.f32.mrb[0].mxu0
  %v537 = vpop.f32.mrb[0].mxu0
  %v538 = vadd.f32 0.0, %v537
  %v539 = vpop.f32.mrb[0].mxu0
  %540 = vmatprep.mubr.bf16.mxu0 0
  %541 = vmatmul.mubr.bf16.gmra.mrb[0].mxu0 %v408
  %v542 = vpop.f32.mrb[0].mxu0
  %v543 = vadd.f32 0.0, %v542
  %v544 = vpop.f32.mrb[0].mxu0
  %v545 = vpop.f32.mrb[0].mxu0
  %v546 = vadd.f32 0.0, %v545
  %v547 = vpop.f32.mrb[0].mxu0
  %548 = vmatprep.mubr.bf16.mxu0 0
  %549 = vmatmul.mubr.bf16.gmra.mrb[0].mxu0 %v411
  %v550 = vpop.f32.mrb[0].mxu0
  %v551 = vadd.f32 0.0, %v550
  %v552 = vpop.f32.mrb[0].mxu0
  %v553 = vpop.f32.mrb[0].mxu0
  %v554 = vadd.f32 0.0, %v553
  %v555 = vpop.f32.mrb[0].mxu0
  %556 = vmatprep.mubr.bf16.mxu0 0
  %557 = vmatmul.mubr.bf16.gmra.mrb[0].mxu0 %v414
  %v558 = vpop.f32.mrb[0].mxu0
  %v559 = vadd.f32 0.0, %v558
  %v560 = vpop.f32.mrb[0].mxu0
  %v561 = vpop.f32.mrb[0].mxu0
  %v562 = vadd.f32 0.0, %v561
  %v563 = vpop.f32.mrb[0].mxu0
  %564 = vmatprep.mubr.bf16.mxu0 0
  %565 = vmatmul.mubr.bf16.gmra.mrb[0].mxu0 %v417
  %v566 = vpop.f32.mrb[0].mxu0
  %v567 = vadd.f32 0.0, %v566
  %v568 = vpop.f32.mrb[0].mxu0
  %v569 = vpop.f32.mrb[0].mxu0
  %v570 = vadd.f32 0.0, %v569
  %v571 = vpop.f32.mrb[0].mxu0
  %572 = vmatprep.mubr.bf16.mxu0 0
  %573 = vmatmul.mubr.bf16.gmra.mrb[0].mxu0 %v420
  %v574 = vpop.f32.mrb[0].mxu0
  %v575 = vadd.f32 0.0, %v574
  %v576 = vpop.f32.mrb[0].mxu0
  %v577 = vpop.f32.mrb[0].mxu0
  %v578 = vadd.f32 0.0, %v577
  %v579 = vpop.f32.mrb[0].mxu0
  %580 = vmatprep.mubr.bf16.mxu0 0
  %581 = vmatmul.mubr.bf16.gmra.mrb[0].mxu0 %v423
  %v582 = vpop.f32.mrb[0].mxu0
  %v583 = vadd.f32 0.0, %v582
  %v584 = vpop.f32.mrb[0].mxu0
  %v585 = vpop.f32.mrb[0].mxu0
  %v586 = vadd.f32 0.0, %v585
  %v587 = vpop.f32.mrb[0].mxu0
  %588 = vmatprep.mubr.bf16.mxu0 0
  %589 = vmatmul.mubr.bf16.gmra.mrb[0].mxu0 %v426
  %v590 = vpop.f32.mrb[0].mxu0
  %v591 = vadd.f32 0.0, %v590
  %v592 = vpop.f32.mrb[0].mxu0
  %v593 = vpop.f32.mrb[0].mxu0
  %v594 = vadd.f32 0.0, %v593
  %v595 = vpop.f32.mrb[0].mxu0
  %596 = vmatprep.mubr.bf16.mxu0 0
  %597 = vmatmul.mubr.bf16.gmra.mrb[0].mxu0 %v429
  %v598 = vpop.f32.mrb[0].mxu0
  %v599 = vadd.f32 0.0, %v598
  %v600 = vpop.f32.mrb[0].mxu0
  %v601 = vpop.f32.mrb[0].mxu0
  %v602 = vadd.f32 0.0, %v601
  %v603 = vpop.f32.mrb[0].mxu0
  %604 = vmatprep.mubr.bf16.mxu0 0
  %605 = vmatmul.mubr.bf16.gmra.mrb[0].mxu0 %v432
  %v606 = vpop.f32.mrb[0].mxu0
  %v607 = vadd.f32 0.0, %v606
  %v608 = vpop.f32.mrb[0].mxu0
  %v609 = vpop.f32.mrb[0].mxu0
  %v610 = vadd.f32 0.0, %v609
  %v611 = vpop.f32.mrb[0].mxu0
  %612 = vmatprep.mubr.bf16.mxu0 0
  %613 = vmatmul.mubr.bf16.gmra.mrb[0].mxu0 %v435
  %v614 = vpop.f32.mrb[0].mxu0
  %v615 = vadd.f32 0.0, %v614
  %v616 = vpop.f32.mrb[0].mxu0
  %v617 = vpop.f32.mrb[0].mxu0
  %v618 = vadd.f32 0.0, %v617
  %v619 = vpop.f32.mrb[0].mxu0
  %620 = vmatprep.mubr.bf16.mxu0 0
  %621 = vmatmul.mubr.bf16.gmra.mrb[0].mxu0 %v438
  %v622 = vpop.f32.mrb[0].mxu0
  %v623 = vadd.f32 0.0, %v622
  %v624 = vpop.f32.mrb[0].mxu0
  %v625 = vpop.f32.mrb[0].mxu0
  %v626 = vadd.f32 0.0, %v625
  %v627 = vpop.f32.mrb[0].mxu0
  %628 = vmatprep.mubr.bf16.mxu0 0
  %629 = vmatmul.mubr.bf16.gmra.mrb[0].mxu0 %v441
  %v630 = vpop.f32.mrb[0].mxu0
  %v631 = vadd.f32 0.0, %v630
  %v632 = vpop.f32.mrb[0].mxu0
  %v633 = vpop.f32.mrb[0].mxu0
  %v634 = vadd.f32 0.0, %v633
  %v635 = vpop.f32.mrb[0].mxu0
  %636 = vmatprep.mubr.bf16.mxu0 0
  %637 = vmatmul.mubr.bf16.gmra.mrb[0].mxu0 %v444
  %v638 = vpop.f32.mrb[0].mxu0
  %v639 = vadd.f32 0.0, %v638
  %v640 = vpop.f32.mrb[0].mxu0
  %v641 = vpop.f32.mrb[0].mxu0
  %v642 = vadd.f32 0.0, %v641
  %v643 = vpop.f32.mrb[0].mxu0
  %644 = vmatprep.mubr.bf16.mxu0 0
  %645 = vmatmul.mubr.bf16.gmra.mrb[0].mxu0 %v447
  %v646 = vpop.f32.mrb[0].mxu0
  %v647 = vadd.f32 0.0, %v646
  %v648 = vpop.f32.mrb[0].mxu0
  %v649 = vpop.f32.mrb[0].mxu0
  %v650 = vadd.f32 0.0, %v649
  %v651 = vpop.f32.mrb[0].mxu0
  %652 = vmatprep.mubr.bf16.mxu0 0
  %653 = vmatmul.mubr.bf16.gmra.mrb[0].mxu0 %v450
  %v654 = vpop.f32.mrb[0].mxu0
  %v655 = vadd.f32 0.0, %v654
  %v656 = vpop.f32.mrb[0].mxu0
  %v657 = vpop.f32.mrb[0].mxu0
  %v658 = vadd.f32 0.0, %v657
  %v659 = vpop.f32.mrb[0].mxu0
  %660 = vmatprep.mubr.bf16.mxu0 0
  %661 = vmatmul.mubr.bf16.gmra.mrb[0].mxu0 %v453
  %v662 = vpop.f32.mrb[0].mxu0
  %v663 = vadd.f32 0.0, %v662
  %v664 = vpop.f32.mrb[0].mxu0
  %v665 = vpop.f32.mrb[0].mxu0
  %v666 = vadd.f32 0.0, %v665
  %v667 = vpop.f32.mrb[0].mxu0
  %668 = vmatprep.mubr.bf16.mxu0 0
  %669 = vmatmul.mubr.bf16.gmra.mrb[0].mxu0 %v456
  %v670 = vpop.f32.mrb[0].mxu0
  %v671 = vadd.f32 0.0, %v670
  %v672 = vpop.f32.mrb[0].mxu0
  %v673 = vpop.f32.mrb[0].mxu0
  %v674 = vadd.f32 0.0, %v673
  %v675 = vpop.f32.mrb[0].mxu0
  %676 = vmatprep.mubr.bf16.mxu0 0
  %677 = vmatmul.mubr.bf16.gmra.mrb[0].mxu0 %v459
  %v678 = vpop.f32.mrb[0].mxu0
  %v679 = vadd.f32 0.0, %v678
  %v680 = vpop.f32.mrb[0].mxu0
  %v681 = vpop.f32.mrb[0].mxu0
  %v682 = vadd.f32 0.0, %v681
  %v683 = vpop.f32.mrb[0].mxu0
  %684 = vmatprep.mubr.bf16.mxu0 0
  %685 = vmatmul.mubr.bf16.gmra.mrb[0].mxu0 %v462
  %v686 = vpop.f32.mrb[0].mxu0
  %v687 = vadd.f32 0.0, %v686
  %v688 = vpop.f32.mrb[0].mxu0
  %v689 = vpop.f32.mrb[0].mxu0
  %v690 = vadd.f32 0.0, %v689
  %v691 = vpop.f32.mrb[0].mxu0
  %692 = vmatprep.mubr.bf16.mxu0 0
  %693 = vmatmul.mubr.bf16.gmra.mrb[0].mxu0 %v465
  %v694 = vpop.f32.mrb[0].mxu0
  %v695 = vadd.f32 0.0, %v694
  %v696 = vpop.f32.mrb[0].mxu0
  %v697 = vpop.f32.mrb[0].mxu0
  %v698 = vadd.f32 0.0, %v697
  %v699 = vpop.f32.mrb[0].mxu0
  %700 = vmatprep.mubr.bf16.mxu0 0
  %701 = vmatmul.mubr.bf16.gmra.mrb[0].mxu0 %v468
  %v702 = vpop.f32.mrb[0].mxu0
  %v703 = vadd.f32 0.0, %v702
  %v704 = vpop.f32.mrb[0].mxu0
  %v705 = vpop.f32.mrb[0].mxu0
  %v706 = vadd.f32 0.0, %v705
  %v707 = vpop.f32.mrb[0].mxu0
  %708 = vmatprep.mubr.bf16.mxu0 0
  %709 = vmatmul.mubr.bf16.gmra.mrb[0].mxu0 %v471
  %v710 = vpop.f32.mrb[0].mxu0
  %v711 = vadd.f32 0.0, %v710
  %v712 = vpop.f32.mrb[0].mxu0
  %v713 = vpop.f32.mrb[0].mxu0
  %v714 = vadd.f32 0.0, %v713
  %v715 = vpop.f32.mrb[0].mxu0
  %716 = vmatprep.mubr.bf16.mxu0 0
  %717 = vmatmul.mubr.bf16.gmra.mrb[0].mxu0 %v474
  %v718 = vpop.f32.mrb[0].mxu0
  %v719 = vadd.f32 0.0, %v718
  %v720 = vpop.f32.mrb[0].mxu0
  %v721 = vpop.f32.mrb[0].mxu0
  %v722 = vadd.f32 0.0, %v721
  %v723 = vpop.f32.mrb[0].mxu0
  %724 = vmatprep.mubr.bf16.mxu0 0
  %725 = vmatmul.mubr.bf16.gmra.mrb[0].mxu0 %v477
  %v726 = vpop.f32.mrb[0].mxu0
  %v727 = vadd.f32 0.0, %v726
  %v728 = vpop.f32.mrb[0].mxu0
  %v729 = vpop.f32.mrb[0].mxu0
  %v730 = vadd.f32 0.0, %v729
  %v731 = vpop.f32.mrb[0].mxu0
  %732 = vmatprep.mubr.bf16.mxu0 0
  %733 = vmatmul.mubr.bf16.gmra.mrb[0].mxu0 %v480
  %v734 = vpop.f32.mrb[0].mxu0
  %v735 = vadd.f32 0.0, %v734
  %v736 = vpop.f32.mrb[0].mxu0
  %v737 = vpop.f32.mrb[0].mxu0
  %v738 = vadd.f32 0.0, %v737
  %v739 = vpop.f32.mrb[0].mxu0
  %740 = vmatprep.mubr.bf16.mxu0 0
  %741 = vmatmul.mubr.bf16.gmra.mrb[0].mxu0 %v483
  %v742 = vpop.f32.mrb[0].mxu0
  %v743 = vadd.f32 0.0, %v742
  %v744 = vpop.f32.mrb[0].mxu0
  %v745 = vpop.f32.mrb[0].mxu0
  %v746 = vadd.f32 0.0, %v745
  %v747 = vpop.f32.mrb[0].mxu0
  %748 = vmatprep.mubr.bf16.mxu0 0
  %749 = vmatmul.mubr.bf16.gmra.mrb[0].mxu0 %v486
  %v750 = vpop.f32.mrb[0].mxu0
  %v751 = vadd.f32 0.0, %v750
  %v752 = vpop.f32.mrb[0].mxu0
  %v753 = vpop.f32.mrb[0].mxu0
  %v754 = vadd.f32 0.0, %v753
  %v755 = vpop.f32.mrb[0].mxu0
  %756 = vmatprep.mubr.bf16.mxu0 0
  %757 = vmatmul.mubr.bf16.gmra.mrb[0].mxu0 %v489
  %v758 = vpop.f32.mrb[0].mxu0
  %v759 = vadd.f32 0.0, %v758
  %v760 = vpop.f32.mrb[0].mxu0
  %v761 = vpop.f32.mrb[0].mxu0
  %v762 = vadd.f32 0.0, %v761
  %v763 = vpop.f32.mrb[0].mxu0
  %764 = vmatprep.mubr.bf16.mxu0 0
  %765 = vmatmul.mubr.bf16.gmra.mrb[0].mxu0 %v492
  %v766 = vpop.f32.mrb[0].mxu0
  %v767 = vadd.f32 0.0, %v766
  %v768 = vpop.f32.mrb[0].mxu0
  %v769 = vpop.f32.mrb[0].mxu0
  %v770 = vadd.f32 0.0, %v769
  %v771 = vpop.f32.mrb[0].mxu0
  %772 = vmatprep.mubr.bf16.mxu0 0
  %773 = vmatmul.mubr.bf16.gmra.mrb[0].mxu0 %v495
  %v774 = vpop.f32.mrb[0].mxu0
  %v775 = vadd.f32 0.0, %v774
  %v776 = vpop.f32.mrb[0].mxu0
  %v777 = vpop.f32.mrb[0].mxu0
  %v778 = vadd.f32 0.0, %v777
  %v779 = vpop.f32.mrb[0].mxu0
  %780 = vmatprep.mubr.bf16.mxu0 0
  %781 = vmatmul.mubr.bf16.gmra.mrb[0].mxu0 %v498
  %v782 = vpop.f32.mrb[0].mxu0
  %v783 = vadd.f32 0.0, %v782
  %v784 = vpop.f32.mrb[0].mxu0
  %v785 = vpop.f32.mrb[0].mxu0
  %v786 = vadd.f32 0.0, %v785
  %v787 = vpop.f32.mrb[0].mxu0
  %788 = vdwg.mxu0
  %v789 = vadd.f32 %v83, %v535
  %v790 = vadd.f32 %v84, %v538
  %v791 = vadd.f32 %v85, %v543
  %v792 = vadd.f32 %v86, %v546
  %v793 = vadd.f32 %v87, %v551
  %v794 = vadd.f32 %v88, %v554
  %v795 = vadd.f32 %v89, %v559
  %v796 = vadd.f32 %v90, %v562
  %v797 = vadd.f32 %v91, %v567
  %v798 = vadd.f32 %v92, %v570
  %v799 = vadd.f32 %v93, %v575
  %v800 = vadd.f32 %v94, %v578
  %v801 = vadd.f32 %v95, %v583
  %v802 = vadd.f32 %v96, %v586
  %v803 = vadd.f32 %v97, %v591
  %v804 = vadd.f32 %v98, %v594
  %v805 = vadd.f32 %v99, %v599
  %v806 = vadd.f32 %v100, %v602
  %v807 = vadd.f32 %v101, %v607
  %v808 = vadd.f32 %v102, %v610
  %v809 = vadd.f32 %v103, %v615
  %v810 = vadd.f32 %v104, %v618
  %v811 = vadd.f32 %v105, %v623
  %v812 = vadd.f32 %v106, %v626
  %v813 = vadd.f32 %v107, %v631
  %v814 = vadd.f32 %v108, %v634
  %v815 = vadd.f32 %v109, %v639
  %v816 = vadd.f32 %v110, %v642
  %v817 = vadd.f32 %v111, %v647
  %v818 = vadd.f32 %v112, %v650
  %v819 = vadd.f32 %v113, %v655
  %v820 = vadd.f32 %v114, %v658
  %v821 = vadd.f32 %v115, %v663
  %v822 = vadd.f32 %v116, %v666
  %v823 = vadd.f32 %v117, %v671
  %v824 = vadd.f32 %v118, %v674
  %v825 = vadd.f32 %v119, %v679
  %v826 = vadd.f32 %v120, %v682
  %v827 = vadd.f32 %v121, %v687
  %v828 = vadd.f32 %v122, %v690
  %v829 = vadd.f32 %v123, %v695
  %v830 = vadd.f32 %v124, %v698
  %v831 = vadd.f32 %v125, %v703
  %v832 = vadd.f32 %v126, %v706
  %v833 = vadd.f32 %v127, %v711
  %v834 = vadd.f32 %v128, %v714
  %v835 = vadd.f32 %v129, %v719
  %v836 = vadd.f32 %v130, %v722
  %v837 = vadd.f32 %v131, %v727
  %v838 = vadd.f32 %v132, %v730
  %v839 = vadd.f32 %v133, %v735
  %v840 = vadd.f32 %v134, %v738
  %v841 = vadd.f32 %v135, %v743
  %v842 = vadd.f32 %v136, %v746
  %v843 = vadd.f32 %v137, %v751
  %v844 = vadd.f32 %v138, %v754
  %v845 = vadd.f32 %v139, %v759
  %v846 = vadd.f32 %v140, %v762
  %v847 = vadd.f32 %v141, %v767
  %v848 = vadd.f32 %v142, %v770
  %v849 = vadd.f32 %v143, %v775
  %v850 = vadd.f32 %v144, %v778
  %v851 = vadd.f32 %v145, %v783
  %v852 = vadd.f32 %v146, %v786
  %853 = vst [vmem:[#allocation2] sm:$0xff] %v789
  %854 = vst [vmem:[#allocation2 + $0x8] sm:$0xff] %v790
  %855 = vst [vmem:[#allocation2 + $0x10] sm:$0xff] %v791
  %856 = vst [vmem:[#allocation2 + $0x18] sm:$0xff] %v792
  %857 = vst [vmem:[#allocation2 + $0x20] sm:$0xff] %v793
  %858 = vst [vmem:[#allocation2 + $0x28] sm:$0xff] %v794
  %859 = vst [vmem:[#allocation2 + $0x30] sm:$0xff] %v795
  %860 = vst [vmem:[#allocation2 + $0x38] sm:$0xff] %v796
  %861 = vst [vmem:[#allocation2 + $0x40] sm:$0xff] %v797
  %862 = vst [vmem:[#allocation2 + $0x48] sm:$0xff] %v798
  %863 = vst [vmem:[#allocation2 + $0x50] sm:$0xff] %v799
  %864 = vst [vmem:[#allocation2 + $0x58] sm:$0xff] %v800
  %865 = vst [vmem:[#allocation2 + $0x60] sm:$0xff] %v801
  %866 = vst [vmem:[#allocation2 + $0x68] sm:$0xff] %v802
  %867 = vst [vmem:[#allocation2 + $0x70] sm:$0xff] %v803
  %868 = vst [vmem:[#allocation2 + $0x78] sm:$0xff] %v804
  %869 = vst [vmem:[#allocation2 + $0x80] sm:$0xff] %v805
  %870 = vst [vmem:[#allocation2 + $0x88] sm:$0xff] %v806
  %871 = vst [vmem:[#allocation2 + $0x90] sm:$0xff] %v807
  %872 = vst [vmem:[#allocation2 + $0x98] sm:$0xff] %v808
  %873 = vst [vmem:[#allocation2 + $0xa0] sm:$0xff] %v809
  %874 = vst [vmem:[#allocation2 + $0xa8] sm:$0xff] %v810
  %875 = vst [vmem:[#allocation2 + $0xb0] sm:$0xff] %v811
  %876 = vst [vmem:[#allocation2 + $0xb8] sm:$0xff] %v812
  %877 = vst [vmem:[#allocation2 + $0xc0] sm:$0xff] %v813
  %878 = vst [vmem:[#allocation2 + $0xc8] sm:$0xff] %v814
  %879 = vst [vmem:[#allocation2 + $0xd0] sm:$0xff] %v815
  %880 = vst [vmem:[#allocation2 + $0xd8] sm:$0xff] %v816
  %881 = vst [vmem:[#allocation2 + $0xe0] sm:$0xff] %v817
  %882 = vst [vmem:[#allocation2 + $0xe8] sm:$0xff] %v818
  %883 = vst [vmem:[#allocation2 + $0xf0] sm:$0xff] %v819
  %884 = vst [vmem:[#allocation2 + $0xf8] sm:$0xff] %v820
  %885 = vst [vmem:[#allocation2 + $0x100] sm:$0xff] %v821
  %886 = vst [vmem:[#allocation2 + $0x108] sm:$0xff] %v822
  %887 = vst [vmem:[#allocation2 + $0x110] sm:$0xff] %v823
  %888 = vst [vmem:[#allocation2 + $0x118] sm:$0xff] %v824
  %889 = vst [vmem:[#allocation2 + $0x120] sm:$0xff] %v825
  %890 = vst [vmem:[#allocation2 + $0x128] sm:$0xff] %v826
  %891 = vst [vmem:[#allocation2 + $0x130] sm:$0xff] %v827
  %892 = vst [vmem:[#allocation2 + $0x138] sm:$0xff] %v828
  %893 = vst [vmem:[#allocation2 + $0x140] sm:$0xff] %v829
  %894 = vst [vmem:[#allocation2 + $0x148] sm:$0xff] %v830
  %895 = vst [vmem:[#allocation2 + $0x150] sm:$0xff] %v831
  %896 = vst [vmem:[#allocation2 + $0x158] sm:$0xff] %v832
  %897 = vst [vmem:[#allocation2 + $0x160] sm:$0xff] %v833
  %898 = vst [vmem:[#allocation2 + $0x168] sm:$0xff] %v834
  %899 = vst [vmem:[#allocation2 + $0x170] sm:$0xff] %v835
  %900 = vst [vmem:[#allocation2 + $0x178] sm:$0xff] %v836
  %901 = vst [vmem:[#allocation2 + $0x180] sm:$0xff] %v837
  %902 = vst [vmem:[#allocation2 + $0x188] sm:$0xff] %v838
  %903 = vst [vmem:[#allocation2 + $0x190] sm:$0xff] %v839
  %904 = vst [vmem:[#allocation2 + $0x198] sm:$0xff] %v840
  %905 = vst [vmem:[#allocation2 + $0x1a0] sm:$0xff] %v841
  %906 = vst [vmem:[#allocation2 + $0x1a8] sm:$0xff] %v842
  %907 = vst [vmem:[#allocation2 + $0x1b0] sm:$0xff] %v843
  %908 = vst [vmem:[#allocation2 + $0x1b8] sm:$0xff] %v844
  %909 = vst [vmem:[#allocation2 + $0x1c0] sm:$0xff] %v845
  %910 = vst [vmem:[#allocation2 + $0x1c8] sm:$0xff] %v846
  %911 = vst [vmem:[#allocation2 + $0x1d0] sm:$0xff] %v847
  %912 = vst [vmem:[#allocation2 + $0x1d8] sm:$0xff] %v848
  %913 = vst [vmem:[#allocation2 + $0x1e0] sm:$0xff] %v849
  %914 = vst [vmem:[#allocation2 + $0x1e8] sm:$0xff] %v850
  %915 = vst [vmem:[#allocation2 + $0x1f0] sm:$0xff] %v851
  %916 = vst [vmem:[#allocation2 + $0x1f8] sm:$0xff] %v852
  // Predicated region
  $region18: #{_lambda_.8} parent=0 // pred_check
    %p917 = pneg %p15
  $region19: #{_lambda_.8} parent=0 // pred_check_branch
    %919 = sbr.rel (%p917) target = $region21
  $region20: #{_lambda_.8} parent=0 // pred_region
    %v920 = vld [vmem:[#allocation2] sm:$0xff]
    %v921 = vld [vmem:[#allocation2 + $0x8] sm:$0xff]
    %v922 = vld [vmem:[#allocation2 + $0x10] sm:$0xff]
    %v923 = vld [vmem:[#allocation2 + $0x18] sm:$0xff]
    %v924 = vld [vmem:[#allocation2 + $0x20] sm:$0xff]
    %v925 = vld [vmem:[#allocation2 + $0x28] sm:$0xff]
    %v926 = vld [vmem:[#allocation2 + $0x30] sm:$0xff]
    %v927 = vld [vmem:[#allocation2 + $0x38] sm:$0xff]
    %v928 = vld [vmem:[#allocation2 + $0x40] sm:$0xff]
    %v929 = vld [vmem:[#allocation2 + $0x48] sm:$0xff]
    %v930 = vld [vmem:[#allocation2 + $0x50] sm:$0xff]
    %v931 = vld [vmem:[#allocation2 + $0x58] sm:$0xff]
    %v932 = vld [vmem:[#allocation2 + $0x60] sm:$0xff]
    %v933 = vld [vmem:[#allocation2 + $0x68] sm:$0xff]
    %v934 = vld [vmem:[#allocation2 + $0x70] sm:$0xff]
    %v935 = vld [vmem:[#allocation2 + $0x78] sm:$0xff]
    %v936 = vld [vmem:[#allocation2 + $0x80] sm:$0xff]
    %v937 = vld [vmem:[#allocation2 + $0x88] sm:$0xff]
    %v938 = vld [vmem:[#allocation2 + $0x90] sm:$0xff]
    %v939 = vld [vmem:[#allocation2 + $0x98] sm:$0xff]
    %v940 = vld [vmem:[#allocation2 + $0xa0] sm:$0xff]
    %v941 = vld [vmem:[#allocation2 + $0xa8] sm:$0xff]
    %v942 = vld [vmem:[#allocation2 + $0xb0] sm:$0xff]
    %v943 = vld [vmem:[#allocation2 + $0xb8] sm:$0xff]
    %v944 = vld [vmem:[#allocation2 + $0xc0] sm:$0xff]
    %v945 = vld [vmem:[#allocation2 + $0xc8] sm:$0xff]
    %v946 = vld [vmem:[#allocation2 + $0xd0] sm:$0xff]
    %v947 = vld [vmem:[#allocation2 + $0xd8] sm:$0xff]
    %v948 = vld [vmem:[#allocation2 + $0xe0] sm:$0xff]
    %v949 = vld [vmem:[#allocation2 + $0xe8] sm:$0xff]
    %v950 = vld [vmem:[#allocation2 + $0xf0] sm:$0xff]
    %v951 = vld [vmem:[#allocation2 + $0xf8] sm:$0xff]
    %v952 = vld [vmem:[#allocation2 + $0x100] sm:$0xff]
    %v953 = vld [vmem:[#allocation2 + $0x108] sm:$0xff]
    %v954 = vld [vmem:[#allocation2 + $0x110] sm:$0xff]
    %v955 = vld [vmem:[#allocation2 + $0x118] sm:$0xff]
    %v956 = vld [vmem:[#allocation2 + $0x120] sm:$0xff]
    %v957 = vld [vmem:[#allocation2 + $0x128] sm:$0xff]
    %v958 = vld [vmem:[#allocation2 + $0x130] sm:$0xff]
    %v959 = vld [vmem:[#allocation2 + $0x138] sm:$0xff]
    %v960 = vld [vmem:[#allocation2 + $0x140] sm:$0xff]
    %v961 = vld [vmem:[#allocation2 + $0x148] sm:$0xff]
    %v962 = vld [vmem:[#allocation2 + $0x150] sm:$0xff]
    %v963 = vld [vmem:[#allocation2 + $0x158] sm:$0xff]
    %v964 = vld [vmem:[#allocation2 + $0x160] sm:$0xff]
    %v965 = vld [vmem:[#allocation2 + $0x168] sm:$0xff]
    %v966 = vld [vmem:[#allocation2 + $0x170] sm:$0xff]
    %v967 = vld [vmem:[#allocation2 + $0x178] sm:$0xff]
    %v968 = vld [vmem:[#allocation2 + $0x180] sm:$0xff]
    %v969 = vld [vmem:[#allocation2 + $0x188] sm:$0xff]
    %v970 = vld [vmem:[#allocation2 + $0x190] sm:$0xff]
    %v971 = vld [vmem:[#allocation2 + $0x198] sm:$0xff]
    %v972 = vld [vmem:[#allocation2 + $0x1a0] sm:$0xff]
    %v973 = vld [vmem:[#allocation2 + $0x1a8] sm:$0xff]
    %v974 = vld [vmem:[#allocation2 + $0x1b0] sm:$0xff]
    %v975 = vld [vmem:[#allocation2 + $0x1b8] sm:$0xff]
    %v976 = vld [vmem:[#allocation2 + $0x1c0] sm:$0xff]
    %v977 = vld [vmem:[#allocation2 + $0x1c8] sm:$0xff]
    %v978 = vld [vmem:[#allocation2 + $0x1d0] sm:$0xff]
    %v979 = vld [vmem:[#allocation2 + $0x1d8] sm:$0xff]
    %v980 = vld [vmem:[#allocation2 + $0x1e0] sm:$0xff]
    %v981 = vld [vmem:[#allocation2 + $0x1e8] sm:$0xff]
    %v982 = vld [vmem:[#allocation2 + $0x1f0] sm:$0xff]
    %v983 = vld [vmem:[#allocation2 + $0x1f8] sm:$0xff]
    %v984 = vld [vmem:[%s2] sm:$0x1]
    %v986 = vlaneseq
    %v987 = vshrl.u32 %v986, 7
    %v988 = vsub.s32 0, %v987
    %v989 = vrot.slane %v984, %v988
    %v991 = vadd.f32 %v920, %v989
    %v992 = vadd.f32 %v921, %v989
    %v993 = vadd.f32 %v922, %v989
    %v994 = vadd.f32 %v923, %v989
    %v995 = vadd.f32 %v924, %v989
    %v996 = vadd.f32 %v925, %v989
    %v997 = vadd.f32 %v926, %v989
    %v998 = vadd.f32 %v927, %v989
    %v999 = vadd.f32 %v928, %v989
    %v1000 = vadd.f32 %v929, %v989
    %v1001 = vadd.f32 %v930, %v989
    %v1002 = vadd.f32 %v931, %v989
    %v1003 = vadd.f32 %v932, %v989
    %v1004 = vadd.f32 %v933, %v989
    %v1005 = vadd.f32 %v934, %v989
    %v1006 = vadd.f32 %v935, %v989
    %v1007 = vadd.f32 %v936, %v989
    %v1008 = vadd.f32 %v937, %v989
    %v1009 = vadd.f32 %v938, %v989
    %v1010 = vadd.f32 %v939, %v989
    %v1011 = vadd.f32 %v940, %v989
    %v1012 = vadd.f32 %v941, %v989
    %v1013 = vadd.f32 %v942, %v989
    %v1014 = vadd.f32 %v943, %v989
    %v1015 = vadd.f32 %v944, %v989
    %v1016 = vadd.f32 %v945, %v989
    %v1017 = vadd.f32 %v946, %v989
    %v1018 = vadd.f32 %v947, %v989
    %v1019 = vadd.f32 %v948, %v989
    %v1020 = vadd.f32 %v949, %v989
    %v1021 = vadd.f32 %v950, %v989
    %v1022 = vadd.f32 %v951, %v989
    %v1023 = vadd.f32 %v952, %v989
    %v1024 = vadd.f32 %v953, %v989
    %v1025 = vadd.f32 %v954, %v989
    %v1026 = vadd.f32 %v955, %v989
    %v1027 = vadd.f32 %v956, %v989
    %v1028 = vadd.f32 %v957, %v989
    %v1029 = vadd.f32 %v958, %v989
    %v1030 = vadd.f32 %v959, %v989
    %v1031 = vadd.f32 %v960, %v989
    %v1032 = vadd.f32 %v961, %v989
    %v1033 = vadd.f32 %v962, %v989
    %v1034 = vadd.f32 %v963, %v989
    %v1035 = vadd.f32 %v964, %v989
    %v1036 = vadd.f32 %v965, %v989
    %v1037 = vadd.f32 %v966, %v989
    %v1038 = vadd.f32 %v967, %v989
    %v1039 = vadd.f32 %v968, %v989
    %v1040 = vadd.f32 %v969, %v989
    %v1041 = vadd.f32 %v970, %v989
    %v1042 = vadd.f32 %v971, %v989
    %v1043 = vadd.f32 %v972, %v989
    %v1044 = vadd.f32 %v973, %v989
    %v1045 = vadd.f32 %v974, %v989
    %v1046 = vadd.f32 %v975, %v989
    %v1047 = vadd.f32 %v976, %v989
    %v1048 = vadd.f32 %v977, %v989
    %v1049 = vadd.f32 %v978, %v989
    %v1050 = vadd.f32 %v979, %v989
    %v1051 = vadd.f32 %v980, %v989
    %v1052 = vadd.f32 %v981, %v989
    %v1053 = vadd.f32 %v982, %v989
    %v1054 = vadd.f32 %v983, %v989
    %vm1055 = vcmp.ge.f32.partialorder %v991, 0.0
    %vm1056 = vcmp.ge.f32.partialorder %v992, 0.0
    %vm1057 = vcmp.ge.f32.partialorder %v993, 0.0
    %vm1058 = vcmp.ge.f32.partialorder %v994, 0.0
    %vm1059 = vcmp.ge.f32.partialorder %v995, 0.0
    %vm1060 = vcmp.ge.f32.partialorder %v996, 0.0
    %vm1061 = vcmp.ge.f32.partialorder %v997, 0.0
    %vm1062 = vcmp.ge.f32.partialorder %v998, 0.0
    %vm1063 = vcmp.ge.f32.partialorder %v999, 0.0
    %vm1064 = vcmp.ge.f32.partialorder %v1000, 0.0
    %vm1065 = vcmp.ge.f32.partialorder %v1001, 0.0
    %vm1066 = vcmp.ge.f32.partialorder %v1002, 0.0
    %vm1067 = vcmp.ge.f32.partialorder %v1003, 0.0
    %vm1068 = vcmp.ge.f32.partialorder %v1004, 0.0
    %vm1069 = vcmp.ge.f32.partialorder %v1005, 0.0
    %vm1070 = vcmp.ge.f32.partialorder %v1006, 0.0
    %vm1071 = vcmp.ge.f32.partialorder %v1007, 0.0
    %vm1072 = vcmp.ge.f32.partialorder %v1008, 0.0
    %vm1073 = vcmp.ge.f32.partialorder %v1009, 0.0
    %vm1074 = vcmp.ge.f32.partialorder %v1010, 0.0
    %vm1075 = vcmp.ge.f32.partialorder %v1011, 0.0
    %vm1076 = vcmp.ge.f32.partialorder %v1012, 0.0
    %vm1077 = vcmp.ge.f32.partialorder %v1013, 0.0
    %vm1078 = vcmp.ge.f32.partialorder %v1014, 0.0
    %vm1079 = vcmp.ge.f32.partialorder %v1015, 0.0
    %vm1080 = vcmp.ge.f32.partialorder %v1016, 0.0
    %vm1081 = vcmp.ge.f32.partialorder %v1017, 0.0
    %vm1082 = vcmp.ge.f32.partialorder %v1018, 0.0
    %vm1083 = vcmp.ge.f32.partialorder %v1019, 0.0
    %vm1084 = vcmp.ge.f32.partialorder %v1020, 0.0
    %vm1085 = vcmp.ge.f32.partialorder %v1021, 0.0
    %vm1086 = vcmp.ge.f32.partialorder %v1022, 0.0
    %vm1087 = vcmp.ge.f32.partialorder %v1023, 0.0
    %vm1088 = vcmp.ge.f32.partialorder %v1024, 0.0
    %vm1089 = vcmp.ge.f32.partialorder %v1025, 0.0
    %vm1090 = vcmp.ge.f32.partialorder %v1026, 0.0
    %vm1091 = vcmp.ge.f32.partialorder %v1027, 0.0
    %vm1092 = vcmp.ge.f32.partialorder %v1028, 0.0
    %vm1093 = vcmp.ge.f32.partialorder %v1029, 0.0
    %vm1094 = vcmp.ge.f32.partialorder %v1030, 0.0
    %vm1095 = vcmp.ge.f32.partialorder %v1031, 0.0
    %vm1096 = vcmp.ge.f32.partialorder %v1032, 0.0
    %vm1097 = vcmp.ge.f32.partialorder %v1033, 0.0
    %vm1098 = vcmp.ge.f32.partialorder %v1034, 0.0
    %vm1099 = vcmp.ge.f32.partialorder %v1035, 0.0
    %vm1100 = vcmp.ge.f32.partialorder %v1036, 0.0
    %vm1101 = vcmp.ge.f32.partialorder %v1037, 0.0
    %vm1102 = vcmp.ge.f32.partialorder %v1038, 0.0
    %vm1103 = vcmp.ge.f32.partialorder %v1039, 0.0
    %vm1104 = vcmp.ge.f32.partialorder %v1040, 0.0
    %vm1105 = vcmp.ge.f32.partialorder %v1041, 0.0
    %vm1106 = vcmp.ge.f32.partialorder %v1042, 0.0
    %vm1107 = vcmp.ge.f32.partialorder %v1043, 0.0
    %vm1108 = vcmp.ge.f32.partialorder %v1044, 0.0
    %vm1109 = vcmp.ge.f32.partialorder %v1045, 0.0
    %vm1110 = vcmp.ge.f32.partialorder %v1046, 0.0
    %vm1111 = vcmp.ge.f32.partialorder %v1047, 0.0
    %vm1112 = vcmp.ge.f32.partialorder %v1048, 0.0
    %vm1113 = vcmp.ge.f32.partialorder %v1049, 0.0
    %vm1114 = vcmp.ge.f32.partialorder %v1050, 0.0
    %vm1115 = vcmp.ge.f32.partialorder %v1051, 0.0
    %vm1116 = vcmp.ge.f32.partialorder %v1052, 0.0
    %vm1117 = vcmp.ge.f32.partialorder %v1053, 0.0
    %vm1118 = vcmp.ge.f32.partialorder %v1054, 0.0
    %v1119 = vmul.f32 %v991, 0.2
    %v1120 = vmul.f32 %v992, 0.2
    %v1121 = vmul.f32 %v993, 0.2
    %v1122 = vmul.f32 %v994, 0.2
    %v1123 = vmul.f32 %v995, 0.2
    %v1124 = vmul.f32 %v996, 0.2
    %v1125 = vmul.f32 %v997, 0.2
    %v1126 = vmul.f32 %v998, 0.2
    %v1127 = vmul.f32 %v999, 0.2
    %v1128 = vmul.f32 %v1000, 0.2
    %v1129 = vmul.f32 %v1001, 0.2
    %v1130 = vmul.f32 %v1002, 0.2
    %v1131 = vmul.f32 %v1003, 0.2
    %v1132 = vmul.f32 %v1004, 0.2
    %v1133 = vmul.f32 %v1005, 0.2
    %v1134 = vmul.f32 %v1006, 0.2
    %v1135 = vmul.f32 %v1007, 0.2
    %v1136 = vmul.f32 %v1008, 0.2
    %v1137 = vmul.f32 %v1009, 0.2
    %v1138 = vmul.f32 %v1010, 0.2
    %v1139 = vmul.f32 %v1011, 0.2
    %v1140 = vmul.f32 %v1012, 0.2
    %v1141 = vmul.f32 %v1013, 0.2
    %v1142 = vmul.f32 %v1014, 0.2
    %v1143 = vmul.f32 %v1015, 0.2
    %v1144 = vmul.f32 %v1016, 0.2
    %v1145 = vmul.f32 %v1017, 0.2
    %v1146 = vmul.f32 %v1018, 0.2
    %v1147 = vmul.f32 %v1019, 0.2
    %v1148 = vmul.f32 %v1020, 0.2
    %v1149 = vmul.f32 %v1021, 0.2
    %v1150 = vmul.f32 %v1022, 0.2
    %v1151 = vmul.f32 %v1023, 0.2
    %v1152 = vmul.f32 %v1024, 0.2
    %v1153 = vmul.f32 %v1025, 0.2
    %v1154 = vmul.f32 %v1026, 0.2
    %v1155 = vmul.f32 %v1027, 0.2
    %v1156 = vmul.f32 %v1028, 0.2
    %v1157 = vmul.f32 %v1029, 0.2
    %v1158 = vmul.f32 %v1030, 0.2
    %v1159 = vmul.f32 %v1031, 0.2
    %v1160 = vmul.f32 %v1032, 0.2
    %v1161 = vmul.f32 %v1033, 0.2
    %v1162 = vmul.f32 %v1034, 0.2
    %v1163 = vmul.f32 %v1035, 0.2
    %v1164 = vmul.f32 %v1036, 0.2
    %v1165 = vmul.f32 %v1037, 0.2
    %v1166 = vmul.f32 %v1038, 0.2
    %v1167 = vmul.f32 %v1039, 0.2
    %v1168 = vmul.f32 %v1040, 0.2
    %v1169 = vmul.f32 %v1041, 0.2
    %v1170 = vmul.f32 %v1042, 0.2
    %v1171 = vmul.f32 %v1043, 0.2
    %v1172 = vmul.f32 %v1044, 0.2
    %v1173 = vmul.f32 %v1045, 0.2
    %v1174 = vmul.f32 %v1046, 0.2
    %v1175 = vmul.f32 %v1047, 0.2
    %v1176 = vmul.f32 %v1048, 0.2
    %v1177 = vmul.f32 %v1049, 0.2
    %v1178 = vmul.f32 %v1050, 0.2
    %v1179 = vmul.f32 %v1051, 0.2
    %v1180 = vmul.f32 %v1052, 0.2
    %v1181 = vmul.f32 %v1053, 0.2
    %v1182 = vmul.f32 %v1054, 0.2
    %v1183 = vsel %vm1055, %v991, %v1119
    %v1184 = vsel %vm1056, %v992, %v1120
    %v1185 = vsel %vm1057, %v993, %v1121
    %v1186 = vsel %vm1058, %v994, %v1122
    %v1187 = vsel %vm1059, %v995, %v1123
    %v1188 = vsel %vm1060, %v996, %v1124
    %v1189 = vsel %vm1061, %v997, %v1125
    %v1190 = vsel %vm1062, %v998, %v1126
    %v1191 = vsel %vm1063, %v999, %v1127
    %v1192 = vsel %vm1064, %v1000, %v1128
    %v1193 = vsel %vm1065, %v1001, %v1129
    %v1194 = vsel %vm1066, %v1002, %v1130
    %v1195 = vsel %vm1067, %v1003, %v1131
    %v1196 = vsel %vm1068, %v1004, %v1132
    %v1197 = vsel %vm1069, %v1005, %v1133
    %v1198 = vsel %vm1070, %v1006, %v1134
    %v1199 = vsel %vm1071, %v1007, %v1135
    %v1200 = vsel %vm1072, %v1008, %v1136
    %v1201 = vsel %vm1073, %v1009, %v1137
    %v1202 = vsel %vm1074, %v1010, %v1138
    %v1203 = vsel %vm1075, %v1011, %v1139
    %v1204 = vsel %vm1076, %v1012, %v1140
    %v1205 = vsel %vm1077, %v1013, %v1141
    %v1206 = vsel %vm1078, %v1014, %v1142
    %v1207 = vsel %vm1079, %v1015, %v1143
    %v1208 = vsel %vm1080, %v1016, %v1144
    %v1209 = vsel %vm1081, %v1017, %v1145
    %v1210 = vsel %vm1082, %v1018, %v1146
    %v1211 = vsel %vm1083, %v1019, %v1147
    %v1212 = vsel %vm1084, %v1020, %v1148
    %v1213 = vsel %vm1085, %v1021, %v1149
    %v1214 = vsel %vm1086, %v1022, %v1150
    %v1215 = vsel %vm1087, %v1023, %v1151
    %v1216 = vsel %vm1088, %v1024, %v1152
    %v1217 = vsel %vm1089, %v1025, %v1153
    %v1218 = vsel %vm1090, %v1026, %v1154
    %v1219 = vsel %vm1091, %v1027, %v1155
    %v1220 = vsel %vm1092, %v1028, %v1156
    %v1221 = vsel %vm1093, %v1029, %v1157
    %v1222 = vsel %vm1094, %v1030, %v1158
    %v1223 = vsel %vm1095, %v1031, %v1159
    %v1224 = vsel %vm1096, %v1032, %v1160
    %v1225 = vsel %vm1097, %v1033, %v1161
    %v1226 = vsel %vm1098, %v1034, %v1162
    %v1227 = vsel %vm1099, %v1035, %v1163
    %v1228 = vsel %vm1100, %v1036, %v1164
    %v1229 = vsel %vm1101, %v1037, %v1165
    %v1230 = vsel %vm1102, %v1038, %v1166
    %v1231 = vsel %vm1103, %v1039, %v1167
    %v1232 = vsel %vm1104, %v1040, %v1168
    %v1233 = vsel %vm1105, %v1041, %v1169
    %v1234 = vsel %vm1106, %v1042, %v1170
    %v1235 = vsel %vm1107, %v1043, %v1171
    %v1236 = vsel %vm1108, %v1044, %v1172
    %v1237 = vsel %vm1109, %v1045, %v1173
    %v1238 = vsel %vm1110, %v1046, %v1174
    %v1239 = vsel %vm1111, %v1047, %v1175
    %v1240 = vsel %vm1112, %v1048, %v1176
    %v1241 = vsel %vm1113, %v1049, %v1177
    %v1242 = vsel %vm1114, %v1050, %v1178
    %v1243 = vsel %vm1115, %v1051, %v1179
    %v1244 = vsel %vm1116, %v1052, %v1180
    %v1245 = vsel %vm1117, %v1053, %v1181
    %v1246 = vsel %vm1118, %v1054, %v1182
    %v1247 = vpack.c.bf16 %v1184, %v1183
    %v1248 = vpack.c.bf16 %v1186, %v1185
    %v1249 = vpack.c.bf16 %v1188, %v1187
    %v1250 = vpack.c.bf16 %v1190, %v1189
    %v1251 = vpack.c.bf16 %v1192, %v1191
    %v1252 = vpack.c.bf16 %v1194, %v1193
    %v1253 = vpack.c.bf16 %v1196, %v1195
    %v1254 = vpack.c.bf16 %v1198, %v1197
    %v1255 = vpack.c.bf16 %v1200, %v1199
    %v1256 = vpack.c.bf16 %v1202, %v1201
    %v1257 = vpack.c.bf16 %v1204, %v1203
    %v1258 = vpack.c.bf16 %v1206, %v1205
    %v1259 = vpack.c.bf16 %v1208, %v1207
    %v1260 = vpack.c.bf16 %v1210, %v1209
    %v1261 = vpack.c.bf16 %v1212, %v1211
    %v1262 = vpack.c.bf16 %v1214, %v1213
    %v1263 = vpack.c.bf16 %v1216, %v1215
    %v1264 = vpack.c.bf16 %v1218, %v1217
    %v1265 = vpack.c.bf16 %v1220, %v1219
    %v1266 = vpack.c.bf16 %v1222, %v1221
    %v1267 = vpack.c.bf16 %v1224, %v1223
    %v1268 = vpack.c.bf16 %v1226, %v1225
    %v1269 = vpack.c.bf16 %v1228, %v1227
    %v1270 = vpack.c.bf16 %v1230, %v1229
    %v1271 = vpack.c.bf16 %v1232, %v1231
    %v1272 = vpack.c.bf16 %v1234, %v1233
    %v1273 = vpack.c.bf16 %v1236, %v1235
    %v1274 = vpack.c.bf16 %v1238, %v1237
    %v1275 = vpack.c.bf16 %v1240, %v1239
    %v1276 = vpack.c.bf16 %v1242, %v1241
    %v1277 = vpack.c.bf16 %v1244, %v1243
    %v1278 = vpack.c.bf16 %v1246, %v1245
    %v1311 = vunpack.c.l.b16 %v1247
    %v1312 = vunpack.c.h.b16 %v1247
    %v1313 = vunpack.c.l.b16 %v1248
    %v1314 = vunpack.c.h.b16 %v1248
    %v1315 = vunpack.c.l.b16 %v1249
    %v1316 = vunpack.c.h.b16 %v1249
    %v1317 = vunpack.c.l.b16 %v1250
    %v1318 = vunpack.c.h.b16 %v1250
    %v1319 = vunpack.c.l.b16 %v1251
    %v1320 = vunpack.c.h.b16 %v1251
    %v1321 = vunpack.c.l.b16 %v1252
    %v1322 = vunpack.c.h.b16 %v1252
    %v1323 = vunpack.c.l.b16 %v1253
    %v1324 = vunpack.c.h.b16 %v1253
    %v1325 = vunpack.c.l.b16 %v1254
    %v1326 = vunpack.c.h.b16 %v1254
    %v1327 = vunpack.c.l.b16 %v1255
    %v1328 = vunpack.c.h.b16 %v1255
    %v1329 = vunpack.c.l.b16 %v1256
    %v1330 = vunpack.c.h.b16 %v1256
    %v1331 = vunpack.c.l.b16 %v1257
    %v1332 = vunpack.c.h.b16 %v1257
    %v1333 = vunpack.c.l.b16 %v1258
    %v1334 = vunpack.c.h.b16 %v1258
    %v1335 = vunpack.c.l.b16 %v1259
    %v1336 = vunpack.c.h.b16 %v1259
    %v1337 = vunpack.c.l.b16 %v1260
    %v1338 = vunpack.c.h.b16 %v1260
    %v1339 = vunpack.c.l.b16 %v1261
    %v1340 = vunpack.c.h.b16 %v1261
    %v1341 = vunpack.c.l.b16 %v1262
    %v1342 = vunpack.c.h.b16 %v1262
    %v1343 = vunpack.c.l.b16 %v1263
    %v1344 = vunpack.c.h.b16 %v1263
    %v1345 = vunpack.c.l.b16 %v1264
    %v1346 = vunpack.c.h.b16 %v1264
    %v1347 = vunpack.c.l.b16 %v1265
    %v1348 = vunpack.c.h.b16 %v1265
    %v1349 = vunpack.c.l.b16 %v1266
    %v1350 = vunpack.c.h.b16 %v1266
    %v1351 = vunpack.c.l.b16 %v1267
    %v1352 = vunpack.c.h.b16 %v1267
    %v1353 = vunpack.c.l.b16 %v1268
    %v1354 = vunpack.c.h.b16 %v1268
    %v1355 = vunpack.c.l.b16 %v1269
    %v1356 = vunpack.c.h.b16 %v1269
    %v1357 = vunpack.c.l.b16 %v1270
    %v1358 = vunpack.c.h.b16 %v1270
    %v1359 = vunpack.c.l.b16 %v1271
    %v1360 = vunpack.c.h.b16 %v1271
    %v1361 = vunpack.c.l.b16 %v1272
    %v1362 = vunpack.c.h.b16 %v1272
    %v1363 = vunpack.c.l.b16 %v1273
    %v1364 = vunpack.c.h.b16 %v1273
    %v1365 = vunpack.c.l.b16 %v1274
    %v1366 = vunpack.c.h.b16 %v1274
    %v1367 = vunpack.c.l.b16 %v1275
    %v1368 = vunpack.c.h.b16 %v1275
    %v1369 = vunpack.c.l.b16 %v1276
    %v1370 = vunpack.c.h.b16 %v1276
    %v1371 = vunpack.c.l.b16 %v1277
    %v1372 = vunpack.c.h.b16 %v1277
    %v1373 = vunpack.c.l.b16 %v1278
    %v1374 = vunpack.c.h.b16 %v1278
    %v1375 = vpack.c.b16 %v1311, %v1311
    %v1376 = vpack.c.b16 %v1312, %v1312
    %v1377 = vpack.c.b16 %v1313, %v1313
    %v1378 = vpack.c.b16 %v1314, %v1314
    %v1379 = vpack.c.b16 %v1315, %v1315
    %v1380 = vpack.c.b16 %v1316, %v1316
    %v1381 = vpack.c.b16 %v1317, %v1317
    %v1382 = vpack.c.b16 %v1318, %v1318
    %v1383 = vpack.c.b16 %v1319, %v1319
    %v1384 = vpack.c.b16 %v1320, %v1320
    %v1385 = vpack.c.b16 %v1321, %v1321
    %v1386 = vpack.c.b16 %v1322, %v1322
    %v1387 = vpack.c.b16 %v1323, %v1323
    %v1388 = vpack.c.b16 %v1324, %v1324
    %v1389 = vpack.c.b16 %v1325, %v1325
    %v1390 = vpack.c.b16 %v1326, %v1326
    %v1391 = vpack.c.b16 %v1327, %v1327
    %v1392 = vpack.c.b16 %v1328, %v1328
    %v1393 = vpack.c.b16 %v1329, %v1329
    %v1394 = vpack.c.b16 %v1330, %v1330
    %v1395 = vpack.c.b16 %v1331, %v1331
    %v1396 = vpack.c.b16 %v1332, %v1332
    %v1397 = vpack.c.b16 %v1333, %v1333
    %v1398 = vpack.c.b16 %v1334, %v1334
    %v1399 = vpack.c.b16 %v1335, %v1335
    %v1400 = vpack.c.b16 %v1336, %v1336
    %v1401 = vpack.c.b16 %v1337, %v1337
    %v1402 = vpack.c.b16 %v1338, %v1338
    %v1403 = vpack.c.b16 %v1339, %v1339
    %v1404 = vpack.c.b16 %v1340, %v1340
    %v1405 = vpack.c.b16 %v1341, %v1341
    %v1406 = vpack.c.b16 %v1342, %v1342
    %v1407 = vpack.c.b16 %v1343, %v1343
    %v1408 = vpack.c.b16 %v1344, %v1344
    %v1409 = vpack.c.b16 %v1345, %v1345
    %v1410 = vpack.c.b16 %v1346, %v1346
    %v1411 = vpack.c.b16 %v1347, %v1347
    %v1412 = vpack.c.b16 %v1348, %v1348
    %v1413 = vpack.c.b16 %v1349, %v1349
    %v1414 = vpack.c.b16 %v1350, %v1350
    %v1415 = vpack.c.b16 %v1351, %v1351
    %v1416 = vpack.c.b16 %v1352, %v1352
    %v1417 = vpack.c.b16 %v1353, %v1353
    %v1418 = vpack.c.b16 %v1354, %v1354
    %v1419 = vpack.c.b16 %v1355, %v1355
    %v1420 = vpack.c.b16 %v1356, %v1356
    %v1421 = vpack.c.b16 %v1357, %v1357
    %v1422 = vpack.c.b16 %v1358, %v1358
    %v1423 = vpack.c.b16 %v1359, %v1359
    %v1424 = vpack.c.b16 %v1360, %v1360
    %v1425 = vpack.c.b16 %v1361, %v1361
    %v1426 = vpack.c.b16 %v1362, %v1362
    %v1427 = vpack.c.b16 %v1363, %v1363
    %v1428 = vpack.c.b16 %v1364, %v1364
    %v1429 = vpack.c.b16 %v1365, %v1365
    %v1430 = vpack.c.b16 %v1366, %v1366
    %v1431 = vpack.c.b16 %v1367, %v1367
    %v1432 = vpack.c.b16 %v1368, %v1368
    %v1433 = vpack.c.b16 %v1369, %v1369
    %v1434 = vpack.c.b16 %v1370, %v1370
    %v1435 = vpack.c.b16 %v1371, %v1371
    %v1436 = vpack.c.b16 %v1372, %v1372
    %v1437 = vpack.c.b16 %v1373, %v1373
    %v1438 = vpack.c.b16 %v1374, %v1374
    %1503 = vst [vmem:[%s3] sm:$0xf] %v1375
    %1504 = vst [vmem:[%s3 + $0x4] sm:$0xf] %v1376
    %1505 = vst [vmem:[%s3 + $0x8] sm:$0xf] %v1377
    %1506 = vst [vmem:[%s3 + $0xc] sm:$0xf] %v1378
    %1507 = vst [vmem:[%s3 + $0x10] sm:$0xf] %v1379
    %1508 = vst [vmem:[%s3 + $0x14] sm:$0xf] %v1380
    %1509 = vst [vmem:[%s3 + $0x18] sm:$0xf] %v1381
    %1510 = vst [vmem:[%s3 + $0x1c] sm:$0xf] %v1382
    %1511 = vst [vmem:[%s3 + $0x20] sm:$0xf] %v1383
    %1512 = vst [vmem:[%s3 + $0x24] sm:$0xf] %v1384
    %1513 = vst [vmem:[%s3 + $0x28] sm:$0xf] %v1385
    %1514 = vst [vmem:[%s3 + $0x2c] sm:$0xf] %v1386
    %1515 = vst [vmem:[%s3 + $0x30] sm:$0xf] %v1387
    %1516 = vst [vmem:[%s3 + $0x34] sm:$0xf] %v1388
    %1517 = vst [vmem:[%s3 + $0x38] sm:$0xf] %v1389
    %1518 = vst [vmem:[%s3 + $0x3c] sm:$0xf] %v1390
    %1519 = vst [vmem:[%s3 + $0x40] sm:$0xf] %v1391
    %1520 = vst [vmem:[%s3 + $0x44] sm:$0xf] %v1392
    %1521 = vst [vmem:[%s3 + $0x48] sm:$0xf] %v1393
    %1522 = vst [vmem:[%s3 + $0x4c] sm:$0xf] %v1394
    %1523 = vst [vmem:[%s3 + $0x50] sm:$0xf] %v1395
    %1524 = vst [vmem:[%s3 + $0x54] sm:$0xf] %v1396
    %1525 = vst [vmem:[%s3 + $0x58] sm:$0xf] %v1397
    %1526 = vst [vmem:[%s3 + $0x5c] sm:$0xf] %v1398
    %1527 = vst [vmem:[%s3 + $0x60] sm:$0xf] %v1399
    %1528 = vst [vmem:[%s3 + $0x64] sm:$0xf] %v1400
    %1529 = vst [vmem:[%s3 + $0x68] sm:$0xf] %v1401
    %1530 = vst [vmem:[%s3 + $0x6c] sm:$0xf] %v1402
    %1531 = vst [vmem:[%s3 + $0x70] sm:$0xf] %v1403
    %1532 = vst [vmem:[%s3 + $0x74] sm:$0xf] %v1404
    %1533 = vst [vmem:[%s3 + $0x78] sm:$0xf] %v1405
    %1534 = vst [vmem:[%s3 + $0x7c] sm:$0xf] %v1406
    %1535 = vst [vmem:[%s3 + $0x80] sm:$0xf] %v1407
    %1536 = vst [vmem:[%s3 + $0x84] sm:$0xf] %v1408
    %1537 = vst [vmem:[%s3 + $0x88] sm:$0xf] %v1409
    %1538 = vst [vmem:[%s3 + $0x8c] sm:$0xf] %v1410
    %1539 = vst [vmem:[%s3 + $0x90] sm:$0xf] %v1411
    %1540 = vst [vmem:[%s3 + $0x94] sm:$0xf] %v1412
    %1541 = vst [vmem:[%s3 + $0x98] sm:$0xf] %v1413
    %1542 = vst [vmem:[%s3 + $0x9c] sm:$0xf] %v1414
    %1543 = vst [vmem:[%s3 + $0xa0] sm:$0xf] %v1415
    %1544 = vst [vmem:[%s3 + $0xa4] sm:$0xf] %v1416
    %1545 = vst [vmem:[%s3 + $0xa8] sm:$0xf] %v1417
    %1546 = vst [vmem:[%s3 + $0xac] sm:$0xf] %v1418
    %1547 = vst [vmem:[%s3 + $0xb0] sm:$0xf] %v1419
    %1548 = vst [vmem:[%s3 + $0xb4] sm:$0xf] %v1420
    %1549 = vst [vmem:[%s3 + $0xb8] sm:$0xf] %v1421
    %1550 = vst [vmem:[%s3 + $0xbc] sm:$0xf] %v1422
    %1551 = vst [vmem:[%s3 + $0xc0] sm:$0xf] %v1423
    %1552 = vst [vmem:[%s3 + $0xc4] sm:$0xf] %v1424
    %1553 = vst [vmem:[%s3 + $0xc8] sm:$0xf] %v1425
    %1554 = vst [vmem:[%s3 + $0xcc] sm:$0xf] %v1426
    %1555 = vst [vmem:[%s3 + $0xd0] sm:$0xf] %v1427
    %1556 = vst [vmem:[%s3 + $0xd4] sm:$0xf] %v1428
    %1557 = vst [vmem:[%s3 + $0xd8] sm:$0xf] %v1429
    %1558 = vst [vmem:[%s3 + $0xdc] sm:$0xf] %v1430
    %1559 = vst [vmem:[%s3 + $0xe0] sm:$0xf] %v1431
    %1560 = vst [vmem:[%s3 + $0xe4] sm:$0xf] %v1432
    %1561 = vst [vmem:[%s3 + $0xe8] sm:$0xf] %v1433
    %1562 = vst [vmem:[%s3 + $0xec] sm:$0xf] %v1434
    %1563 = vst [vmem:[%s3 + $0xf0] sm:$0xf] %v1435
    %1564 = vst [vmem:[%s3 + $0xf4] sm:$0xf] %v1436
    %1565 = vst [vmem:[%s3 + $0xf8] sm:$0xf] %v1437
    %1566 = vst [vmem:[%s3 + $0xfc] sm:$0xf] %v1438
  $region21: #{_lambda_.8} parent=0 // pred_fallthru
    _
  // Predicated region
  $region22: #{_lambda_.8} parent=0 // pred_check
    _
  $region23: #{_lambda_.8} parent=0 // pred_check_branch
    %1568 = sbr.rel (0) target = $region25
  $region24: #{_lambda_.8} parent=0 // pred_region
    _
  $region25: #{_lambda_.8} parent=0 // pred_fallthru
    _
  // Predicated region
  $region26: #{_lambda_.8} parent=0 // pred_check
    _
  $region27: #{_lambda_.8} parent=0 // pred_check_branch
    %1570 = sbr.rel (0) target = $region29
  $region28: #{_lambda_.8} parent=0 // pred_region
    _
  $region29: #{_lambda_.8} parent=0 // pred_fallthru
    _

// kernel: _lambda_.9
$region0: #{_lambda_.9}
  #allocation0 [shape = 'u32[]', space=smem, size = 0x4, offset = 0x4, fixed_abs, tag = 'smem constant byte address 0x4 - core index']
  #allocation1 [shape = 'u32[144,128]{1,0:T(1,128)}', space=vmem, size = 0x12000, scoped, tag = 'internal scratch']
  #allocation2 [shape = 'f32[128,128]{1,0:T(8,128)}', space=vmem, size = 0x10000, scoped, tag = 'scratch operand']
  %s0 = inlined_call_operand.vmem [shape: bf16[128,128], index: 0, kind: input, shape index: {}]
  %s1 = inlined_call_operand.vmem [shape: bf16[128,128], index: 1, kind: input, shape index: {}]
  %s2 = inlined_call_operand.vmem [shape: bf16[128,128], index: 2, kind: output, shape index: {0}]
  %s3 = inlined_call_operand.vmem [shape: f32[8,128], index: 3, kind: output, shape index: {1}]
  %4 = xla_tuple %s2, %s3
  %s5 = sld [smem:[#allocation0]]
  $region34: #{_lambda_.9} parent=0
    _
  %s7 = ssub.s32 1, %s5
  %s8 = scalar_select 0, %s7, %s5
  // Predicated region
  $region2: #{_lambda_.9} parent=0 // pred_check
    _
  $region3: #{_lambda_.9} parent=0 // pred_check_branch
    %10 = sbr.rel (0) target = $region5
  $region4: #{_lambda_.9} parent=0 // pred_region
    _
  $region5: #{_lambda_.9} parent=0 // pred_fallthru
    _
  // Predicated region
  $region6: #{_lambda_.9} parent=0 // pred_check
    _
  $region7: #{_lambda_.9} parent=0 // pred_check_branch
    %12 = sbr.rel (0) target = $region9
  $region8: #{_lambda_.9} parent=0 // pred_region
    _
  $region9: #{_lambda_.9} parent=0 // pred_fallthru
    _
  %p14 = scmp.eq.s32.totalorder 0, 0
  // Predicated region
  $region10: #{_lambda_.9} parent=0 // pred_check
    %p15 = pneg %p14
  $region11: #{_lambda_.9} parent=0 // pred_check_branch
    %17 = sbr.rel (%p15) target = $region13
  $region12: #{_lambda_.9} parent=0 // pred_region
    %18 = vst [vmem:[#allocation2] sm:$0xff] 0.0
    %19 = vst [vmem:[#allocation2 + $0x8] sm:$0xff] 0.0
    %20 = vst [vmem:[#allocation2 + $0x10] sm:$0xff] 0.0
    %21 = vst [vmem:[#allocation2 + $0x18] sm:$0xff] 0.0
    %22 = vst [vmem:[#allocation2 + $0x20] sm:$0xff] 0.0
    %23 = vst [vmem:[#allocation2 + $0x28] sm:$0xff] 0.0
    %24 = vst [vmem:[#allocation2 + $0x30] sm:$0xff] 0.0
    %25 = vst [vmem:[#allocation2 + $0x38] sm:$0xff] 0.0
    %26 = vst [vmem:[#allocation2 + $0x40] sm:$0xff] 0.0
    %27 = vst [vmem:[#allocation2 + $0x48] sm:$0xff] 0.0
    %28 = vst [vmem:[#allocation2 + $0x50] sm:$0xff] 0.0
    %29 = vst [vmem:[#allocation2 + $0x58] sm:$0xff] 0.0
    %30 = vst [vmem:[#allocation2 + $0x60] sm:$0xff] 0.0
    %31 = vst [vmem:[#allocation2 + $0x68] sm:$0xff] 0.0
    %32 = vst [vmem:[#allocation2 + $0x70] sm:$0xff] 0.0
    %33 = vst [vmem:[#allocation2 + $0x78] sm:$0xff] 0.0
  $region13: #{_lambda_.9} parent=0 // pred_fallthru
    _
  %v34 = vld [vmem:[#allocation2] sm:$0xff]
  %v35 = vld [vmem:[#allocation2 + $0x8] sm:$0xff]
  %v36 = vld [vmem:[#allocation2 + $0x10] sm:$0xff]
  %v37 = vld [vmem:[#allocation2 + $0x18] sm:$0xff]
  %v38 = vld [vmem:[#allocation2 + $0x20] sm:$0xff]
  %v39 = vld [vmem:[#allocation2 + $0x28] sm:$0xff]
  %v40 = vld [vmem:[#allocation2 + $0x30] sm:$0xff]
  %v41 = vld [vmem:[#allocation2 + $0x38] sm:$0xff]
  %v42 = vld [vmem:[#allocation2 + $0x40] sm:$0xff]
  %v43 = vld [vmem:[#allocation2 + $0x48] sm:$0xff]
  %v44 = vld [vmem:[#allocation2 + $0x50] sm:$0xff]
  %v45 = vld [vmem:[#allocation2 + $0x58] sm:$0xff]
  %v46 = vld [vmem:[#allocation2 + $0x60] sm:$0xff]
  %v47 = vld [vmem:[#allocation2 + $0x68] sm:$0xff]
  %v48 = vld [vmem:[#allocation2 + $0x70] sm:$0xff]
  %v49 = vld [vmem:[#allocation2 + $0x78] sm:$0xff]
  %v50 = vld [vmem:[%s0] sm:$0xf]
  %v51 = vld [vmem:[%s0 + $0x4] sm:$0xf]
  %v52 = vld [vmem:[%s0 + $0x8] sm:$0xf]
  %v53 = vld [vmem:[%s0 + $0xc] sm:$0xf]
  %v54 = vld [vmem:[%s0 + $0x10] sm:$0xf]
  %v55 = vld [vmem:[%s0 + $0x14] sm:$0xf]
  %v56 = vld [vmem:[%s0 + $0x18] sm:$0xf]
  %v57 = vld [vmem:[%s0 + $0x1c] sm:$0xf]
  %v58 = vld [vmem:[%s0 + $0x20] sm:$0xf]
  %v59 = vld [vmem:[%s0 + $0x24] sm:$0xf]
  %v60 = vld [vmem:[%s0 + $0x28] sm:$0xf]
  %v61 = vld [vmem:[%s0 + $0x2c] sm:$0xf]
  %v62 = vld [vmem:[%s0 + $0x30] sm:$0xf]
  %v63 = vld [vmem:[%s0 + $0x34] sm:$0xf]
  %v64 = vld [vmem:[%s0 + $0x38] sm:$0xf]
  %v65 = vld [vmem:[%s0 + $0x3c] sm:$0xf]
  %v66 = vld [vmem:[%s1] sm:$0xf]
  %v67 = vld [vmem:[%s1 + $0x4] sm:$0xf]
  %v68 = vld [vmem:[%s1 + $0x8] sm:$0xf]
  %v69 = vld [vmem:[%s1 + $0xc] sm:$0xf]
  %v70 = vld [vmem:[%s1 + $0x10] sm:$0xf]
  %v71 = vld [vmem:[%s1 + $0x14] sm:$0xf]
  %v72 = vld [vmem:[%s1 + $0x18] sm:$0xf]
  %v73 = vld [vmem:[%s1 + $0x1c] sm:$0xf]
  %v74 = vld [vmem:[%s1 + $0x20] sm:$0xf]
  %v75 = vld [vmem:[%s1 + $0x24] sm:$0xf]
  %v76 = vld [vmem:[%s1 + $0x28] sm:$0xf]
  %v77 = vld [vmem:[%s1 + $0x2c] sm:$0xf]
  %v78 = vld [vmem:[%s1 + $0x30] sm:$0xf]
  %v79 = vld [vmem:[%s1 + $0x34] sm:$0xf]
  %v80 = vld [vmem:[%s1 + $0x38] sm:$0xf]
  %v81 = vld [vmem:[%s1 + $0x3c] sm:$0xf]
  %v98 = vunpack.c.l.b16 %v50
  %v99 = vunpack.c.l.b16 %v51
  %v100 = vunpack.c.l.b16 %v52
  %v101 = vunpack.c.l.b16 %v53
  %v102 = vunpack.c.l.b16 %v54
  %v103 = vunpack.c.l.b16 %v55
  %v104 = vunpack.c.l.b16 %v56
  %v105 = vunpack.c.l.b16 %v57
  %v106 = vunpack.c.l.b16 %v58
  %v107 = vunpack.c.l.b16 %v59
  %v108 = vunpack.c.l.b16 %v60
  %v109 = vunpack.c.l.b16 %v61
  %v110 = vunpack.c.l.b16 %v62
  %v111 = vunpack.c.l.b16 %v63
  %v112 = vunpack.c.l.b16 %v64
  %v113 = vunpack.c.l.b16 %v65
  %v114 = vpack.c.b16 %v99, %v98
  %v115 = vpack.c.b16 %v101, %v100
  %v116 = vpack.c.b16 %v103, %v102
  %v117 = vpack.c.b16 %v105, %v104
  %v118 = vpack.c.b16 %v107, %v106
  %v119 = vpack.c.b16 %v109, %v108
  %v120 = vpack.c.b16 %v111, %v110
  %v121 = vpack.c.b16 %v113, %v112
  %v146 = vunpack.c.l.b16 %v66
  %v147 = vunpack.c.l.b16 %v67
  %v148 = vunpack.c.l.b16 %v68
  %v149 = vunpack.c.l.b16 %v69
  %v150 = vunpack.c.l.b16 %v70
  %v151 = vunpack.c.l.b16 %v71
  %v152 = vunpack.c.l.b16 %v72
  %v153 = vunpack.c.l.b16 %v73
  %v154 = vunpack.c.l.b16 %v74
  %v155 = vunpack.c.l.b16 %v75
  %v156 = vunpack.c.l.b16 %v76
  %v157 = vunpack.c.l.b16 %v77
  %v158 = vunpack.c.l.b16 %v78
  %v159 = vunpack.c.l.b16 %v79
  %v160 = vunpack.c.l.b16 %v80
  %v161 = vunpack.c.l.b16 %v81
  %v162 = vpack.c.b16 %v147, %v146
  %v163 = vpack.c.b16 %v149, %v148
  %v164 = vpack.c.b16 %v151, %v150
  %v165 = vpack.c.b16 %v153, %v152
  %v166 = vpack.c.b16 %v155, %v154
  %v167 = vpack.c.b16 %v157, %v156
  %v168 = vpack.c.b16 %v159, %v158
  %v169 = vpack.c.b16 %v161, %v160
  %178 = vmatprep.subr.bf16.mxu0 0
  %179 = vmatpush1.bf16.msra.mxu0 %v162
  %180 = vmatprep.subr.bf16.mxu0 0
  %181 = vmatpush1.bf16.msra.mxu0 %v163
  %182 = vmatprep.subr.bf16.mxu0 0
  %183 = vmatpush1.bf16.msra.mxu0 %v164
  %184 = vmatprep.subr.bf16.mxu0 0
  %185 = vmatpush1.bf16.msra.mxu0 %v165
  %186 = vmatprep.subr.bf16.mxu0 0
  %187 = vmatpush1.bf16.msra.mxu0 %v166
  %188 = vmatprep.subr.bf16.mxu0 0
  %189 = vmatpush1.bf16.msra.mxu0 %v167
  %190 = vmatprep.subr.bf16.mxu0 0
  %191 = vmatpush1.bf16.msra.mxu0 %v168
  %192 = vmatprep.subr.bf16.mxu0 0
  %193 = vmatpush1.bf16.msra.mxu0 %v169
  %194 = vmatprep.subr.bf16.mxu0 0
  %195 = vmatpush1.bf16.msra.mxu0 0
  %196 = vmatprep.subr.bf16.mxu0 0
  %197 = vmatpush1.bf16.msra.mxu0 0
  %198 = vmatprep.subr.bf16.mxu0 0
  %199 = vmatpush1.bf16.msra.mxu0 0
  %200 = vmatprep.subr.bf16.mxu0 0
  %201 = vmatpush1.bf16.msra.mxu0 0
  %202 = vmatprep.subr.bf16.mxu0 0
  %203 = vmatpush1.bf16.msra.mxu0 0
  %204 = vmatprep.subr.bf16.mxu0 0
  %205 = vmatpush1.bf16.msra.mxu0 0
  %206 = vmatprep.subr.bf16.mxu0 0
  %207 = vmatpush1.bf16.msra.mxu0 0
  %208 = vmatprep.subr.bf16.mxu0 0
  %209 = vmatpush1.bf16.msra.mxu0 0
  %210 = vmatprep.mubr.bf16.mxu0 0
  %211 = vmatmul.mubr.bf16.gmra.mrb[0].mxu0 %v114
  %v212 = vpop.f32.mrb[0].mxu0
  %v213 = vadd.f32 0.0, %v212
  %v214 = vpop.f32.mrb[0].mxu0
  %v215 = vpop.f32.mrb[0].mxu0
  %v216 = vadd.f32 0.0, %v215
  %v217 = vpop.f32.mrb[0].mxu0
  %218 = vmatprep.mubr.bf16.mxu0 0
  %219 = vmatmul.mubr.bf16.gmra.mrb[0].mxu0 %v115
  %v220 = vpop.f32.mrb[0].mxu0
  %v221 = vadd.f32 0.0, %v220
  %v222 = vpop.f32.mrb[0].mxu0
  %v223 = vpop.f32.mrb[0].mxu0
  %v224 = vadd.f32 0.0, %v223
  %v225 = vpop.f32.mrb[0].mxu0
  %226 = vmatprep.mubr.bf16.mxu0 0
  %227 = vmatmul.mubr.bf16.gmra.mrb[0].mxu0 %v116
  %v228 = vpop.f32.mrb[0].mxu0
  %v229 = vadd.f32 0.0, %v228
  %v230 = vpop.f32.mrb[0].mxu0
  %v231 = vpop.f32.mrb[0].mxu0
  %v232 = vadd.f32 0.0, %v231
  %v233 = vpop.f32.mrb[0].mxu0
  %234 = vmatprep.mubr.bf16.mxu0 0
  %235 = vmatmul.mubr.bf16.gmra.mrb[0].mxu0 %v117
  %v236 = vpop.f32.mrb[0].mxu0
  %v237 = vadd.f32 0.0, %v236
  %v238 = vpop.f32.mrb[0].mxu0
  %v239 = vpop.f32.mrb[0].mxu0
  %v240 = vadd.f32 0.0, %v239
  %v241 = vpop.f32.mrb[0].mxu0
  %242 = vmatprep.mubr.bf16.mxu0 0
  %243 = vmatmul.mubr.bf16.gmra.mrb[0].mxu0 %v118
  %v244 = vpop.f32.mrb[0].mxu0
  %v245 = vadd.f32 0.0, %v244
  %v246 = vpop.f32.mrb[0].mxu0
  %v247 = vpop.f32.mrb[0].mxu0
  %v248 = vadd.f32 0.0, %v247
  %v249 = vpop.f32.mrb[0].mxu0
  %250 = vmatprep.mubr.bf16.mxu0 0
  %251 = vmatmul.mubr.bf16.gmra.mrb[0].mxu0 %v119
  %v252 = vpop.f32.mrb[0].mxu0
  %v253 = vadd.f32 0.0, %v252
  %v254 = vpop.f32.mrb[0].mxu0
  %v255 = vpop.f32.mrb[0].mxu0
  %v256 = vadd.f32 0.0, %v255
  %v257 = vpop.f32.mrb[0].mxu0
  %258 = vmatprep.mubr.bf16.mxu0 0
  %259 = vmatmul.mubr.bf16.gmra.mrb[0].mxu0 %v120
  %v260 = vpop.f32.mrb[0].mxu0
  %v261 = vadd.f32 0.0, %v260
  %v262 = vpop.f32.mrb[0].mxu0
  %v263 = vpop.f32.mrb[0].mxu0
  %v264 = vadd.f32 0.0, %v263
  %v265 = vpop.f32.mrb[0].mxu0
  %266 = vmatprep.mubr.bf16.mxu0 0
  %267 = vmatmul.mubr.bf16.gmra.mrb[0].mxu0 %v121
  %v268 = vpop.f32.mrb[0].mxu0
  %v269 = vadd.f32 0.0, %v268
  %v270 = vpop.f32.mrb[0].mxu0
  %v271 = vpop.f32.mrb[0].mxu0
  %v272 = vadd.f32 0.0, %v271
  %v273 = vpop.f32.mrb[0].mxu0
  %274 = vdwg.mxu0
  %v275 = vadd.f32 %v34, %v213
  %v276 = vadd.f32 %v35, %v216
  %v277 = vadd.f32 %v36, %v221
  %v278 = vadd.f32 %v37, %v224
  %v279 = vadd.f32 %v38, %v229
  %v280 = vadd.f32 %v39, %v232
  %v281 = vadd.f32 %v40, %v237
  %v282 = vadd.f32 %v41, %v240
  %v283 = vadd.f32 %v42, %v245
  %v284 = vadd.f32 %v43, %v248
  %v285 = vadd.f32 %v44, %v253
  %v286 = vadd.f32 %v45, %v256
  %v287 = vadd.f32 %v46, %v261
  %v288 = vadd.f32 %v47, %v264
  %v289 = vadd.f32 %v48, %v269
  %v290 = vadd.f32 %v49, %v272
  %291 = vst [vmem:[#allocation2] sm:$0xff] %v275
  %292 = vst [vmem:[#allocation2 + $0x8] sm:$0xff] %v276
  %293 = vst [vmem:[#allocation2 + $0x10] sm:$0xff] %v277
  %294 = vst [vmem:[#allocation2 + $0x18] sm:$0xff] %v278
  %295 = vst [vmem:[#allocation2 + $0x20] sm:$0xff] %v279
  %296 = vst [vmem:[#allocation2 + $0x28] sm:$0xff] %v280
  %297 = vst [vmem:[#allocation2 + $0x30] sm:$0xff] %v281
  %298 = vst [vmem:[#allocation2 + $0x38] sm:$0xff] %v282
  %299 = vst [vmem:[#allocation2 + $0x40] sm:$0xff] %v283
  %300 = vst [vmem:[#allocation2 + $0x48] sm:$0xff] %v284
  %301 = vst [vmem:[#allocation2 + $0x50] sm:$0xff] %v285
  %302 = vst [vmem:[#allocation2 + $0x58] sm:$0xff] %v286
  %303 = vst [vmem:[#allocation2 + $0x60] sm:$0xff] %v287
  %304 = vst [vmem:[#allocation2 + $0x68] sm:$0xff] %v288
  %305 = vst [vmem:[#allocation2 + $0x70] sm:$0xff] %v289
  %306 = vst [vmem:[#allocation2 + $0x78] sm:$0xff] %v290
  // Predicated region
  $region14: #{_lambda_.9} parent=0 // pred_check
    %p307 = pneg %p14
  $region15: #{_lambda_.9} parent=0 // pred_check_branch
    %309 = sbr.rel (%p307) target = $region17
  $region16: #{_lambda_.9} parent=0 // pred_region
    %v310 = vld [vmem:[#allocation2] sm:$0xff]
    %v311 = vld [vmem:[#allocation2 + $0x8] sm:$0xff]
    %v312 = vld [vmem:[#allocation2 + $0x10] sm:$0xff]
    %v313 = vld [vmem:[#allocation2 + $0x18] sm:$0xff]
    %v314 = vld [vmem:[#allocation2 + $0x20] sm:$0xff]
    %v315 = vld [vmem:[#allocation2 + $0x28] sm:$0xff]
    %v316 = vld [vmem:[#allocation2 + $0x30] sm:$0xff]
    %v317 = vld [vmem:[#allocation2 + $0x38] sm:$0xff]
    %v318 = vld [vmem:[#allocation2 + $0x40] sm:$0xff]
    %v319 = vld [vmem:[#allocation2 + $0x48] sm:$0xff]
    %v320 = vld [vmem:[#allocation2 + $0x50] sm:$0xff]
    %v321 = vld [vmem:[#allocation2 + $0x58] sm:$0xff]
    %v322 = vld [vmem:[#allocation2 + $0x60] sm:$0xff]
    %v323 = vld [vmem:[#allocation2 + $0x68] sm:$0xff]
    %v324 = vld [vmem:[#allocation2 + $0x70] sm:$0xff]
    %v325 = vld [vmem:[#allocation2 + $0x78] sm:$0xff]
    %v326 = vadd.f32 %v310, %v311
    %v327 = vadd.f32 %v326, %v312
    %v328 = vadd.f32 %v327, %v313
    %v329 = vadd.f32 %v328, %v314
    %v330 = vadd.f32 %v329, %v315
    %v331 = vadd.f32 %v330, %v316
    %v332 = vadd.f32 %v331, %v317
    %v333 = vadd.f32 %v332, %v318
    %v334 = vadd.f32 %v333, %v319
    %v335 = vadd.f32 %v334, %v320
    %v336 = vadd.f32 %v335, %v321
    %v337 = vadd.f32 %v336, %v322
    %v338 = vadd.f32 %v337, %v323
    %v339 = vadd.f32 %v338, %v324
    %v340 = vadd.f32 %v339, %v325
    %v341 = vrot.slane %v340, 4
    %v342 = vadd.f32 %v340, %v341
    %v343 = vrot.slane %v342, 2
    %v344 = vadd.f32 %v342, %v343
    %v345 = vrot.slane %v344, 1
    %v346 = vadd.f32 %v344, %v345
    %v347 = vmul.f32 %v310, %v310
    %v348 = vmul.f32 %v311, %v311
    %v349 = vmul.f32 %v312, %v312
    %v350 = vmul.f32 %v313, %v313
    %v351 = vmul.f32 %v314, %v314
    %v352 = vmul.f32 %v315, %v315
    %v353 = vmul.f32 %v316, %v316
    %v354 = vmul.f32 %v317, %v317
    %v355 = vmul.f32 %v318, %v318
    %v356 = vmul.f32 %v319, %v319
    %v357 = vmul.f32 %v320, %v320
    %v358 = vmul.f32 %v321, %v321
    %v359 = vmul.f32 %v322, %v322
    %v360 = vmul.f32 %v323, %v323
    %v361 = vmul.f32 %v324, %v324
    %v362 = vmul.f32 %v325, %v325
    %v363 = vadd.f32 %v347, %v348
    %v364 = vadd.f32 %v363, %v349
    %v365 = vadd.f32 %v364, %v350
    %v366 = vadd.f32 %v365, %v351
    %v367 = vadd.f32 %v366, %v352
    %v368 = vadd.f32 %v367, %v353
    %v369 = vadd.f32 %v368, %v354
    %v370 = vadd.f32 %v369, %v355
    %v371 = vadd.f32 %v370, %v356
    %v372 = vadd.f32 %v371, %v357
    %v373 = vadd.f32 %v372, %v358
    %v374 = vadd.f32 %v373, %v359
    %v375 = vadd.f32 %v374, %v360
    %v376 = vadd.f32 %v375, %v361
    %v377 = vadd.f32 %v376, %v362
    %v378 = vrot.slane %v377, 4
    %v379 = vadd.f32 %v377, %v378
    %v380 = vrot.slane %v379, 2
    %v381 = vadd.f32 %v379, %v380
    %v382 = vrot.slane %v381, 1
    %v383 = vadd.f32 %v381, %v382
    %v384 = vlaneseq
    %v385 = vshrl.u32 %v384, 7
    %vm386 = vcmp.eq.s32.totalorder %v385, 0
    %vm387 = vcmp.eq.s32.totalorder %v385, 1
    %v388 = vsel %vm387, %v383, 0.0
    %v389 = vsel %vm386, %v346, %v388
    %390 = vst [vmem:[%s3] sm:$0xff] %v389
    %v391 = vpack.c.bf16 %v311, %v310
    %v392 = vpack.c.bf16 %v313, %v312
    %v393 = vpack.c.bf16 %v315, %v314
    %v394 = vpack.c.bf16 %v317, %v316
    %v395 = vpack.c.bf16 %v319, %v318
    %v396 = vpack.c.bf16 %v321, %v320
    %v397 = vpack.c.bf16 %v323, %v322
    %v398 = vpack.c.bf16 %v325, %v324
    %v407 = vunpack.c.l.b16 %v391
    %v408 = vunpack.c.h.b16 %v391
    %v409 = vunpack.c.l.b16 %v392
    %v410 = vunpack.c.h.b16 %v392
    %v411 = vunpack.c.l.b16 %v393
    %v412 = vunpack.c.h.b16 %v393
    %v413 = vunpack.c.l.b16 %v394
    %v414 = vunpack.c.h.b16 %v394
    %v415 = vunpack.c.l.b16 %v395
    %v416 = vunpack.c.h.b16 %v395
    %v417 = vunpack.c.l.b16 %v396
    %v418 = vunpack.c.h.b16 %v396
    %v419 = vunpack.c.l.b16 %v397
    %v420 = vunpack.c.h.b16 %v397
    %v421 = vunpack.c.l.b16 %v398
    %v422 = vunpack.c.h.b16 %v398
    %v423 = vpack.c.b16 %v407, %v407
    %v424 = vpack.c.b16 %v408, %v408
    %v425 = vpack.c.b16 %v409, %v409
    %v426 = vpack.c.b16 %v410, %v410
    %v427 = vpack.c.b16 %v411, %v411
    %v428 = vpack.c.b16 %v412, %v412
    %v429 = vpack.c.b16 %v413, %v413
    %v430 = vpack.c.b16 %v414, %v414
    %v431 = vpack.c.b16 %v415, %v415
    %v432 = vpack.c.b16 %v416, %v416
    %v433 = vpack.c.b16 %v417, %v417
    %v434 = vpack.c.b16 %v418, %v418
    %v435 = vpack.c.b16 %v419, %v419
    %v436 = vpack.c.b16 %v420, %v420
    %v437 = vpack.c.b16 %v421, %v421
    %v438 = vpack.c.b16 %v422, %v422
    %455 = vst [vmem:[%s2] sm:$0xf] %v423
    %456 = vst [vmem:[%s2 + $0x4] sm:$0xf] %v424
    %457 = vst [vmem:[%s2 + $0x8] sm:$0xf] %v425
    %458 = vst [vmem:[%s2 + $0xc] sm:$0xf] %v426
    %459 = vst [vmem:[%s2 + $0x10] sm:$0xf] %v427
    %460 = vst [vmem:[%s2 + $0x14] sm:$0xf] %v428
    %461 = vst [vmem:[%s2 + $0x18] sm:$0xf] %v429
    %462 = vst [vmem:[%s2 + $0x1c] sm:$0xf] %v430
    %463 = vst [vmem:[%s2 + $0x20] sm:$0xf] %v431
    %464 = vst [vmem:[%s2 + $0x24] sm:$0xf] %v432
    %465 = vst [vmem:[%s2 + $0x28] sm:$0xf] %v433
    %466 = vst [vmem:[%s2 + $0x2c] sm:$0xf] %v434
    %467 = vst [vmem:[%s2 + $0x30] sm:$0xf] %v435
    %468 = vst [vmem:[%s2 + $0x34] sm:$0xf] %v436
    %469 = vst [vmem:[%s2 + $0x38] sm:$0xf] %v437
    %470 = vst [vmem:[%s2 + $0x3c] sm:$0xf] %v438
  $region17: #{_lambda_.9} parent=0 // pred_fallthru
    _
  // Predicated region
  $region18: #{_lambda_.9} parent=0 // pred_check
    _
  $region19: #{_lambda_.9} parent=0 // pred_check_branch
    %472 = sbr.rel (0) target = $region21
  $region20: #{_lambda_.9} parent=0 // pred_region
    _
  $region21: #{_lambda_.9} parent=0 // pred_fallthru
    _
  // Predicated region
  $region22: #{_lambda_.9} parent=0 // pred_check
    _
  $region23: #{_lambda_.9} parent=0 // pred_check_branch
    %474 = sbr.rel (0) target = $region25
  $region24: #{_lambda_.9} parent=0 // pred_region
    _
  $region25: #{_lambda_.9} parent=0 // pred_fallthru
    _
  // Predicated region
  $region26: #{_lambda_.9} parent=0 // pred_check
    _
  $region27: #{_lambda_.9} parent=0 // pred_check_branch
    %476 = sbr.rel (0) target = $region29
  $region28: #{_lambda_.9} parent=0 // pred_region
    _
  $region29: #{_lambda_.9} parent=0 // pred_fallthru
    _
  // Predicated region
  $region30: #{_lambda_.9} parent=0 // pred_check
    _
  $region31: #{_lambda_.9} parent=0 // pred_check_branch
    %478 = sbr.rel (0) target = $region33
  $region32: #{_lambda_.9} parent=0 // pred_region
    _
  $region33: #{_lambda_.9} parent=0 // pred_fallthru
    _

// kernel: _lambda_.10
$region0: #{_lambda_.10}
  #allocation0 [shape = 'u32[]', space=smem, size = 0x4, offset = 0x4, fixed_abs, tag = 'smem constant byte address 0x4 - core index']
  #allocation1 [shape = 'u32[144,128]{1,0:T(1,128)}', space=vmem, size = 0x12000, scoped, tag = 'internal scratch']
  %s0 = inlined_call_operand.vmem [shape: bf16[128,128], index: 0, kind: input, shape index: {}]
  %s1 = inlined_call_operand.vmem [shape: f32[1,128], index: 1, kind: input, shape index: {}]
  %s2 = inlined_call_operand.vmem [shape: f32[1,128], index: 2, kind: input, shape index: {}]
  %s3 = inlined_call_operand.vmem [shape: bf16[128,128], index: 3, kind: output, shape index: {}]
  %s4 = sld [smem:[#allocation0]]
  $region22: #{_lambda_.10} parent=0
    _
  %s6 = ssub.s32 1, %s4
  %s7 = scalar_select 0, %s6, %s4
  // Predicated region
  $region2: #{_lambda_.10} parent=0 // pred_check
    _
  $region3: #{_lambda_.10} parent=0 // pred_check_branch
    %9 = sbr.rel (0) target = $region5
  $region4: #{_lambda_.10} parent=0 // pred_region
    _
  $region5: #{_lambda_.10} parent=0 // pred_fallthru
    _
  // Predicated region
  $region6: #{_lambda_.10} parent=0 // pred_check
    _
  $region7: #{_lambda_.10} parent=0 // pred_check_branch
    %11 = sbr.rel (0) target = $region9
  $region8: #{_lambda_.10} parent=0 // pred_region
    _
  $region9: #{_lambda_.10} parent=0 // pred_fallthru
    _
  // Predicated region
  $region10: #{_lambda_.10} parent=0 // pred_check
    _
  $region11: #{_lambda_.10} parent=0 // pred_check_branch
    %13 = sbr.rel (0) target = $region13
  $region12: #{_lambda_.10} parent=0 // pred_region
    _
  $region13: #{_lambda_.10} parent=0 // pred_fallthru
    _
  %v14 = vld [vmem:[%s0] sm:$0xf]
  %v15 = vld [vmem:[%s0 + $0x4] sm:$0xf]
  %v16 = vld [vmem:[%s0 + $0x8] sm:$0xf]
  %v17 = vld [vmem:[%s0 + $0xc] sm:$0xf]
  %v18 = vld [vmem:[%s0 + $0x10] sm:$0xf]
  %v19 = vld [vmem:[%s0 + $0x14] sm:$0xf]
  %v20 = vld [vmem:[%s0 + $0x18] sm:$0xf]
  %v21 = vld [vmem:[%s0 + $0x1c] sm:$0xf]
  %v22 = vld [vmem:[%s0 + $0x20] sm:$0xf]
  %v23 = vld [vmem:[%s0 + $0x24] sm:$0xf]
  %v24 = vld [vmem:[%s0 + $0x28] sm:$0xf]
  %v25 = vld [vmem:[%s0 + $0x2c] sm:$0xf]
  %v26 = vld [vmem:[%s0 + $0x30] sm:$0xf]
  %v27 = vld [vmem:[%s0 + $0x34] sm:$0xf]
  %v28 = vld [vmem:[%s0 + $0x38] sm:$0xf]
  %v29 = vld [vmem:[%s0 + $0x3c] sm:$0xf]
  %v30 = vunpack.c.l.bf16 %v14
  %v31 = vunpack.c.l.bf16 %v15
  %v32 = vunpack.c.l.bf16 %v16
  %v33 = vunpack.c.l.bf16 %v17
  %v34 = vunpack.c.l.bf16 %v18
  %v35 = vunpack.c.l.bf16 %v19
  %v36 = vunpack.c.l.bf16 %v20
  %v37 = vunpack.c.l.bf16 %v21
  %v38 = vunpack.c.l.bf16 %v22
  %v39 = vunpack.c.l.bf16 %v23
  %v40 = vunpack.c.l.bf16 %v24
  %v41 = vunpack.c.l.bf16 %v25
  %v42 = vunpack.c.l.bf16 %v26
  %v43 = vunpack.c.l.bf16 %v27
  %v44 = vunpack.c.l.bf16 %v28
  %v45 = vunpack.c.l.bf16 %v29
  %v46 = vld [vmem:[%s1] sm:$0x1]
  %v48 = vlaneseq
  %v49 = vshrl.u32 %v48, 7
  %v50 = vsub.s32 0, %v49
  %v51 = vrot.slane %v46, %v50
  %v53 = vmul.f32 %v30, %v51
  %v54 = vmul.f32 %v31, %v51
  %v55 = vmul.f32 %v32, %v51
  %v56 = vmul.f32 %v33, %v51
  %v57 = vmul.f32 %v34, %v51
  %v58 = vmul.f32 %v35, %v51
  %v59 = vmul.f32 %v36, %v51
  %v60 = vmul.f32 %v37, %v51
  %v61 = vmul.f32 %v38, %v51
  %v62 = vmul.f32 %v39, %v51
  %v63 = vmul.f32 %v40, %v51
  %v64 = vmul.f32 %v41, %v51
  %v65 = vmul.f32 %v42, %v51
  %v66 = vmul.f32 %v43, %v51
  %v67 = vmul.f32 %v44, %v51
  %v68 = vmul.f32 %v45, %v51
  %v69 = vld [vmem:[%s2] sm:$0x1]
  %v71 = vlaneseq
  %v72 = vshrl.u32 %v71, 7
  %v73 = vsub.s32 0, %v72
  %v74 = vrot.slane %v69, %v73
  %v76 = vadd.f32 %v53, %v74
  %v77 = vadd.f32 %v54, %v74
  %v78 = vadd.f32 %v55, %v74
  %v79 = vadd.f32 %v56, %v74
  %v80 = vadd.f32 %v57, %v74
  %v81 = vadd.f32 %v58, %v74
  %v82 = vadd.f32 %v59, %v74
  %v83 = vadd.f32 %v60, %v74
  %v84 = vadd.f32 %v61, %v74
  %v85 = vadd.f32 %v62, %v74
  %v86 = vadd.f32 %v63, %v74
  %v87 = vadd.f32 %v64, %v74
  %v88 = vadd.f32 %v65, %v74
  %v89 = vadd.f32 %v66, %v74
  %v90 = vadd.f32 %v67, %v74
  %v91 = vadd.f32 %v68, %v74
  %vm92 = vcmp.ge.f32.partialorder %v76, 0.0
  %vm93 = vcmp.ge.f32.partialorder %v77, 0.0
  %vm94 = vcmp.ge.f32.partialorder %v78, 0.0
  %vm95 = vcmp.ge.f32.partialorder %v79, 0.0
  %vm96 = vcmp.ge.f32.partialorder %v80, 0.0
  %vm97 = vcmp.ge.f32.partialorder %v81, 0.0
  %vm98 = vcmp.ge.f32.partialorder %v82, 0.0
  %vm99 = vcmp.ge.f32.partialorder %v83, 0.0
  %vm100 = vcmp.ge.f32.partialorder %v84, 0.0
  %vm101 = vcmp.ge.f32.partialorder %v85, 0.0
  %vm102 = vcmp.ge.f32.partialorder %v86, 0.0
  %vm103 = vcmp.ge.f32.partialorder %v87, 0.0
  %vm104 = vcmp.ge.f32.partialorder %v88, 0.0
  %vm105 = vcmp.ge.f32.partialorder %v89, 0.0
  %vm106 = vcmp.ge.f32.partialorder %v90, 0.0
  %vm107 = vcmp.ge.f32.partialorder %v91, 0.0
  %v108 = vmul.f32 %v76, 0.2
  %v109 = vmul.f32 %v77, 0.2
  %v110 = vmul.f32 %v78, 0.2
  %v111 = vmul.f32 %v79, 0.2
  %v112 = vmul.f32 %v80, 0.2
  %v113 = vmul.f32 %v81, 0.2
  %v114 = vmul.f32 %v82, 0.2
  %v115 = vmul.f32 %v83, 0.2
  %v116 = vmul.f32 %v84, 0.2
  %v117 = vmul.f32 %v85, 0.2
  %v118 = vmul.f32 %v86, 0.2
  %v119 = vmul.f32 %v87, 0.2
  %v120 = vmul.f32 %v88, 0.2
  %v121 = vmul.f32 %v89, 0.2
  %v122 = vmul.f32 %v90, 0.2
  %v123 = vmul.f32 %v91, 0.2
  %v124 = vsel %vm92, %v76, %v108
  %v125 = vsel %vm93, %v77, %v109
  %v126 = vsel %vm94, %v78, %v110
  %v127 = vsel %vm95, %v79, %v111
  %v128 = vsel %vm96, %v80, %v112
  %v129 = vsel %vm97, %v81, %v113
  %v130 = vsel %vm98, %v82, %v114
  %v131 = vsel %vm99, %v83, %v115
  %v132 = vsel %vm100, %v84, %v116
  %v133 = vsel %vm101, %v85, %v117
  %v134 = vsel %vm102, %v86, %v118
  %v135 = vsel %vm103, %v87, %v119
  %v136 = vsel %vm104, %v88, %v120
  %v137 = vsel %vm105, %v89, %v121
  %v138 = vsel %vm106, %v90, %v122
  %v139 = vsel %vm107, %v91, %v123
  %v140 = vpack.c.bf16 %v125, %v124
  %v141 = vpack.c.bf16 %v127, %v126
  %v142 = vpack.c.bf16 %v129, %v128
  %v143 = vpack.c.bf16 %v131, %v130
  %v144 = vpack.c.bf16 %v133, %v132
  %v145 = vpack.c.bf16 %v135, %v134
  %v146 = vpack.c.bf16 %v137, %v136
  %v147 = vpack.c.bf16 %v139, %v138
  %v156 = vunpack.c.l.b16 %v140
  %v157 = vunpack.c.h.b16 %v140
  %v158 = vunpack.c.l.b16 %v141
  %v159 = vunpack.c.h.b16 %v141
  %v160 = vunpack.c.l.b16 %v142
  %v161 = vunpack.c.h.b16 %v142
  %v162 = vunpack.c.l.b16 %v143
  %v163 = vunpack.c.h.b16 %v143
  %v164 = vunpack.c.l.b16 %v144
  %v165 = vunpack.c.h.b16 %v144
  %v166 = vunpack.c.l.b16 %v145
  %v167 = vunpack.c.h.b16 %v145
  %v168 = vunpack.c.l.b16 %v146
  %v169 = vunpack.c.h.b16 %v146
  %v170 = vunpack.c.l.b16 %v147
  %v171 = vunpack.c.h.b16 %v147
  %v172 = vpack.c.b16 %v156, %v156
  %v173 = vpack.c.b16 %v157, %v157
  %v174 = vpack.c.b16 %v158, %v158
  %v175 = vpack.c.b16 %v159, %v159
  %v176 = vpack.c.b16 %v160, %v160
  %v177 = vpack.c.b16 %v161, %v161
  %v178 = vpack.c.b16 %v162, %v162
  %v179 = vpack.c.b16 %v163, %v163
  %v180 = vpack.c.b16 %v164, %v164
  %v181 = vpack.c.b16 %v165, %v165
  %v182 = vpack.c.b16 %v166, %v166
  %v183 = vpack.c.b16 %v167, %v167
  %v184 = vpack.c.b16 %v168, %v168
  %v185 = vpack.c.b16 %v169, %v169
  %v186 = vpack.c.b16 %v170, %v170
  %v187 = vpack.c.b16 %v171, %v171
  %204 = vst [vmem:[%s3] sm:$0xf] %v172
  %205 = vst [vmem:[%s3 + $0x4] sm:$0xf] %v173
  %206 = vst [vmem:[%s3 + $0x8] sm:$0xf] %v174
  %207 = vst [vmem:[%s3 + $0xc] sm:$0xf] %v175
  %208 = vst [vmem:[%s3 + $0x10] sm:$0xf] %v176
  %209 = vst [vmem:[%s3 + $0x14] sm:$0xf] %v177
  %210 = vst [vmem:[%s3 + $0x18] sm:$0xf] %v178
  %211 = vst [vmem:[%s3 + $0x1c] sm:$0xf] %v179
  %212 = vst [vmem:[%s3 + $0x20] sm:$0xf] %v180
  %213 = vst [vmem:[%s3 + $0x24] sm:$0xf] %v181
  %214 = vst [vmem:[%s3 + $0x28] sm:$0xf] %v182
  %215 = vst [vmem:[%s3 + $0x2c] sm:$0xf] %v183
  %216 = vst [vmem:[%s3 + $0x30] sm:$0xf] %v184
  %217 = vst [vmem:[%s3 + $0x34] sm:$0xf] %v185
  %218 = vst [vmem:[%s3 + $0x38] sm:$0xf] %v186
  %219 = vst [vmem:[%s3 + $0x3c] sm:$0xf] %v187
  // Predicated region
  $region14: #{_lambda_.10} parent=0 // pred_check
    _
  $region15: #{_lambda_.10} parent=0 // pred_check_branch
    %221 = sbr.rel (0) target = $region17
  $region16: #{_lambda_.10} parent=0 // pred_region
    _
  $region17: #{_lambda_.10} parent=0 // pred_fallthru
    _
  // Predicated region
  $region18: #{_lambda_.10} parent=0 // pred_check
    _
  $region19: #{_lambda_.10} parent=0 // pred_check_branch
    %223 = sbr.rel (0) target = $region21
  $region20: #{_lambda_.10} parent=0 // pred_region
    _
  $region21: #{_lambda_.10} parent=0 // pred_fallthru
    _

// kernel: _lambda_.11
$region0: #{_lambda_.11}
  #allocation0 [shape = 'u32[]', space=smem, size = 0x4, offset = 0x4, fixed_abs, tag = 'smem constant byte address 0x4 - core index']
  #allocation1 [shape = 'u32[144,128]{1,0:T(1,128)}', space=vmem, size = 0x12000, scoped, tag = 'internal scratch']
  #allocation2 [shape = 'f32[32,128]{1,0:T(8,128)}', space=vmem, size = 0x4000, scoped, tag = 'scratch operand']
  %s0 = inlined_call_operand.vmem [shape: bf16[32,256], index: 0, kind: input, shape index: {}]
  %s1 = inlined_call_operand.vmem [shape: bf16[256,128], index: 1, kind: input, shape index: {}]
  %s2 = inlined_call_operand.vmem [shape: bf16[32,128], index: 2, kind: output, shape index: {0}]
  %s3 = inlined_call_operand.vmem [shape: f32[8,128], index: 3, kind: output, shape index: {1}]
  %4 = xla_tuple %s2, %s3
  %s5 = sld [smem:[#allocation0]]
  $region34: #{_lambda_.11} parent=0
    _
  %s7 = ssub.s32 1, %s5
  %s8 = scalar_select 0, %s7, %s5
  // Predicated region
  $region2: #{_lambda_.11} parent=0 // pred_check
    _
  $region3: #{_lambda_.11} parent=0 // pred_check_branch
    %10 = sbr.rel (0) target = $region5
  $region4: #{_lambda_.11} parent=0 // pred_region
    _
  $region5: #{_lambda_.11} parent=0 // pred_fallthru
    _
  // Predicated region
  $region6: #{_lambda_.11} parent=0 // pred_check
    _
  $region7: #{_lambda_.11} parent=0 // pred_check_branch
    %12 = sbr.rel (0) target = $region9
  $region8: #{_lambda_.11} parent=0 // pred_region
    _
  $region9: #{_lambda_.11} parent=0 // pred_fallthru
    _
  %p14 = scmp.eq.s32.totalorder 0, 0
  // Predicated region
  $region10: #{_lambda_.11} parent=0 // pred_check
    %p15 = pneg %p14
  $region11: #{_lambda_.11} parent=0 // pred_check_branch
    %17 = sbr.rel (%p15) target = $region13
  $region12: #{_lambda_.11} parent=0 // pred_region
    %18 = vst [vmem:[#allocation2] sm:$0xff] 0.0
    %19 = vst [vmem:[#allocation2 + $0x8] sm:$0xff] 0.0
    %20 = vst [vmem:[#allocation2 + $0x10] sm:$0xff] 0.0
    %21 = vst [vmem:[#allocation2 + $0x18] sm:$0xff] 0.0
  $region13: #{_lambda_.11} parent=0 // pred_fallthru
    _
  %v22 = vld [vmem:[#allocation2] sm:$0xff]
  %v23 = vld [vmem:[#allocation2 + $0x8] sm:$0xff]
  %v24 = vld [vmem:[#allocation2 + $0x10] sm:$0xff]
  %v25 = vld [vmem:[#allocation2 + $0x18] sm:$0xff]
  %v26 = vld [vmem:[%s0] sm:$0xff]
  %v27 = vld [vmem:[%s0 + $0x8] sm:$0xff]
  %v28 = vld [vmem:[%s0 + $0x10] sm:$0xff]
  %v29 = vld [vmem:[%s0 + $0x18] sm:$0xff]
  %v30 = vld [vmem:[%s1] sm:$0xf]
  %v31 = vld [vmem:[%s1 + $0x4] sm:$0xf]
  %v32 = vld [vmem:[%s1 + $0x8] sm:$0xf]
  %v33 = vld [vmem:[%s1 + $0xc] sm:$0xf]
  %v34 = vld [vmem:[%s1 + $0x10] sm:$0xf]
  %v35 = vld [vmem:[%s1 + $0x14] sm:$0xf]
  %v36 = vld [vmem:[%s1 + $0x18] sm:$0xf]
  %v37 = vld [vmem:[%s1 + $0x1c] sm:$0xf]
  %v38 = vld [vmem:[%s1 + $0x20] sm:$0xf]
  %v39 = vld [vmem:[%s1 + $0x24] sm:$0xf]
  %v40 = vld [vmem:[%s1 + $0x28] sm:$0xf]
  %v41 = vld [vmem:[%s1 + $0x2c] sm:$0xf]
  %v42 = vld [vmem:[%s1 + $0x30] sm:$0xf]
  %v43 = vld [vmem:[%s1 + $0x34] sm:$0xf]
  %v44 = vld [vmem:[%s1 + $0x38] sm:$0xf]
  %v45 = vld [vmem:[%s1 + $0x3c] sm:$0xf]
  %v46 = vld [vmem:[%s1 + $0x40] sm:$0xf]
  %v47 = vld [vmem:[%s1 + $0x44] sm:$0xf]
  %v48 = vld [vmem:[%s1 + $0x48] sm:$0xf]
  %v49 = vld [vmem:[%s1 + $0x4c] sm:$0xf]
  %v50 = vld [vmem:[%s1 + $0x50] sm:$0xf]
  %v51 = vld [vmem:[%s1 + $0x54] sm:$0xf]
  %v52 = vld [vmem:[%s1 + $0x58] sm:$0xf]
  %v53 = vld [vmem:[%s1 + $0x5c] sm:$0xf]
  %v54 = vld [vmem:[%s1 + $0x60] sm:$0xf]
  %v55 = vld [vmem:[%s1 + $0x64] sm:$0xf]
  %v56 = vld [vmem:[%s1 + $0x68] sm:$0xf]
  %v57 = vld [vmem:[%s1 + $0x6c] sm:$0xf]
  %v58 = vld [vmem:[%s1 + $0x70] sm:$0xf]
  %v59 = vld [vmem:[%s1 + $0x74] sm:$0xf]
  %v60 = vld [vmem:[%s1 + $0x78] sm:$0xf]
  %v61 = vld [vmem:[%s1 + $0x7c] sm:$0xf]
  %v66 = vunpack.c.l.b16 %v26
  %v67 = vunpack.c.h.b16 %v26
  %v68 = vunpack.c.l.b16 %v27
  %v69 = vunpack.c.h.b16 %v27
  %v70 = vunpack.c.l.b16 %v28
  %v71 = vunpack.c.h.b16 %v28
  %v72 = vunpack.c.l.b16 %v29
  %v73 = vunpack.c.h.b16 %v29
  %v74 = vpack.c.b16 %v68, %v66
  %v75 = vpack.c.b16 %v69, %v67
  %v76 = vpack.c.b16 %v72, %v70
  %v77 = vpack.c.b16 %v73, %v71
  %v114 = vunpack.c.l.b16 %v30
  %v115 = vunpack.c.l.b16 %v31
  %v116 = vunpack.c.l.b16 %v32
  %v117 = vunpack.c.l.b16 %v33
  %v118 = vunpack.c.l.b16 %v34
  %v119 = vunpack.c.l.b16 %v35
  %v120 = vunpack.c.l.b16 %v36
  %v121 = vunpack.c.l.b16 %v37
  %v122 = vunpack.c.l.b16 %v38
  %v123 = vunpack.c.l.b16 %v39
  %v124 = vunpack.c.l.b16 %v40
  %v125 = vunpack.c.l.b16 %v41
  %v126 = vunpack.c.l.b16 %v42
  %v127 = vunpack.c.l.b16 %v43
  %v128 = vunpack.c.l.b16 %v44
  %v129 = vunpack.c.l.b16 %v45
  %v130 = vunpack.c.l.b16 %v46
  %v131 = vunpack.c.l.b16 %v47
  %v132 = vunpack.c.l.b16 %v48
  %v133 = vunpack.c.l.b16 %v49
  %v134 = vunpack.c.l.b16 %v50
  %v135 = vunpack.c.l.b16 %v51
  %v136 = vunpack.c.l.b16 %v52
  %v137 = vunpack.c.l.b16 %v53
  %v138 = vunpack.c.l.b16 %v54
  %v139 = vunpack.c.l.b16 %v55
  %v140 = vunpack.c.l.b16 %v56
  %v141 = vunpack.c.l.b16 %v57
  %v142 = vunpack.c.l.b16 %v58
  %v143 = vunpack.c.l.b16 %v59
  %v144 = vunpack.c.l.b16 %v60
  %v145 = vunpack.c.l.b16 %v61
  %v146 = vpack.c.b16 %v115, %v114
  %v147 = vpack.c.b16 %v117, %v116
  %v148 = vpack.c.b16 %v119, %v118
  %v149 = vpack.c.b16 %v121, %v120
  %v150 = vpack.c.b16 %v123, %v122
  %v151 = vpack.c.b16 %v125, %v124
  %v152 = vpack.c.b16 %v127, %v126
  %v153 = vpack.c.b16 %v129, %v128
  %v154 = vpack.c.b16 %v131, %v130
  %v155 = vpack.c.b16 %v133, %v132
  %v156 = vpack.c.b16 %v135, %v134
  %v157 = vpack.c.b16 %v137, %v136
  %v158 = vpack.c.b16 %v139, %v138
  %v159 = vpack.c.b16 %v141, %v140
  %v160 = vpack.c.b16 %v143, %v142
  %v161 = vpack.c.b16 %v145, %v144
  %178 = vmatprep.subr.bf16.mxu0 0
  %179 = vmatpush1.bf16.msra.mxu0 %v146
  %180 = vmatprep.subr.bf16.mxu0 0
  %181 = vmatpush1.bf16.msra.mxu0 %v147
  %182 = vmatprep.subr.bf16.mxu0 0
  %183 = vmatpush1.bf16.msra.mxu0 %v148
  %184 = vmatprep.subr.bf16.mxu0 0
  %185 = vmatpush1.bf16.msra.mxu0 %v149
  %186 = vmatprep.subr.bf16.mxu0 0
  %187 = vmatpush1.bf16.msra.mxu0 %v150
  %188 = vmatprep.subr.bf16.mxu0 0
  %189 = vmatpush1.bf16.msra.mxu0 %v151
  %190 = vmatprep.subr.bf16.mxu0 0
  %191 = vmatpush1.bf16.msra.mxu0 %v152
  %192 = vmatprep.subr.bf16.mxu0 0
  %193 = vmatpush1.bf16.msra.mxu0 %v153
  %194 = vmatprep.subr.bf16.mxu0 0
  %195 = vmatpush1.bf16.msra.mxu0 %v154
  %196 = vmatprep.subr.bf16.mxu0 0
  %197 = vmatpush1.bf16.msra.mxu0 %v155
  %198 = vmatprep.subr.bf16.mxu0 0
  %199 = vmatpush1.bf16.msra.mxu0 %v156
  %200 = vmatprep.subr.bf16.mxu0 0
  %201 = vmatpush1.bf16.msra.mxu0 %v157
  %202 = vmatprep.subr.bf16.mxu0 0
  %203 = vmatpush1.bf16.msra.mxu0 %v158
  %204 = vmatprep.subr.bf16.mxu0 0
  %205 = vmatpush1.bf16.msra.mxu0 %v159
  %206 = vmatprep.subr.bf16.mxu0 0
  %207 = vmatpush1.bf16.msra.mxu0 %v160
  %208 = vmatprep.subr.bf16.mxu0 0
  %209 = vmatpush1.bf16.msra.mxu0 %v161
  %210 = vmatprep.mubr.bf16.mxu0 %v75
  %211 = vmatmul.mubr.bf16.gmra.mrb[0].mxu0 %v74
  %v212 = vpop.f32.mrb[0].mxu0
  %v213 = vadd.f32 0.0, %v212
  %v214 = vpop.f32.mrb[0].mxu0
  %v215 = vpop.f32.mrb[0].mxu0
  %v216 = vadd.f32 0.0, %v215
  %v217 = vpop.f32.mrb[0].mxu0
  %218 = vmatprep.mubr.bf16.mxu0 %v77
  %219 = vmatmul.mubr.bf16.gmra.mrb[0].mxu0 %v76
  %v220 = vpop.f32.mrb[0].mxu0
  %v221 = vadd.f32 0.0, %v220
  %v222 = vpop.f32.mrb[0].mxu0
  %v223 = vpop.f32.mrb[0].mxu0
  %v224 = vadd.f32 0.0, %v223
  %v225 = vpop.f32.mrb[0].mxu0
  %226 = vdwg.mxu0
  %v227 = vadd.f32 %v22, %v213
  %v228 = vadd.f32 %v23, %v216
  %v229 = vadd.f32 %v24, %v221
  %v230 = vadd.f32 %v25, %v224
  %231 = vst [vmem:[#allocation2] sm:$0xff] %v227
  %232 = vst [vmem:[#allocation2 + $0x8] sm:$0xff] %v228
  %233 = vst [vmem:[#allocation2 + $0x10] sm:$0xff] %v229
  %234 = vst [vmem:[#allocation2 + $0x18] sm:$0xff] %v230
  // Predicated region
  $region14: #{_lambda_.11} parent=0 // pred_check
    %p235 = pneg %p14
  $region15: #{_lambda_.11} parent=0 // pred_check_branch
    %237 = sbr.rel (%p235) target = $region17
  $region16: #{_lambda_.11} parent=0 // pred_region
    %v238 = vld [vmem:[#allocation2] sm:$0xff]
    %v239 = vld [vmem:[#allocation2 + $0x8] sm:$0xff]
    %v240 = vld [vmem:[#allocation2 + $0x10] sm:$0xff]
    %v241 = vld [vmem:[#allocation2 + $0x18] sm:$0xff]
    %v242 = vadd.f32 %v238, %v239
    %v243 = vadd.f32 %v242, %v240
    %v244 = vadd.f32 %v243, %v241
    %v245 = vrot.slane %v244, 4
    %v246 = vadd.f32 %v244, %v245
    %v247 = vrot.slane %v246, 2
    %v248 = vadd.f32 %v246, %v247
    %v249 = vrot.slane %v248, 1
    %v250 = vadd.f32 %v248, %v249
    %v251 = vmul.f32 %v238, %v238
    %v252 = vmul.f32 %v239, %v239
    %v253 = vmul.f32 %v240, %v240
    %v254 = vmul.f32 %v241, %v241
    %v255 = vadd.f32 %v251, %v252
    %v256 = vadd.f32 %v255, %v253
    %v257 = vadd.f32 %v256, %v254
    %v258 = vrot.slane %v257, 4
    %v259 = vadd.f32 %v257, %v258
    %v260 = vrot.slane %v259, 2
    %v261 = vadd.f32 %v259, %v260
    %v262 = vrot.slane %v261, 1
    %v263 = vadd.f32 %v261, %v262
    %v264 = vlaneseq
    %v265 = vshrl.u32 %v264, 7
    %vm266 = vcmp.eq.s32.totalorder %v265, 0
    %vm267 = vcmp.eq.s32.totalorder %v265, 1
    %v268 = vsel %vm267, %v263, 0.0
    %v269 = vsel %vm266, %v250, %v268
    %270 = vst [vmem:[%s3] sm:$0xff] %v269
    %v271 = vpack.c.bf16 %v239, %v238
    %v272 = vpack.c.bf16 %v241, %v240
    %v275 = vunpack.c.l.b16 %v271
    %v276 = vunpack.c.h.b16 %v271
    %v277 = vunpack.c.l.b16 %v272
    %v278 = vunpack.c.h.b16 %v272
    %v279 = vpack.c.b16 %v275, %v275
    %v280 = vpack.c.b16 %v276, %v276
    %v281 = vpack.c.b16 %v277, %v277
    %v282 = vpack.c.b16 %v278, %v278
    %287 = vst [vmem:[%s2] sm:$0xf] %v279
    %288 = vst [vmem:[%s2 + $0x4] sm:$0xf] %v280
    %289 = vst [vmem:[%s2 + $0x8] sm:$0xf] %v281
    %290 = vst [vmem:[%s2 + $0xc] sm:$0xf] %v282
  $region17: #{_lambda_.11} parent=0 // pred_fallthru
    _
  // Predicated region
  $region18: #{_lambda_.11} parent=0 // pred_check
    _
  $region19: #{_lambda_.11} parent=0 // pred_check_branch
    %292 = sbr.rel (0) target = $region21
  $region20: #{_lambda_.11} parent=0 // pred_region
    _
  $region21: #{_lambda_.11} parent=0 // pred_fallthru
    _
  // Predicated region
  $region22: #{_lambda_.11} parent=0 // pred_check
    _
  $region23: #{_lambda_.11} parent=0 // pred_check_branch
    %294 = sbr.rel (0) target = $region25
  $region24: #{_lambda_.11} parent=0 // pred_region
    _
  $region25: #{_lambda_.11} parent=0 // pred_fallthru
    _
  // Predicated region
  $region26: #{_lambda_.11} parent=0 // pred_check
    _
  $region27: #{_lambda_.11} parent=0 // pred_check_branch
    %296 = sbr.rel (0) target = $region29
  $region28: #{_lambda_.11} parent=0 // pred_region
    _
  $region29: #{_lambda_.11} parent=0 // pred_fallthru
    _
  // Predicated region
  $region30: #{_lambda_.11} parent=0 // pred_check
    _
  $region31: #{_lambda_.11} parent=0 // pred_check_branch
    %298 = sbr.rel (0) target = $region33
  $region32: #{_lambda_.11} parent=0 // pred_region
    _
  $region33: #{_lambda_.11} parent=0 // pred_fallthru
    _

// kernel: _lambda_.12
$region0: #{_lambda_.12}
  #allocation0 [shape = 'u32[]', space=smem, size = 0x4, offset = 0x4, fixed_abs, tag = 'smem constant byte address 0x4 - core index']
  #allocation1 [shape = 'u32[144,128]{1,0:T(1,128)}', space=vmem, size = 0x12000, scoped, tag = 'internal scratch']
  %s0 = inlined_call_operand.vmem [shape: bf16[32,128], index: 0, kind: input, shape index: {}]
  %s1 = inlined_call_operand.vmem [shape: f32[1,128], index: 1, kind: input, shape index: {}]
  %s2 = inlined_call_operand.vmem [shape: f32[1,128], index: 2, kind: input, shape index: {}]
  %s3 = inlined_call_operand.vmem [shape: bf16[32,128], index: 3, kind: output, shape index: {}]
  %s4 = sld [smem:[#allocation0]]
  $region22: #{_lambda_.12} parent=0
    _
  %s6 = ssub.s32 1, %s4
  %s7 = scalar_select 0, %s6, %s4
  // Predicated region
  $region2: #{_lambda_.12} parent=0 // pred_check
    _
  $region3: #{_lambda_.12} parent=0 // pred_check_branch
    %9 = sbr.rel (0) target = $region5
  $region4: #{_lambda_.12} parent=0 // pred_region
    _
  $region5: #{_lambda_.12} parent=0 // pred_fallthru
    _
  // Predicated region
  $region6: #{_lambda_.12} parent=0 // pred_check
    _
  $region7: #{_lambda_.12} parent=0 // pred_check_branch
    %11 = sbr.rel (0) target = $region9
  $region8: #{_lambda_.12} parent=0 // pred_region
    _
  $region9: #{_lambda_.12} parent=0 // pred_fallthru
    _
  // Predicated region
  $region10: #{_lambda_.12} parent=0 // pred_check
    _
  $region11: #{_lambda_.12} parent=0 // pred_check_branch
    %13 = sbr.rel (0) target = $region13
  $region12: #{_lambda_.12} parent=0 // pred_region
    _
  $region13: #{_lambda_.12} parent=0 // pred_fallthru
    _
  %v14 = vld [vmem:[%s0] sm:$0xf]
  %v15 = vld [vmem:[%s0 + $0x4] sm:$0xf]
  %v16 = vld [vmem:[%s0 + $0x8] sm:$0xf]
  %v17 = vld [vmem:[%s0 + $0xc] sm:$0xf]
  %v18 = vunpack.c.l.bf16 %v14
  %v19 = vunpack.c.l.bf16 %v15
  %v20 = vunpack.c.l.bf16 %v16
  %v21 = vunpack.c.l.bf16 %v17
  %v22 = vld [vmem:[%s1] sm:$0x1]
  %v24 = vlaneseq
  %v25 = vshrl.u32 %v24, 7
  %v26 = vsub.s32 0, %v25
  %v27 = vrot.slane %v22, %v26
  %v29 = vmul.f32 %v18, %v27
  %v30 = vmul.f32 %v19, %v27
  %v31 = vmul.f32 %v20, %v27
  %v32 = vmul.f32 %v21, %v27
  %v33 = vld [vmem:[%s2] sm:$0x1]
  %v35 = vlaneseq
  %v36 = vshrl.u32 %v35, 7
  %v37 = vsub.s32 0, %v36
  %v38 = vrot.slane %v33, %v37
  %v40 = vadd.f32 %v29, %v38
  %v41 = vadd.f32 %v30, %v38
  %v42 = vadd.f32 %v31, %v38
  %v43 = vadd.f32 %v32, %v38
  %vm44 = vcmp.ge.f32.partialorder %v40, 0.0
  %vm45 = vcmp.ge.f32.partialorder %v41, 0.0
  %vm46 = vcmp.ge.f32.partialorder %v42, 0.0
  %vm47 = vcmp.ge.f32.partialorder %v43, 0.0
  %v48 = vmul.f32 %v40, 0.2
  %v49 = vmul.f32 %v41, 0.2
  %v50 = vmul.f32 %v42, 0.2
  %v51 = vmul.f32 %v43, 0.2
  %v52 = vsel %vm44, %v40, %v48
  %v53 = vsel %vm45, %v41, %v49
  %v54 = vsel %vm46, %v42, %v50
  %v55 = vsel %vm47, %v43, %v51
  %v56 = vpack.c.bf16 %v53, %v52
  %v57 = vpack.c.bf16 %v55, %v54
  %v60 = vunpack.c.l.b16 %v56
  %v61 = vunpack.c.h.b16 %v56
  %v62 = vunpack.c.l.b16 %v57
  %v63 = vunpack.c.h.b16 %v57
  %v64 = vpack.c.b16 %v60, %v60
  %v65 = vpack.c.b16 %v61, %v61
  %v66 = vpack.c.b16 %v62, %v62
  %v67 = vpack.c.b16 %v63, %v63
  %72 = vst [vmem:[%s3] sm:$0xf] %v64
  %73 = vst [vmem:[%s3 + $0x4] sm:$0xf] %v65
  %74 = vst [vmem:[%s3 + $0x8] sm:$0xf] %v66
  %75 = vst [vmem:[%s3 + $0xc] sm:$0xf] %v67
  // Predicated region
  $region14: #{_lambda_.12} parent=0 // pred_check
    _
  $region15: #{_lambda_.12} parent=0 // pred_check_branch
    %77 = sbr.rel (0) target = $region17
  $region16: #{_lambda_.12} parent=0 // pred_region
    _
  $region17: #{_lambda_.12} parent=0 // pred_fallthru
    _
  // Predicated region
  $region18: #{_lambda_.12} parent=0 // pred_check
    _
  $region19: #{_lambda_.12} parent=0 // pred_check_branch
    %79 = sbr.rel (0) target = $region21
  $region20: #{_lambda_.12} parent=0 // pred_region
    _
  $region21: #{_lambda_.12} parent=0 // pred_fallthru
    _

// kernel: _lambda_.14
$region0: #{_lambda_.14}
  #allocation0 [shape = 'u32[]', space=smem, size = 0x4, offset = 0x4, fixed_abs, tag = 'smem constant byte address 0x4 - core index']
  #allocation1 [shape = 'u32[144,128]{1,0:T(1,128)}', space=vmem, size = 0x12000, scoped, tag = 'internal scratch']
  %s0 = inlined_call_operand.vmem [shape: bf16[24,128], index: 0, kind: input, shape index: {}]
  %s1 = inlined_call_operand.vmem [shape: f32[1,128], index: 1, kind: input, shape index: {}]
  %s2 = inlined_call_operand.vmem [shape: f32[1,128], index: 2, kind: input, shape index: {}]
  %s3 = inlined_call_operand.vmem [shape: bf16[24,128], index: 3, kind: output, shape index: {}]
  %s4 = sld [smem:[#allocation0]]
  $region22: #{_lambda_.14} parent=0
    _
  %s6 = ssub.s32 1, %s4
  %s7 = scalar_select 0, %s6, %s4
  // Predicated region
  $region2: #{_lambda_.14} parent=0 // pred_check
    _
  $region3: #{_lambda_.14} parent=0 // pred_check_branch
    %9 = sbr.rel (0) target = $region5
  $region4: #{_lambda_.14} parent=0 // pred_region
    _
  $region5: #{_lambda_.14} parent=0 // pred_fallthru
    _
  // Predicated region
  $region6: #{_lambda_.14} parent=0 // pred_check
    _
  $region7: #{_lambda_.14} parent=0 // pred_check_branch
    %11 = sbr.rel (0) target = $region9
  $region8: #{_lambda_.14} parent=0 // pred_region
    _
  $region9: #{_lambda_.14} parent=0 // pred_fallthru
    _
  // Predicated region
  $region10: #{_lambda_.14} parent=0 // pred_check
    _
  $region11: #{_lambda_.14} parent=0 // pred_check_branch
    %13 = sbr.rel (0) target = $region13
  $region12: #{_lambda_.14} parent=0 // pred_region
    _
  $region13: #{_lambda_.14} parent=0 // pred_fallthru
    _
  %v14 = vld [vmem:[%s0] sm:$0xf]
  %v15 = vld [vmem:[%s0 + $0x4] sm:$0xf]
  %v16 = vld [vmem:[%s0 + $0x8] sm:$0xf]
  %v17 = vunpack.c.l.bf16 %v14
  %v18 = vunpack.c.l.bf16 %v15
  %v19 = vunpack.c.l.bf16 %v16
  %v20 = vld [vmem:[%s1] sm:$0x1]
  %v22 = vlaneseq
  %v23 = vshrl.u32 %v22, 7
  %v24 = vsub.s32 0, %v23
  %v25 = vrot.slane %v20, %v24
  %v27 = vmul.f32 %v17, %v25
  %v28 = vmul.f32 %v18, %v25
  %v29 = vmul.f32 %v19, %v25
  %v30 = vld [vmem:[%s2] sm:$0x1]
  %v32 = vlaneseq
  %v33 = vshrl.u32 %v32, 7
  %v34 = vsub.s32 0, %v33
  %v35 = vrot.slane %v30, %v34
  %v37 = vadd.f32 %v27, %v35
  %v38 = vadd.f32 %v28, %v35
  %v39 = vadd.f32 %v29, %v35
  %vm40 = vcmp.ge.f32.partialorder %v37, 0.0
  %vm41 = vcmp.ge.f32.partialorder %v38, 0.0
  %vm42 = vcmp.ge.f32.partialorder %v39, 0.0
  %v43 = vmul.f32 %v37, 0.2
  %v44 = vmul.f32 %v38, 0.2
  %v45 = vmul.f32 %v39, 0.2
  %v46 = vsel %vm40, %v37, %v43
  %v47 = vsel %vm41, %v38, %v44
  %v48 = vsel %vm42, %v39, %v45
  %v49 = vpack.c.bf16 %v47, %v46
  %v50 = vpack.c.bf16 %v48, %v48
  %v53 = vunpack.c.l.b16 %v49
  %v54 = vunpack.c.h.b16 %v49
  %v55 = vunpack.c.l.b16 %v50
  %v56 = vpack.c.b16 %v53, %v53
  %v57 = vpack.c.b16 %v54, %v54
  %v58 = vpack.c.b16 %v55, %v55
  %62 = vst [vmem:[%s3] sm:$0xf] %v56
  %63 = vst [vmem:[%s3 + $0x4] sm:$0xf] %v57
  %64 = vst [vmem:[%s3 + $0x8] sm:$0xf] %v58
  // Predicated region
  $region14: #{_lambda_.14} parent=0 // pred_check
    _
  $region15: #{_lambda_.14} parent=0 // pred_check_branch
    %66 = sbr.rel (0) target = $region17
  $region16: #{_lambda_.14} parent=0 // pred_region
    _
  $region17: #{_lambda_.14} parent=0 // pred_fallthru
    _
  // Predicated region
  $region18: #{_lambda_.14} parent=0 // pred_check
    _
  $region19: #{_lambda_.14} parent=0 // pred_check_branch
    %68 = sbr.rel (0) target = $region21
  $region20: #{_lambda_.14} parent=0 // pred_region
    _
  $region21: #{_lambda_.14} parent=0 // pred_fallthru
    _

// kernel: _lambda_.13
$region0: #{_lambda_.13}
  #allocation0 [shape = 'u32[]', space=smem, size = 0x4, offset = 0x4, fixed_abs, tag = 'smem constant byte address 0x4 - core index']
  #allocation1 [shape = 'u32[144,128]{1,0:T(1,128)}', space=vmem, size = 0x12000, scoped, tag = 'internal scratch']
  #allocation2 [shape = 'f32[24,128]{1,0:T(8,128)}', space=vmem, size = 0x3000, scoped, tag = 'scratch operand']
  %s0 = inlined_call_operand.vmem [shape: bf16[24,512], index: 0, kind: input, shape index: {}]
  %s1 = inlined_call_operand.vmem [shape: bf16[512,128], index: 1, kind: input, shape index: {}]
  %s2 = inlined_call_operand.vmem [shape: bf16[24,128], index: 2, kind: output, shape index: {0}]
  %s3 = inlined_call_operand.vmem [shape: f32[8,128], index: 3, kind: output, shape index: {1}]
  %4 = xla_tuple %s2, %s3
  %s5 = sld [smem:[#allocation0]]
  $region34: #{_lambda_.13} parent=0
    _
  %s7 = ssub.s32 1, %s5
  %s8 = scalar_select 0, %s7, %s5
  // Predicated region
  $region2: #{_lambda_.13} parent=0 // pred_check
    _
  $region3: #{_lambda_.13} parent=0 // pred_check_branch
    %10 = sbr.rel (0) target = $region5
  $region4: #{_lambda_.13} parent=0 // pred_region
    _
  $region5: #{_lambda_.13} parent=0 // pred_fallthru
    _
  // Predicated region
  $region6: #{_lambda_.13} parent=0 // pred_check
    _
  $region7: #{_lambda_.13} parent=0 // pred_check_branch
    %12 = sbr.rel (0) target = $region9
  $region8: #{_lambda_.13} parent=0 // pred_region
    _
  $region9: #{_lambda_.13} parent=0 // pred_fallthru
    _
  %p14 = scmp.eq.s32.totalorder 0, 0
  // Predicated region
  $region10: #{_lambda_.13} parent=0 // pred_check
    %p15 = pneg %p14
  $region11: #{_lambda_.13} parent=0 // pred_check_branch
    %17 = sbr.rel (%p15) target = $region13
  $region12: #{_lambda_.13} parent=0 // pred_region
    %18 = vst [vmem:[#allocation2] sm:$0xff] 0.0
    %19 = vst [vmem:[#allocation2 + $0x8] sm:$0xff] 0.0
    %20 = vst [vmem:[#allocation2 + $0x10] sm:$0xff] 0.0
  $region13: #{_lambda_.13} parent=0 // pred_fallthru
    _
  %v21 = vld [vmem:[#allocation2] sm:$0xff]
  %v22 = vld [vmem:[#allocation2 + $0x8] sm:$0xff]
  %v23 = vld [vmem:[#allocation2 + $0x10] sm:$0xff]
  %v24 = vld [vmem:[%s0] sm:$0xff]
  %v25 = vld [vmem:[%s0 + $0x8] sm:$0xff]
  %v26 = vld [vmem:[%s0 + $0x10] sm:$0xff]
  %v27 = vld [vmem:[%s0 + $0x18] sm:$0xff]
  %v28 = vld [vmem:[%s0 + $0x20] sm:$0xff]
  %v29 = vld [vmem:[%s0 + $0x28] sm:$0xff]
  %v30 = vld [vmem:[%s1] sm:$0xf]
  %v31 = vld [vmem:[%s1 + $0x4] sm:$0xf]
  %v32 = vld [vmem:[%s1 + $0x8] sm:$0xf]
  %v33 = vld [vmem:[%s1 + $0xc] sm:$0xf]
  %v34 = vld [vmem:[%s1 + $0x10] sm:$0xf]
  %v35 = vld [vmem:[%s1 + $0x14] sm:$0xf]
  %v36 = vld [vmem:[%s1 + $0x18] sm:$0xf]
  %v37 = vld [vmem:[%s1 + $0x1c] sm:$0xf]
  %v38 = vld [vmem:[%s1 + $0x20] sm:$0xf]
  %v39 = vld [vmem:[%s1 + $0x24] sm:$0xf]
  %v40 = vld [vmem:[%s1 + $0x28] sm:$0xf]
  %v41 = vld [vmem:[%s1 + $0x2c] sm:$0xf]
  %v42 = vld [vmem:[%s1 + $0x30] sm:$0xf]
  %v43 = vld [vmem:[%s1 + $0x34] sm:$0xf]
  %v44 = vld [vmem:[%s1 + $0x38] sm:$0xf]
  %v45 = vld [vmem:[%s1 + $0x3c] sm:$0xf]
  %v46 = vld [vmem:[%s1 + $0x40] sm:$0xf]
  %v47 = vld [vmem:[%s1 + $0x44] sm:$0xf]
  %v48 = vld [vmem:[%s1 + $0x48] sm:$0xf]
  %v49 = vld [vmem:[%s1 + $0x4c] sm:$0xf]
  %v50 = vld [vmem:[%s1 + $0x50] sm:$0xf]
  %v51 = vld [vmem:[%s1 + $0x54] sm:$0xf]
  %v52 = vld [vmem:[%s1 + $0x58] sm:$0xf]
  %v53 = vld [vmem:[%s1 + $0x5c] sm:$0xf]
  %v54 = vld [vmem:[%s1 + $0x60] sm:$0xf]
  %v55 = vld [vmem:[%s1 + $0x64] sm:$0xf]
  %v56 = vld [vmem:[%s1 + $0x68] sm:$0xf]
  %v57 = vld [vmem:[%s1 + $0x6c] sm:$0xf]
  %v58 = vld [vmem:[%s1 + $0x70] sm:$0xf]
  %v59 = vld [vmem:[%s1 + $0x74] sm:$0xf]
  %v60 = vld [vmem:[%s1 + $0x78] sm:$0xf]
  %v61 = vld [vmem:[%s1 + $0x7c] sm:$0xf]
  %v62 = vld [vmem:[%s1 + $0x80] sm:$0xf]
  %v63 = vld [vmem:[%s1 + $0x84] sm:$0xf]
  %v64 = vld [vmem:[%s1 + $0x88] sm:$0xf]
  %v65 = vld [vmem:[%s1 + $0x8c] sm:$0xf]
  %v66 = vld [vmem:[%s1 + $0x90] sm:$0xf]
  %v67 = vld [vmem:[%s1 + $0x94] sm:$0xf]
  %v68 = vld [vmem:[%s1 + $0x98] sm:$0xf]
  %v69 = vld [vmem:[%s1 + $0x9c] sm:$0xf]
  %v70 = vld [vmem:[%s1 + $0xa0] sm:$0xf]
  %v71 = vld [vmem:[%s1 + $0xa4] sm:$0xf]
  %v72 = vld [vmem:[%s1 + $0xa8] sm:$0xf]
  %v73 = vld [vmem:[%s1 + $0xac] sm:$0xf]
  %v74 = vld [vmem:[%s1 + $0xb0] sm:$0xf]
  %v75 = vld [vmem:[%s1 + $0xb4] sm:$0xf]
  %v76 = vld [vmem:[%s1 + $0xb8] sm:$0xf]
  %v77 = vld [vmem:[%s1 + $0xbc] sm:$0xf]
  %v78 = vld [vmem:[%s1 + $0xc0] sm:$0xf]
  %v79 = vld [vmem:[%s1 + $0xc4] sm:$0xf]
  %v80 = vld [vmem:[%s1 + $0xc8] sm:$0xf]
  %v81 = vld [vmem:[%s1 + $0xcc] sm:$0xf]
  %v82 = vld [vmem:[%s1 + $0xd0] sm:$0xf]
  %v83 = vld [vmem:[%s1 + $0xd4] sm:$0xf]
  %v84 = vld [vmem:[%s1 + $0xd8] sm:$0xf]
  %v85 = vld [vmem:[%s1 + $0xdc] sm:$0xf]
  %v86 = vld [vmem:[%s1 + $0xe0] sm:$0xf]
  %v87 = vld [vmem:[%s1 + $0xe4] sm:$0xf]
  %v88 = vld [vmem:[%s1 + $0xe8] sm:$0xf]
  %v89 = vld [vmem:[%s1 + $0xec] sm:$0xf]
  %v90 = vld [vmem:[%s1 + $0xf0] sm:$0xf]
  %v91 = vld [vmem:[%s1 + $0xf4] sm:$0xf]
  %v92 = vld [vmem:[%s1 + $0xf8] sm:$0xf]
  %v93 = vld [vmem:[%s1 + $0xfc] sm:$0xf]
  %v100 = vunpack.c.l.b16 %v24
  %v101 = vunpack.c.h.b16 %v24
  %v102 = vunpack.c.l.b16 %v25
  %v103 = vunpack.c.h.b16 %v25
  %v104 = vunpack.c.l.b16 %v26
  %v105 = vunpack.c.h.b16 %v26
  %v106 = vunpack.c.l.b16 %v27
  %v107 = vunpack.c.h.b16 %v27
  %v108 = vunpack.c.l.b16 %v28
  %v109 = vunpack.c.h.b16 %v28
  %v110 = vunpack.c.l.b16 %v29
  %v111 = vunpack.c.h.b16 %v29
  %v112 = vpack.c.b16 %v104, %v100
  %v113 = vpack.c.b16 %v105, %v101
  %v114 = vpack.c.b16 %v106, %v102
  %v115 = vpack.c.b16 %v107, %v103
  %v116 = vpack.c.b16 %v108, %v108
  %v117 = vpack.c.b16 %v109, %v109
  %v118 = vpack.c.b16 %v110, %v110
  %v119 = vpack.c.b16 %v111, %v111
  %v192 = vunpack.c.l.b16 %v30
  %v193 = vunpack.c.l.b16 %v31
  %v194 = vunpack.c.l.b16 %v32
  %v195 = vunpack.c.l.b16 %v33
  %v196 = vunpack.c.l.b16 %v34
  %v197 = vunpack.c.l.b16 %v35
  %v198 = vunpack.c.l.b16 %v36
  %v199 = vunpack.c.l.b16 %v37
  %v200 = vunpack.c.l.b16 %v38
  %v201 = vunpack.c.l.b16 %v39
  %v202 = vunpack.c.l.b16 %v40
  %v203 = vunpack.c.l.b16 %v41
  %v204 = vunpack.c.l.b16 %v42
  %v205 = vunpack.c.l.b16 %v43
  %v206 = vunpack.c.l.b16 %v44
  %v207 = vunpack.c.l.b16 %v45
  %v208 = vunpack.c.l.b16 %v46
  %v209 = vunpack.c.l.b16 %v47
  %v210 = vunpack.c.l.b16 %v48
  %v211 = vunpack.c.l.b16 %v49
  %v212 = vunpack.c.l.b16 %v50
  %v213 = vunpack.c.l.b16 %v51
  %v214 = vunpack.c.l.b16 %v52
  %v215 = vunpack.c.l.b16 %v53
  %v216 = vunpack.c.l.b16 %v54
  %v217 = vunpack.c.l.b16 %v55
  %v218 = vunpack.c.l.b16 %v56
  %v219 = vunpack.c.l.b16 %v57
  %v220 = vunpack.c.l.b16 %v58
  %v221 = vunpack.c.l.b16 %v59
  %v222 = vunpack.c.l.b16 %v60
  %v223 = vunpack.c.l.b16 %v61
  %v224 = vunpack.c.l.b16 %v62
  %v225 = vunpack.c.l.b16 %v63
  %v226 = vunpack.c.l.b16 %v64
  %v227 = vunpack.c.l.b16 %v65
  %v228 = vunpack.c.l.b16 %v66
  %v229 = vunpack.c.l.b16 %v67
  %v230 = vunpack.c.l.b16 %v68
  %v231 = vunpack.c.l.b16 %v69
  %v232 = vunpack.c.l.b16 %v70
  %v233 = vunpack.c.l.b16 %v71
  %v234 = vunpack.c.l.b16 %v72
  %v235 = vunpack.c.l.b16 %v73
  %v236 = vunpack.c.l.b16 %v74
  %v237 = vunpack.c.l.b16 %v75
  %v238 = vunpack.c.l.b16 %v76
  %v239 = vunpack.c.l.b16 %v77
  %v240 = vunpack.c.l.b16 %v78
  %v241 = vunpack.c.l.b16 %v79
  %v242 = vunpack.c.l.b16 %v80
  %v243 = vunpack.c.l.b16 %v81
  %v244 = vunpack.c.l.b16 %v82
  %v245 = vunpack.c.l.b16 %v83
  %v246 = vunpack.c.l.b16 %v84
  %v247 = vunpack.c.l.b16 %v85
  %v248 = vunpack.c.l.b16 %v86
  %v249 = vunpack.c.l.b16 %v87
  %v250 = vunpack.c.l.b16 %v88
  %v251 = vunpack.c.l.b16 %v89
  %v252 = vunpack.c.l.b16 %v90
  %v253 = vunpack.c.l.b16 %v91
  %v254 = vunpack.c.l.b16 %v92
  %v255 = vunpack.c.l.b16 %v93
  %v256 = vpack.c.b16 %v193, %v192
  %v257 = vpack.c.b16 %v195, %v194
  %v258 = vpack.c.b16 %v197, %v196
  %v259 = vpack.c.b16 %v199, %v198
  %v260 = vpack.c.b16 %v201, %v200
  %v261 = vpack.c.b16 %v203, %v202
  %v262 = vpack.c.b16 %v205, %v204
  %v263 = vpack.c.b16 %v207, %v206
  %v264 = vpack.c.b16 %v209, %v208
  %v265 = vpack.c.b16 %v211, %v210
  %v266 = vpack.c.b16 %v213, %v212
  %v267 = vpack.c.b16 %v215, %v214
  %v268 = vpack.c.b16 %v217, %v216
  %v269 = vpack.c.b16 %v219, %v218
  %v270 = vpack.c.b16 %v221, %v220
  %v271 = vpack.c.b16 %v223, %v222
  %v272 = vpack.c.b16 %v225, %v224
  %v273 = vpack.c.b16 %v227, %v226
  %v274 = vpack.c.b16 %v229, %v228
  %v275 = vpack.c.b16 %v231, %v230
  %v276 = vpack.c.b16 %v233, %v232
  %v277 = vpack.c.b16 %v235, %v234
  %v278 = vpack.c.b16 %v237, %v236
  %v279 = vpack.c.b16 %v239, %v238
  %v280 = vpack.c.b16 %v241, %v240
  %v281 = vpack.c.b16 %v243, %v242
  %v282 = vpack.c.b16 %v245, %v244
  %v283 = vpack.c.b16 %v247, %v246
  %v284 = vpack.c.b16 %v249, %v248
  %v285 = vpack.c.b16 %v251, %v250
  %v286 = vpack.c.b16 %v253, %v252
  %v287 = vpack.c.b16 %v255, %v254
  %320 = vmatprep.subr.bf16.mxu0 0
  %321 = vmatpush1.bf16.msra.mxu0 %v256
  %322 = vmatprep.subr.bf16.mxu0 0
  %323 = vmatpush1.bf16.msra.mxu0 %v257
  %324 = vmatprep.subr.bf16.mxu0 0
  %325 = vmatpush1.bf16.msra.mxu0 %v258
  %326 = vmatprep.subr.bf16.mxu0 0
  %327 = vmatpush1.bf16.msra.mxu0 %v259
  %328 = vmatprep.subr.bf16.mxu0 0
  %329 = vmatpush1.bf16.msra.mxu0 %v260
  %330 = vmatprep.subr.bf16.mxu0 0
  %331 = vmatpush1.bf16.msra.mxu0 %v261
  %332 = vmatprep.subr.bf16.mxu0 0
  %333 = vmatpush1.bf16.msra.mxu0 %v262
  %334 = vmatprep.subr.bf16.mxu0 0
  %335 = vmatpush1.bf16.msra.mxu0 %v263
  %336 = vmatprep.subr.bf16.mxu0 0
  %337 = vmatpush1.bf16.msra.mxu0 %v264
  %338 = vmatprep.subr.bf16.mxu0 0
  %339 = vmatpush1.bf16.msra.mxu0 %v265
  %340 = vmatprep.subr.bf16.mxu0 0
  %341 = vmatpush1.bf16.msra.mxu0 %v266
  %342 = vmatprep.subr.bf16.mxu0 0
  %343 = vmatpush1.bf16.msra.mxu0 %v267
  %344 = vmatprep.subr.bf16.mxu0 0
  %345 = vmatpush1.bf16.msra.mxu0 %v268
  %346 = vmatprep.subr.bf16.mxu0 0
  %347 = vmatpush1.bf16.msra.mxu0 %v269
  %348 = vmatprep.subr.bf16.mxu0 0
  %349 = vmatpush1.bf16.msra.mxu0 %v270
  %350 = vmatprep.subr.bf16.mxu0 0
  %351 = vmatpush1.bf16.msra.mxu0 %v271
  %352 = vmatprep.mubr.bf16.mxu0 %v113
  %353 = vmatmul.mubr.bf16.gmra.mrb[0].mxu0 %v112
  %v354 = vpop.f32.mrb[0].mxu0
  %v355 = vadd.f32 0.0, %v354
  %v356 = vpop.f32.mrb[0].mxu0
  %v357 = vpop.f32.mrb[0].mxu0
  %v358 = vadd.f32 0.0, %v357
  %v359 = vpop.f32.mrb[0].mxu0
  %360 = vmatprep.mubr.bf16.mxu0 %v117
  %361 = vmatmul.mubr.bf16.gmra.mrb[0].mxu0 %v116
  %v362 = vpop.f32.mrb[0].mxu0
  %v363 = vadd.f32 0.0, %v362
  %v364 = vpop.f32.mrb[0].mxu0
  %v365 = vpop.f32.mrb[0].mxu0
  %v366 = vpop.f32.mrb[0].mxu0
  %367 = vdwg.mxu0
  %368 = vmatprep.subr.bf16.mxu0 0
  %369 = vmatpush1.bf16.msra.mxu0 %v272
  %370 = vmatprep.subr.bf16.mxu0 0
  %371 = vmatpush1.bf16.msra.mxu0 %v273
  %372 = vmatprep.subr.bf16.mxu0 0
  %373 = vmatpush1.bf16.msra.mxu0 %v274
  %374 = vmatprep.subr.bf16.mxu0 0
  %375 = vmatpush1.bf16.msra.mxu0 %v275
  %376 = vmatprep.subr.bf16.mxu0 0
  %377 = vmatpush1.bf16.msra.mxu0 %v276
  %378 = vmatprep.subr.bf16.mxu0 0
  %379 = vmatpush1.bf16.msra.mxu0 %v277
  %380 = vmatprep.subr.bf16.mxu0 0
  %381 = vmatpush1.bf16.msra.mxu0 %v278
  %382 = vmatprep.subr.bf16.mxu0 0
  %383 = vmatpush1.bf16.msra.mxu0 %v279
  %384 = vmatprep.subr.bf16.mxu0 0
  %385 = vmatpush1.bf16.msra.mxu0 %v280
  %386 = vmatprep.subr.bf16.mxu0 0
  %387 = vmatpush1.bf16.msra.mxu0 %v281
  %388 = vmatprep.subr.bf16.mxu0 0
  %389 = vmatpush1.bf16.msra.mxu0 %v282
  %390 = vmatprep.subr.bf16.mxu0 0
  %391 = vmatpush1.bf16.msra.mxu0 %v283
  %392 = vmatprep.subr.bf16.mxu0 0
  %393 = vmatpush1.bf16.msra.mxu0 %v284
  %394 = vmatprep.subr.bf16.mxu0 0
  %395 = vmatpush1.bf16.msra.mxu0 %v285
  %396 = vmatprep.subr.bf16.mxu0 0
  %397 = vmatpush1.bf16.msra.mxu0 %v286
  %398 = vmatprep.subr.bf16.mxu0 0
  %399 = vmatpush1.bf16.msra.mxu0 %v287
  %400 = vmatprep.mubr.bf16.mxu0 %v115
  %401 = vmatmul.mubr.bf16.gmra.mrb[0].mxu0 %v114
  %v402 = vpop.f32.mrb[0].mxu0
  %v403 = vadd.f32 %v355, %v402
  %v404 = vpop.f32.mrb[0].mxu0
  %v405 = vpop.f32.mrb[0].mxu0
  %v406 = vadd.f32 %v358, %v405
  %v407 = vpop.f32.mrb[0].mxu0
  %408 = vmatprep.mubr.bf16.mxu0 %v119
  %409 = vmatmul.mubr.bf16.gmra.mrb[0].mxu0 %v118
  %v410 = vpop.f32.mrb[0].mxu0
  %v411 = vadd.f32 %v363, %v410
  %v412 = vpop.f32.mrb[0].mxu0
  %v413 = vpop.f32.mrb[0].mxu0
  %v414 = vpop.f32.mrb[0].mxu0
  %415 = vdwg.mxu0
  %v416 = vadd.f32 %v21, %v403
  %v417 = vadd.f32 %v22, %v406
  %v418 = vadd.f32 %v23, %v411
  %419 = vst [vmem:[#allocation2] sm:$0xff] %v416
  %420 = vst [vmem:[#allocation2 + $0x8] sm:$0xff] %v417
  %421 = vst [vmem:[#allocation2 + $0x10] sm:$0xff] %v418
  // Predicated region
  $region14: #{_lambda_.13} parent=0 // pred_check
    %p422 = pneg %p14
  $region15: #{_lambda_.13} parent=0 // pred_check_branch
    %424 = sbr.rel (%p422) target = $region17
  $region16: #{_lambda_.13} parent=0 // pred_region
    %v425 = vld [vmem:[#allocation2] sm:$0xff]
    %v426 = vld [vmem:[#allocation2 + $0x8] sm:$0xff]
    %v427 = vld [vmem:[#allocation2 + $0x10] sm:$0xff]
    %v428 = vadd.f32 %v425, %v426
    %v429 = vadd.f32 %v428, %v427
    %v430 = vrot.slane %v429, 4
    %v431 = vadd.f32 %v429, %v430
    %v432 = vrot.slane %v431, 2
    %v433 = vadd.f32 %v431, %v432
    %v434 = vrot.slane %v433, 1
    %v435 = vadd.f32 %v433, %v434
    %v436 = vmul.f32 %v425, %v425
    %v437 = vmul.f32 %v426, %v426
    %v438 = vmul.f32 %v427, %v427
    %v439 = vadd.f32 %v436, %v437
    %v440 = vadd.f32 %v439, %v438
    %v441 = vrot.slane %v440, 4
    %v442 = vadd.f32 %v440, %v441
    %v443 = vrot.slane %v442, 2
    %v444 = vadd.f32 %v442, %v443
    %v445 = vrot.slane %v444, 1
    %v446 = vadd.f32 %v444, %v445
    %v447 = vlaneseq
    %v448 = vshrl.u32 %v447, 7
    %vm449 = vcmp.eq.s32.totalorder %v448, 0
    %vm450 = vcmp.eq.s32.totalorder %v448, 1
    %v451 = vsel %vm450, %v446, 0.0
    %v452 = vsel %vm449, %v435, %v451
    %453 = vst [vmem:[%s3] sm:$0xff] %v452
    %v454 = vpack.c.bf16 %v426, %v425
    %v455 = vpack.c.bf16 %v427, %v427
    %v458 = vunpack.c.l.b16 %v454
    %v459 = vunpack.c.h.b16 %v454
    %v460 = vunpack.c.l.b16 %v455
    %v461 = vpack.c.b16 %v458, %v458
    %v462 = vpack.c.b16 %v459, %v459
    %v463 = vpack.c.b16 %v460, %v460
    %467 = vst [vmem:[%s2] sm:$0xf] %v461
    %468 = vst [vmem:[%s2 + $0x4] sm:$0xf] %v462
    %469 = vst [vmem:[%s2 + $0x8] sm:$0xf] %v463
  $region17: #{_lambda_.13} parent=0 // pred_fallthru
    _
  // Predicated region
  $region18: #{_lambda_.13} parent=0 // pred_check
    _
  $region19: #{_lambda_.13} parent=0 // pred_check_branch
    %471 = sbr.rel (0) target = $region21
  $region20: #{_lambda_.13} parent=0 // pred_region
    _
  $region21: #{_lambda_.13} parent=0 // pred_fallthru
    _
  // Predicated region
  $region22: #{_lambda_.13} parent=0 // pred_check
    _
  $region23: #{_lambda_.13} parent=0 // pred_check_branch
    %473 = sbr.rel (0) target = $region25
  $region24: #{_lambda_.13} parent=0 // pred_region
    _
  $region25: #{_lambda_.13} parent=0 // pred_fallthru
    _
  // Predicated region
  $region26: #{_lambda_.13} parent=0 // pred_check
    _
  $region27: #{_lambda_.13} parent=0 // pred_check_branch
    %475 = sbr.rel (0) target = $region29
  $region28: #{_lambda_.13} parent=0 // pred_region
    _
  $region29: #{_lambda_.13} parent=0 // pred_fallthru
    _
  // Predicated region
  $region30: #{_lambda_.13} parent=0 // pred_check
    _
  $region31: #{_lambda_.13} parent=0 // pred_check_branch
    %477 = sbr.rel (0) target = $region33
  $region32: #{_lambda_.13} parent=0 // pred_region
    _
  $region33: #{_lambda_.13} parent=0 // pred_fallthru
    _

// kernel: _lambda_.15
$region0: #{_lambda_.15}
  #allocation0 [shape = 'u32[]', space=smem, size = 0x4, offset = 0x4, fixed_abs, tag = 'smem constant byte address 0x4 - core index']
  #allocation1 [shape = 'u32[144,128]{1,0:T(1,128)}', space=vmem, size = 0x12000, scoped, tag = 'internal scratch']
  #allocation2 [shape = 'f32[8,128]{1,0:T(8,128)}', space=vmem, size = 0x1000, scoped, tag = 'scratch operand']
  %s0 = inlined_call_operand.vmem [shape: bf16[8,1024], index: 0, kind: input, shape index: {}]
  %s1 = inlined_call_operand.vmem [shape: bf16[1024,128], index: 1, kind: input, shape index: {}]
  %s2 = inlined_call_operand.vmem [shape: f32[1,128], index: 2, kind: input, shape index: {}]
  %s3 = inlined_call_operand.vmem [shape: f32[8,128], index: 3, kind: output, shape index: {}]
  %s4 = sld [smem:[#allocation0]]
  $region53: #{_lambda_.15} parent=0
    _
  %s6 = ssub.s32 1, %s4
  %s7 = scalar_select 0, %s6, %s4
  loop: start=0, step=1, limit=4
  $region2: #{_lambda_.15} parent=0 // loop_pre_header
    _
  $region3: #{_lambda_.15} parent=0 // loop_header
    %s9 = sphi 0, %s13
    %p10 = scmp.ge.s32.totalorder %s9, 4
    %s16 = sphi 0, %s35
    %s17 = sphi 0, %s31
    %s18 = sphi 0, %s27
    %s19 = sphi 0, %s16
    %s20 = sphi 0, %s17
    %s21 = sphi 0, %s18
    %s22 = sphi 0, %s19
    %s23 = sphi 0, %s20
    %s24 = sphi 0, %s21
    %s40 = sphi 0, %s42
    %s43 = sphi 0, %s40
    %s44 = sphi 0, %s43
    %s60 = sphi 0, %s44
    %s68 = sphi 0, %s70
    %s71 = sphi 0, %s68
    %s72 = sphi 0, %s71
    %s88 = sphi 0, %s72
    %s94 = sphi 0, %s96
    %s97 = sphi 0, %s94
    %s98 = sphi 0, %s97
    %s114 = sphi 0, %s98
    %s122 = sphi 0, %s124
    %s125 = sphi 0, %s122
    %s126 = sphi 0, %s125
    %s142 = sphi 0, %s126
  $region4: #{_lambda_.15} parent=0 // loop_header_branch
    %12 = sbr.rel (%p10) target = $region8
  $region5: #{_lambda_.15} parent=0 // loop_body
    %s14 = ssub.s32 %s9, 1
    %s15 = ssub.s32 %s9, 2
    %s25 = sadd.s32 1, %s18
    %p26 = scmp.ge.s32.totalorder %s25, 2
    %s27 = scalar_select %p26, 0, %s25
    %s28 = sadd.s32 1, %s17
    %s29 = scalar_select %p26, %s28, %s17
    %p30 = scmp.ge.s32.totalorder %s29, 1
    %s31 = scalar_select %p30, 0, %s29
    %s32 = sadd.s32 1, %s16
    %s33 = scalar_select %p30, %s32, %s16
    %p34 = scmp.ge.s32.totalorder %s33, 1
    %s35 = scalar_select %p34, 0, %s33
    %s36 = ssub.s32 %s16, %s35
    %s37 = ssub.s32 %s18, %s27
    %s38 = sor.u32 %s36, %s37
    %p39 = scmp.eq.s32.totalorder %s38, 0
    %s41 = sadd.s32 %s40, 1
    %s42 = scalar_select %p39, %s40, %s41
    %p45 = pneg %p39
    %p46 = scmp.eq.s32.totalorder %s9, 1
    %p47 = por %p45, %p46
    %p48 = scmp.ne.s32.totalorder %s40, %s43
    %p49 = scmp.eq.s32.totalorder %s9, 0
    %p50 = por %p48, %p49
    %p51 = scmp.ne.s32.totalorder %s40, %s43
    %p52 = scmp.eq.s32.totalorder %s14, 1
    %p53 = por %p51, %p52
    %p54 = scmp.ne.s32.totalorder %s43, %s44
    %p55 = scmp.eq.s32.totalorder %s14, 0
    %p56 = por %p54, %p55
    %p57 = scmp.ne.s32.totalorder %s43, %s44
    %p58 = scmp.eq.s32.totalorder %s15, 1
    %p59 = por %p57, %p58
    %p61 = scmp.ne.s32.totalorder %s44, %s60
    %p62 = scmp.eq.s32.totalorder %s15, 0
    %p63 = por %p61, %p62
    %s64 = ssub.s32 %s18, %s27
    %s65 = ssub.s32 %s17, %s31
    %s66 = sor.u32 %s64, %s65
    %p67 = scmp.eq.s32.totalorder %s66, 0
    %s69 = sadd.s32 %s68, 1
    %s70 = scalar_select %p67, %s68, %s69
    %p73 = pneg %p67
    %p74 = scmp.eq.s32.totalorder %s9, 1
    %p75 = por %p73, %p74
    %p76 = scmp.ne.s32.totalorder %s68, %s71
    %p77 = scmp.eq.s32.totalorder %s9, 0
    %p78 = por %p76, %p77
    %p79 = scmp.ne.s32.totalorder %s68, %s71
    %p80 = scmp.eq.s32.totalorder %s14, 1
    %p81 = por %p79, %p80
    %p82 = scmp.ne.s32.totalorder %s71, %s72
    %p83 = scmp.eq.s32.totalorder %s14, 0
    %p84 = por %p82, %p83
    %p85 = scmp.ne.s32.totalorder %s71, %s72
    %p86 = scmp.eq.s32.totalorder %s15, 1
    %p87 = por %p85, %p86
    %p89 = scmp.ne.s32.totalorder %s72, %s88
    %p90 = scmp.eq.s32.totalorder %s15, 0
    %p91 = por %p89, %p90
    %s92 = ssub.s32 %s17, %s31
    %p93 = scmp.eq.s32.totalorder %s92, 0
    %s95 = sadd.s32 %s94, 1
    %s96 = scalar_select %p93, %s94, %s95
    %p99 = pneg %p93
    %p100 = scmp.eq.s32.totalorder %s9, 1
    %p101 = por %p99, %p100
    %p102 = scmp.ne.s32.totalorder %s94, %s97
    %p103 = scmp.eq.s32.totalorder %s9, 0
    %p104 = por %p102, %p103
    %p105 = scmp.ne.s32.totalorder %s94, %s97
    %p106 = scmp.eq.s32.totalorder %s14, 1
    %p107 = por %p105, %p106
    %p108 = scmp.ne.s32.totalorder %s97, %s98
    %p109 = scmp.eq.s32.totalorder %s14, 0
    %p110 = por %p108, %p109
    %p111 = scmp.ne.s32.totalorder %s97, %s98
    %p112 = scmp.eq.s32.totalorder %s15, 1
    %p113 = por %p111, %p112
    %p115 = scmp.ne.s32.totalorder %s98, %s114
    %p116 = scmp.eq.s32.totalorder %s15, 0
    %p117 = por %p115, %p116
    %s118 = ssub.s32 %s16, %s35
    %s119 = ssub.s32 %s17, %s31
    %s120 = sor.u32 %s118, %s119
    %p121 = scmp.eq.s32.totalorder %s120, 0
    %s123 = sadd.s32 %s122, 1
    %s124 = scalar_select %p121, %s122, %s123
    %p127 = pneg %p121
    %p128 = scmp.eq.s32.totalorder %s9, 1
    %p129 = por %p127, %p128
    %p130 = scmp.ne.s32.totalorder %s122, %s125
    %p131 = scmp.eq.s32.totalorder %s9, 0
    %p132 = por %p130, %p131
    %p133 = scmp.ne.s32.totalorder %s122, %s125
    %p134 = scmp.eq.s32.totalorder %s14, 1
    %p135 = por %p133, %p134
    %p136 = scmp.ne.s32.totalorder %s125, %s126
    %p137 = scmp.eq.s32.totalorder %s14, 0
    %p138 = por %p136, %p137
    %p139 = scmp.ne.s32.totalorder %s125, %s126
    %p140 = scmp.eq.s32.totalorder %s15, 1
    %p141 = por %p139, %p140
    %p143 = scmp.ne.s32.totalorder %s126, %s142
    %p144 = scmp.eq.s32.totalorder %s15, 0
    %p145 = por %p143, %p144
    %p146 = scmp.le.s32.totalorder 1, %s9
    %p147 = scmp.lt.s32.totalorder %s9, 3
    %p148 = pnand %p146, %p147
    %p149 = pneg %p148
    // Predicated region
    $region9: #{_lambda_.15} parent=5 // pred_check
      _
    $region10: #{_lambda_.15} parent=5 // pred_check_branch
      %151 = sbr.rel (%p148) target = $region12
    $region11: #{_lambda_.15} parent=5 // pred_region
      %s152 = ssub.s32 %s9, 1
      // Predicated region
      $region13: #{_lambda_.15} parent=11 // pred_check
        %p153 = pneg %p110
      $region14: #{_lambda_.15} parent=11 // pred_check_branch
        %155 = sbr.rel (%p153) target = $region16
      $region15: #{_lambda_.15} parent=11 // pred_region
        %p156 = scmp.lt.s32.totalorder %s20, 0
        %s157 = scalar_select %p156, %s20, 0
        %s158 = scalar_lea.vmem %s2, %s157
      $region16: #{_lambda_.15} parent=11 // pred_fallthru
        _
    $region12: #{_lambda_.15} parent=5 // pred_fallthru
      _
    %p159 = scmp.lt.s32.totalorder %s9, 2
    // Predicated region
    $region17: #{_lambda_.15} parent=5 // pred_check
      %p160 = pneg %p159
    $region18: #{_lambda_.15} parent=5 // pred_check_branch
      %162 = sbr.rel (%p160) target = $region20
    $region19: #{_lambda_.15} parent=5 // pred_region
      // Predicated region
      $region21: #{_lambda_.15} parent=19 // pred_check
        %p163 = pneg %p50
      $region22: #{_lambda_.15} parent=19 // pred_check_branch
        %165 = sbr.rel (%p163) target = $region24
      $region23: #{_lambda_.15} parent=19 // pred_region
        %s166 = smul.u32 4, %s18
        %p167 = scmp.lt.s32.totalorder %s16, 0
        %s168 = scalar_select %p167, %s16, 0
        %p169 = scmp.lt.s32.totalorder %s166, 7
        %s170 = scalar_select %p169, %s166, 7
        %s171 = smul.addr %s168, 8
        %s172 = sadd.s32 %s170, %s171
        %s173 = smul.addr %s172, 4
        %s174 = scalar_lea.vmem %s0, %s173
        %s175 = smul.u32 4, %s18
      $region24: #{_lambda_.15} parent=19 // pred_fallthru
        _
      // Predicated region
      $region25: #{_lambda_.15} parent=19 // pred_check
        %p176 = pneg %p78
      $region26: #{_lambda_.15} parent=19 // pred_check_branch
        %178 = sbr.rel (%p176) target = $region28
      $region27: #{_lambda_.15} parent=19 // pred_region
        %s179 = smul.u32 64, %s18
        %p180 = scmp.lt.s32.totalorder %s179, 127
        %s181 = scalar_select %p180, %s179, 127
        %p182 = scmp.lt.s32.totalorder %s17, 0
        %s183 = scalar_select %p182, %s17, 0
        %s184 = sadd.s32 %s183, %s181
        %s185 = smul.addr %s184, 4
        %s186 = scalar_lea.vmem %s1, %s185
        %s187 = smul.u32 64, %s18
      $region28: #{_lambda_.15} parent=19 // pred_fallthru
        _
    $region20: #{_lambda_.15} parent=5 // pred_fallthru
      _
    %p188 = scmp.le.s32.totalorder 1, %s9
    %p189 = scmp.lt.s32.totalorder %s9, 3
    %p190 = pnand %p188, %p189
    %p191 = pneg %p190
    // Predicated region
    $region29: #{_lambda_.15} parent=5 // pred_check
      _
    $region30: #{_lambda_.15} parent=5 // pred_check_branch
      %193 = sbr.rel (%p190) target = $region32
    $region31: #{_lambda_.15} parent=5 // pred_region
      %s194 = ssub.s32 %s9, 1
      %s195 = smul.u32 4, %s21
      %p196 = scmp.lt.s32.totalorder %s19, 0
      %s197 = scalar_select %p196, %s19, 0
      %p198 = scmp.lt.s32.totalorder %s195, 7
      %s199 = scalar_select %p198, %s195, 7
      %s200 = smul.addr %s197, 8
      %s201 = sadd.s32 %s199, %s200
      %s202 = smul.addr %s201, 4
      %s203 = scalar_lea.vmem %s0, %s202
      %p204 = pneg %p56
      %p205 = pneg %p53
      %s206 = smul.u32 64, %s21
      %p207 = scmp.lt.s32.totalorder %s206, 127
      %s208 = scalar_select %p207, %s206, 127
      %p209 = scmp.lt.s32.totalorder %s20, 0
      %s210 = scalar_select %p209, %s20, 0
      %s211 = sadd.s32 %s210, %s208
      %s212 = smul.addr %s211, 4
      %s213 = scalar_lea.vmem %s1, %s212
      %p214 = pneg %p84
      %p215 = pneg %p81
      %p216 = scmp.lt.s32.totalorder %s20, 0
      %s217 = scalar_select %p216, %s20, 0
      %s218 = scalar_lea.vmem %s2, %s217
      %p219 = pneg %p110
      %p220 = pneg %p107
      %p221 = pneg %p138
      %p222 = pneg %p135
      %p223 = scmp.lt.s32.totalorder %s19, 0
      %s224 = scalar_select %p223, %s19, 0
      %p225 = scmp.lt.s32.totalorder %s20, 0
      %s226 = scalar_select %p225, %s20, 0
      %s227 = sadd.s32 %s226, %s224
      %s228 = smul.addr %s227, 8
      %s229 = scalar_lea.vmem %s3, %s228
      %s230 = smul.u32 4, %s21
      %p231 = scmp.lt.s32.totalorder %s19, 0
      %s232 = scalar_select %p231, %s19, 0
      %p233 = scmp.lt.s32.totalorder %s230, 7
      %s234 = scalar_select %p233, %s230, 7
      %s235 = smul.addr %s232, 8
      %s236 = sadd.s32 %s234, %s235
      %s237 = smul.addr %s236, 4
      %s238 = scalar_lea.vmem %s0, %s237
      %s239 = smul.u32 4, %s21
      %s240 = smul.u32 64, %s21
      %p241 = scmp.lt.s32.totalorder %s240, 127
      %s242 = scalar_select %p241, %s240, 127
      %p243 = scmp.lt.s32.totalorder %s20, 0
      %s244 = scalar_select %p243, %s20, 0
      %s245 = sadd.s32 %s244, %s242
      %s246 = smul.addr %s245, 4
      %s247 = scalar_lea.vmem %s1, %s246
      %s248 = smul.u32 64, %s21
      %p249 = scmp.lt.s32.totalorder %s20, 0
      %s250 = scalar_select %p249, %s20, 0
      %s251 = scalar_lea.vmem %s2, %s250
      %p252 = scmp.lt.s32.totalorder %s19, 0
      %s253 = scalar_select %p252, %s19, 0
      %p254 = scmp.lt.s32.totalorder %s20, 0
      %s255 = scalar_select %p254, %s20, 0
      %s256 = sadd.s32 %s255, %s253
      %s257 = smul.addr %s256, 8
      %s258 = scalar_lea.vmem %s3, %s257
      %p260 = scmp.eq.s32.totalorder %s21, 0
      // Predicated region
      $region33: #{_lambda_.15} parent=31 // pred_check
        %p261 = pneg %p260
      $region34: #{_lambda_.15} parent=31 // pred_check_branch
        %263 = sbr.rel (%p261) target = $region36
      $region35: #{_lambda_.15} parent=31 // pred_region
        %264 = vst [vmem:[#allocation2] sm:$0xff] 0.0
      $region36: #{_lambda_.15} parent=31 // pred_fallthru
        _
      %v265 = vld [vmem:[#allocation2] sm:$0xff]
      %v266 = vld [vmem:[%s238] sm:$0xff]
      %v267 = vld [vmem:[%s238 + $0x8] sm:$0xff]
      %v268 = vld [vmem:[%s247] sm:$0xf]
      %v269 = vld [vmem:[%s247 + $0x4] sm:$0xf]
      %v270 = vld [vmem:[%s247 + $0x8] sm:$0xf]
      %v271 = vld [vmem:[%s247 + $0xc] sm:$0xf]
      %v272 = vld [vmem:[%s247 + $0x10] sm:$0xf]
      %v273 = vld [vmem:[%s247 + $0x14] sm:$0xf]
      %v274 = vld [vmem:[%s247 + $0x18] sm:$0xf]
      %v275 = vld [vmem:[%s247 + $0x1c] sm:$0xf]
      %v276 = vld [vmem:[%s247 + $0x20] sm:$0xf]
      %v277 = vld [vmem:[%s247 + $0x24] sm:$0xf]
      %v278 = vld [vmem:[%s247 + $0x28] sm:$0xf]
      %v279 = vld [vmem:[%s247 + $0x2c] sm:$0xf]
      %v280 = vld [vmem:[%s247 + $0x30] sm:$0xf]
      %v281 = vld [vmem:[%s247 + $0x34] sm:$0xf]
      %v282 = vld [vmem:[%s247 + $0x38] sm:$0xf]
      %v283 = vld [vmem:[%s247 + $0x3c] sm:$0xf]
      %v284 = vld [vmem:[%s247 + $0x40] sm:$0xf]
      %v285 = vld [vmem:[%s247 + $0x44] sm:$0xf]
      %v286 = vld [vmem:[%s247 + $0x48] sm:$0xf]
      %v287 = vld [vmem:[%s247 + $0x4c] sm:$0xf]
      %v288 = vld [vmem:[%s247 + $0x50] sm:$0xf]
      %v289 = vld [vmem:[%s247 + $0x54] sm:$0xf]
      %v290 = vld [vmem:[%s247 + $0x58] sm:$0xf]
      %v291 = vld [vmem:[%s247 + $0x5c] sm:$0xf]
      %v292 = vld [vmem:[%s247 + $0x60] sm:$0xf]
      %v293 = vld [vmem:[%s247 + $0x64] sm:$0xf]
      %v294 = vld [vmem:[%s247 + $0x68] sm:$0xf]
      %v295 = vld [vmem:[%s247 + $0x6c] sm:$0xf]
      %v296 = vld [vmem:[%s247 + $0x70] sm:$0xf]
      %v297 = vld [vmem:[%s247 + $0x74] sm:$0xf]
      %v298 = vld [vmem:[%s247 + $0x78] sm:$0xf]
      %v299 = vld [vmem:[%s247 + $0x7c] sm:$0xf]
      %v300 = vld [vmem:[%s247 + $0x80] sm:$0xf]
      %v301 = vld [vmem:[%s247 + $0x84] sm:$0xf]
      %v302 = vld [vmem:[%s247 + $0x88] sm:$0xf]
      %v303 = vld [vmem:[%s247 + $0x8c] sm:$0xf]
      %v304 = vld [vmem:[%s247 + $0x90] sm:$0xf]
      %v305 = vld [vmem:[%s247 + $0x94] sm:$0xf]
      %v306 = vld [vmem:[%s247 + $0x98] sm:$0xf]
      %v307 = vld [vmem:[%s247 + $0x9c] sm:$0xf]
      %v308 = vld [vmem:[%s247 + $0xa0] sm:$0xf]
      %v309 = vld [vmem:[%s247 + $0xa4] sm:$0xf]
      %v310 = vld [vmem:[%s247 + $0xa8] sm:$0xf]
      %v311 = vld [vmem:[%s247 + $0xac] sm:$0xf]
      %v312 = vld [vmem:[%s247 + $0xb0] sm:$0xf]
      %v313 = vld [vmem:[%s247 + $0xb4] sm:$0xf]
      %v314 = vld [vmem:[%s247 + $0xb8] sm:$0xf]
      %v315 = vld [vmem:[%s247 + $0xbc] sm:$0xf]
      %v316 = vld [vmem:[%s247 + $0xc0] sm:$0xf]
      %v317 = vld [vmem:[%s247 + $0xc4] sm:$0xf]
      %v318 = vld [vmem:[%s247 + $0xc8] sm:$0xf]
      %v319 = vld [vmem:[%s247 + $0xcc] sm:$0xf]
      %v320 = vld [vmem:[%s247 + $0xd0] sm:$0xf]
      %v321 = vld [vmem:[%s247 + $0xd4] sm:$0xf]
      %v322 = vld [vmem:[%s247 + $0xd8] sm:$0xf]
      %v323 = vld [vmem:[%s247 + $0xdc] sm:$0xf]
      %v324 = vld [vmem:[%s247 + $0xe0] sm:$0xf]
      %v325 = vld [vmem:[%s247 + $0xe4] sm:$0xf]
      %v326 = vld [vmem:[%s247 + $0xe8] sm:$0xf]
      %v327 = vld [vmem:[%s247 + $0xec] sm:$0xf]
      %v328 = vld [vmem:[%s247 + $0xf0] sm:$0xf]
      %v329 = vld [vmem:[%s247 + $0xf4] sm:$0xf]
      %v330 = vld [vmem:[%s247 + $0xf8] sm:$0xf]
      %v331 = vld [vmem:[%s247 + $0xfc] sm:$0xf]
      %v334 = vunpack.c.l.b16 %v266
      %v335 = vunpack.c.h.b16 %v266
      %v336 = vunpack.c.l.b16 %v267
      %v337 = vunpack.c.h.b16 %v267
      %v338 = vpack.c.b16 %v334, %v334
      %v339 = vpack.c.b16 %v335, %v335
      %v340 = vpack.c.b16 %v336, %v336
      %v341 = vpack.c.b16 %v337, %v337
      %v410 = vunpack.c.l.b16 %v268
      %v411 = vunpack.c.l.b16 %v269
      %v412 = vunpack.c.l.b16 %v270
      %v413 = vunpack.c.l.b16 %v271
      %v414 = vunpack.c.l.b16 %v272
      %v415 = vunpack.c.l.b16 %v273
      %v416 = vunpack.c.l.b16 %v274
      %v417 = vunpack.c.l.b16 %v275
      %v418 = vunpack.c.l.b16 %v276
      %v419 = vunpack.c.l.b16 %v277
      %v420 = vunpack.c.l.b16 %v278
      %v421 = vunpack.c.l.b16 %v279
      %v422 = vunpack.c.l.b16 %v280
      %v423 = vunpack.c.l.b16 %v281
      %v424 = vunpack.c.l.b16 %v282
      %v425 = vunpack.c.l.b16 %v283
      %v426 = vunpack.c.l.b16 %v284
      %v427 = vunpack.c.l.b16 %v285
      %v428 = vunpack.c.l.b16 %v286
      %v429 = vunpack.c.l.b16 %v287
      %v430 = vunpack.c.l.b16 %v288
      %v431 = vunpack.c.l.b16 %v289
      %v432 = vunpack.c.l.b16 %v290
      %v433 = vunpack.c.l.b16 %v291
      %v434 = vunpack.c.l.b16 %v292
      %v435 = vunpack.c.l.b16 %v293
      %v436 = vunpack.c.l.b16 %v294
      %v437 = vunpack.c.l.b16 %v295
      %v438 = vunpack.c.l.b16 %v296
      %v439 = vunpack.c.l.b16 %v297
      %v440 = vunpack.c.l.b16 %v298
      %v441 = vunpack.c.l.b16 %v299
      %v442 = vunpack.c.l.b16 %v300
      %v443 = vunpack.c.l.b16 %v301
      %v444 = vunpack.c.l.b16 %v302
      %v445 = vunpack.c.l.b16 %v303
      %v446 = vunpack.c.l.b16 %v304
      %v447 = vunpack.c.l.b16 %v305
      %v448 = vunpack.c.l.b16 %v306
      %v449 = vunpack.c.l.b16 %v307
      %v450 = vunpack.c.l.b16 %v308
      %v451 = vunpack.c.l.b16 %v309
      %v452 = vunpack.c.l.b16 %v310
      %v453 = vunpack.c.l.b16 %v311
      %v454 = vunpack.c.l.b16 %v312
      %v455 = vunpack.c.l.b16 %v313
      %v456 = vunpack.c.l.b16 %v314
      %v457 = vunpack.c.l.b16 %v315
      %v458 = vunpack.c.l.b16 %v316
      %v459 = vunpack.c.l.b16 %v317
      %v460 = vunpack.c.l.b16 %v318
      %v461 = vunpack.c.l.b16 %v319
      %v462 = vunpack.c.l.b16 %v320
      %v463 = vunpack.c.l.b16 %v321
      %v464 = vunpack.c.l.b16 %v322
      %v465 = vunpack.c.l.b16 %v323
      %v466 = vunpack.c.l.b16 %v324
      %v467 = vunpack.c.l.b16 %v325
      %v468 = vunpack.c.l.b16 %v326
      %v469 = vunpack.c.l.b16 %v327
      %v470 = vunpack.c.l.b16 %v328
      %v471 = vunpack.c.l.b16 %v329
      %v472 = vunpack.c.l.b16 %v330
      %v473 = vunpack.c.l.b16 %v331
      %v474 = vpack.c.b16 %v411, %v410
      %v475 = vpack.c.b16 %v413, %v412
      %v476 = vpack.c.b16 %v415, %v414
      %v477 = vpack.c.b16 %v417, %v416
      %v478 = vpack.c.b16 %v419, %v418
      %v479 = vpack.c.b16 %v421, %v420
      %v480 = vpack.c.b16 %v423, %v422
      %v481 = vpack.c.b16 %v425, %v424
      %v482 = vpack.c.b16 %v427, %v426
      %v483 = vpack.c.b16 %v429, %v428
      %v484 = vpack.c.b16 %v431, %v430
      %v485 = vpack.c.b16 %v433, %v432
      %v486 = vpack.c.b16 %v435, %v434
      %v487 = vpack.c.b16 %v437, %v436
      %v488 = vpack.c.b16 %v439, %v438
      %v489 = vpack.c.b16 %v441, %v440
      %v490 = vpack.c.b16 %v443, %v442
      %v491 = vpack.c.b16 %v445, %v444
      %v492 = vpack.c.b16 %v447, %v446
      %v493 = vpack.c.b16 %v449, %v448
      %v494 = vpack.c.b16 %v451, %v450
      %v495 = vpack.c.b16 %v453, %v452
      %v496 = vpack.c.b16 %v455, %v454
      %v497 = vpack.c.b16 %v457, %v456
      %v498 = vpack.c.b16 %v459, %v458
      %v499 = vpack.c.b16 %v461, %v460
      %v500 = vpack.c.b16 %v463, %v462
      %v501 = vpack.c.b16 %v465, %v464
      %v502 = vpack.c.b16 %v467, %v466
      %v503 = vpack.c.b16 %v469, %v468
      %v504 = vpack.c.b16 %v471, %v470
      %v505 = vpack.c.b16 %v473, %v472
      %538 = vmatprep.subr.bf16.mxu0 0
      %539 = vmatpush1.bf16.msra.mxu0 %v474
      %540 = vmatprep.subr.bf16.mxu0 0
      %541 = vmatpush1.bf16.msra.mxu0 %v475
      %542 = vmatprep.subr.bf16.mxu0 0
      %543 = vmatpush1.bf16.msra.mxu0 %v476
      %544 = vmatprep.subr.bf16.mxu0 0
      %545 = vmatpush1.bf16.msra.mxu0 %v477
      %546 = vmatprep.subr.bf16.mxu0 0
      %547 = vmatpush1.bf16.msra.mxu0 %v478
      %548 = vmatprep.subr.bf16.mxu0 0
      %549 = vmatpush1.bf16.msra.mxu0 %v479
      %550 = vmatprep.subr.bf16.mxu0 0
      %551 = vmatpush1.bf16.msra.mxu0 %v480
      %552 = vmatprep.subr.bf16.mxu0 0
      %553 = vmatpush1.bf16.msra.mxu0 %v481
      %554 = vmatprep.subr.bf16.mxu0 0
      %555 = vmatpush1.bf16.msra.mxu0 %v482
      %556 = vmatprep.subr.bf16.mxu0 0
      %557 = vmatpush1.bf16.msra.mxu0 %v483
      %558 = vmatprep.subr.bf16.mxu0 0
      %559 = vmatpush1.bf16.msra.mxu0 %v484
      %560 = vmatprep.subr.bf16.mxu0 0
      %561 = vmatpush1.bf16.msra.mxu0 %v485
      %562 = vmatprep.subr.bf16.mxu0 0
      %563 = vmatpush1.bf16.msra.mxu0 %v486
      %564 = vmatprep.subr.bf16.mxu0 0
      %565 = vmatpush1.bf16.msra.mxu0 %v487
      %566 = vmatprep.subr.bf16.mxu0 0
      %567 = vmatpush1.bf16.msra.mxu0 %v488
      %568 = vmatprep.subr.bf16.mxu0 0
      %569 = vmatpush1.bf16.msra.mxu0 %v489
      %570 = vmatprep.mubr.bf16.mxu0 %v339
      %571 = vmatmul.mubr.bf16.gmra.mrb[0].mxu0 %v338
      %v572 = vpop.f32.mrb[0].mxu0
      %v573 = vadd.f32 0.0, %v572
      %v574 = vpop.f32.mrb[0].mxu0
      %v575 = vpop.f32.mrb[0].mxu0
      %v576 = vpop.f32.mrb[0].mxu0
      %577 = vdwg.mxu0
      %578 = vmatprep.subr.bf16.mxu0 0
      %579 = vmatpush1.bf16.msra.mxu0 %v490
      %580 = vmatprep.subr.bf16.mxu0 0
      %581 = vmatpush1.bf16.msra.mxu0 %v491
      %582 = vmatprep.subr.bf16.mxu0 0
      %583 = vmatpush1.bf16.msra.mxu0 %v492
      %584 = vmatprep.subr.bf16.mxu0 0
      %585 = vmatpush1.bf16.msra.mxu0 %v493
      %586 = vmatprep.subr.bf16.mxu0 0
      %587 = vmatpush1.bf16.msra.mxu0 %v494
      %588 = vmatprep.subr.bf16.mxu0 0
      %589 = vmatpush1.bf16.msra.mxu0 %v495
      %590 = vmatprep.subr.bf16.mxu0 0
      %591 = vmatpush1.bf16.msra.mxu0 %v496
      %592 = vmatprep.subr.bf16.mxu0 0
      %593 = vmatpush1.bf16.msra.mxu0 %v497
      %594 = vmatprep.subr.bf16.mxu0 0
      %595 = vmatpush1.bf16.msra.mxu0 %v498
      %596 = vmatprep.subr.bf16.mxu0 0
      %597 = vmatpush1.bf16.msra.mxu0 %v499
      %598 = vmatprep.subr.bf16.mxu0 0
      %599 = vmatpush1.bf16.msra.mxu0 %v500
      %600 = vmatprep.subr.bf16.mxu0 0
      %601 = vmatpush1.bf16.msra.mxu0 %v501
      %602 = vmatprep.subr.bf16.mxu0 0
      %603 = vmatpush1.bf16.msra.mxu0 %v502
      %604 = vmatprep.subr.bf16.mxu0 0
      %605 = vmatpush1.bf16.msra.mxu0 %v503
      %606 = vmatprep.subr.bf16.mxu0 0
      %607 = vmatpush1.bf16.msra.mxu0 %v504
      %608 = vmatprep.subr.bf16.mxu0 0
      %609 = vmatpush1.bf16.msra.mxu0 %v505
      %610 = vmatprep.mubr.bf16.mxu0 %v341
      %611 = vmatmul.mubr.bf16.gmra.mrb[0].mxu0 %v340
      %v612 = vpop.f32.mrb[0].mxu0
      %v613 = vadd.f32 %v573, %v612
      %v614 = vpop.f32.mrb[0].mxu0
      %v615 = vpop.f32.mrb[0].mxu0
      %v616 = vpop.f32.mrb[0].mxu0
      %617 = vdwg.mxu0
      %v618 = vadd.f32 %v265, %v613
      %619 = vst [vmem:[#allocation2] sm:$0xff] %v618
      %p620 = scmp.eq.s32.totalorder %s21, 1
      // Predicated region
      $region37: #{_lambda_.15} parent=31 // pred_check
        %p621 = pneg %p620
      $region38: #{_lambda_.15} parent=31 // pred_check_branch
        %623 = sbr.rel (%p621) target = $region40
      $region39: #{_lambda_.15} parent=31 // pred_region
        %v624 = vld [vmem:[#allocation2] sm:$0xff]
        %v625 = vld [vmem:[%s251] sm:$0x1]
        %v627 = vlaneseq
        %v628 = vshrl.u32 %v627, 7
        %v629 = vsub.s32 0, %v628
        %v630 = vrot.slane %v625, %v629
        %v632 = vadd.f32 %v624, %v630
        %633 = vst [vmem:[%s258] sm:$0xff] %v632
      $region40: #{_lambda_.15} parent=31 // pred_fallthru
        _
      %p634 = scmp.lt.s32.totalorder %s19, 0
      %s635 = scalar_select %p634, %s19, 0
      %p636 = scmp.lt.s32.totalorder %s20, 0
      %s637 = scalar_select %p636, %s20, 0
      %s638 = sadd.s32 %s637, %s635
      %s639 = smul.addr %s638, 8
      %s640 = scalar_lea.vmem %s3, %s639
      // Predicated region
      $region41: #{_lambda_.15} parent=31 // pred_check
        %p641 = pneg %p135
      $region42: #{_lambda_.15} parent=31 // pred_check_branch
        %643 = sbr.rel (%p641) target = $region44
      $region43: #{_lambda_.15} parent=31 // pred_region
        _
      $region44: #{_lambda_.15} parent=31 // pred_fallthru
        _
      // Predicated region
      $region45: #{_lambda_.15} parent=31 // pred_check
        %p644 = pneg %p135
      $region46: #{_lambda_.15} parent=31 // pred_check_branch
        %646 = sbr.rel (%p644) target = $region48
      $region47: #{_lambda_.15} parent=31 // pred_region
        %p647 = scmp.lt.s32.totalorder %s19, 0
        %s648 = scalar_select %p647, %s19, 0
        %p649 = scmp.lt.s32.totalorder %s20, 0
        %s650 = scalar_select %p649, %s20, 0
        %s651 = sadd.s32 %s650, %s648
        %s652 = smul.addr %s651, 8
        %s653 = scalar_lea.vmem %s3, %s652
      $region48: #{_lambda_.15} parent=31 // pred_fallthru
        _
    $region32: #{_lambda_.15} parent=5 // pred_fallthru
      _
    %p654 = scmp.le.s32.totalorder 2, %s9
    // Predicated region
    $region49: #{_lambda_.15} parent=5 // pred_check
      %p655 = pneg %p654
    $region50: #{_lambda_.15} parent=5 // pred_check_branch
      %657 = sbr.rel (%p655) target = $region52
    $region51: #{_lambda_.15} parent=5 // pred_region
      %s658 = ssub.s32 %s9, 2
    $region52: #{_lambda_.15} parent=5 // pred_fallthru
      _
  $region6: #{_lambda_.15} parent=0 // loop_footer
    %s13 = sadd.s32 1, %s9
  $region7: #{_lambda_.15} parent=0 // loop_footer_branch
    %8 = sbr.rel target = $region3
  $region8: #{_lambda_.15} parent=0 // loop_exit
    _

</llo_original>
